<compile_context>
chip_gen: v7x
topology: tpu7x:2x2x1
jax: 0.10.0
libtpu: 0.0.40
codegen_flags: <defaults>
</compile_context>

<pallas_src>
import jax
import jax.numpy as jnp
from jax.experimental import pallas as pl
from jax.experimental.pallas import tpu as pltpu

IN_FEATURES = 10
OUT_FEATURES = 1
LANE = 128                    # TPU lane width; 128 batch rows per x2 row
MIN_PALLAS_BATCH = 16384      # below this, plain-JAX fused dot is strictly faster


def _round_up(a: int, m: int) -> int:
    return (a + m - 1) // m * m


def _vmem_budget_bytes() -> int:
    """Per-generation VMEM budget with headroom (v7x: 64 MiB, v5e/v6e: 128 MiB)."""
    cap = 64 * 1024 * 1024  # conservative fallback = v7x physical VMEM
    try:
        info = pltpu.get_tpu_info()
        cap = int(getattr(info, "vmem_capacity_bytes", cap))
    except Exception:
        pass
    return max(32 * 1024 * 1024, min(cap * 3 // 4, 96 * 1024 * 1024))


def _pick_row_tile(rows128: int, budget_bytes: int) -> int:
    """Rows of the (rows128, 1280) x view processed per grid step."""
    weight_bytes = 2 * (LANE * IN_FEATURES) * LANE * 4            # (1280,128), dbuf
    per_row = 2 * (LANE * IN_FEATURES * 4) + 2 * (LANE * 4)       # dbuf x row + dbuf out row
    avail = budget_bytes - weight_bytes - 4 * 1024 * 1024         # scratch headroom
    r_vmem = max(8, (avail // per_row) // 8 * 8)
    r_max = min(4096, r_vmem)                                     # <= ~20 MiB of x per tile
    # Ensure >= 2 tiles when possible so v7x can shard the parallel axis on both TCs.
    r = min(r_max, _round_up(pl.cdiv(rows128, 2), 8))
    if r >= rows128:
        r = rows128            # single full-extent block (allowed even if not %8)
    return max(r, 1)


def linreg_kernel(x_ref, w_ref, b_ref, o_ref):
    # x_ref: (r, 1280) VMEM -- 128 batch rows per sublane row, lane-dense
    # w_ref: (1280, 128) VMEM -- block-diagonal weights, resident across the grid
    # b_ref: (1, 1)     SMEM -- scalar bias
    # o_ref: (r, 128)   VMEM -- y for 128*r batch rows, fully dense stores
    o_ref[...] = (
        jnp.dot(
            x_ref[...],
            w_ref[...],
            preferred_element_type=jnp.float32,
            precision=jax.lax.Precision.HIGHEST,
        )
        + b_ref[0, 0]
    )


def _linreg_pallas(x, weight, bias):
    B = x.shape[0]

    # Pad only the remainder slab to the next multiple of 128 rows (<= 127 zero
    # rows).  For B % 128 == 0 this is a no-op and the reshape below is free.
    pad = (-B) % LANE
    if pad:
        x = jnp.pad(x, ((0, pad), (0, 0)))
    rows128 = (B + pad) // LANE
    x2 = x.reshape(rows128, LANE * IN_FEATURES)          # lane-dense view of x

    # Block-diagonal weight: M[10*j + f, j] = w[f]   -> (1280, 128)
    w_vec = weight.astype(jnp.float32).reshape(IN_FEATURES)
    m = (jnp.eye(LANE, dtype=jnp.float32)[:, None, :]
         * w_vec[None, :, None]).reshape(LANE * IN_FEATURES, LANE)
    b_smem = bias.astype(jnp.float32).reshape(1, 1)

    budget = _vmem_budget_bytes()
    r = _pick_row_tile(rows128, budget)
    nt = pl.cdiv(rows128, r)                             # ragged tail handled by Pallas

    bytes_accessed = (rows128 * LANE * IN_FEATURES * 4   # x read
                      + rows128 * LANE * 4               # y write
                      + LANE * IN_FEATURES * LANE * 4    # block-diagonal weights
                      + 4)                               # bias

    out = pl.pallas_call(
        linreg_kernel,
        out_shape=jax.ShapeDtypeStruct((rows128, LANE), jnp.float32),
        grid=(nt,),
        in_specs=[
            pl.BlockSpec((r, LANE * IN_FEATURES), lambda i: (i, 0)),     # x tile
            pl.BlockSpec((LANE * IN_FEATURES, LANE), lambda i: (0, 0)),  # weights (resident)
            pl.BlockSpec(memory_space=pltpu.MemorySpace.SMEM),           # bias scalar
        ],
        out_specs=pl.BlockSpec((r, LANE), lambda i: (i, 0)),
        compiler_params=pltpu.CompilerParams(
            dimension_semantics=("parallel",),           # dual-TC sharding on v7x
            vmem_limit_bytes=budget,
        ),
        cost_estimate=pl.CostEstimate(
            flops=2 * rows128 * (LANE * IN_FEATURES) * LANE,
            transcendentals=0,
            bytes_accessed=bytes_accessed,
        ),
    )(x2, m, b_smem)

    # (rows128, 128) -> flat batch-major -> drop padded rows -> (B, 1)
    return out.reshape(rows128 * LANE)[:B].reshape(B, OUT_FEATURES)


def linear_regression_forward(x, weight, bias, *, use_pallas=None):
    """x: (B, 10) f32, weight: (1, 10) f32, bias: (1,) f32 -> (B, 1) f32."""
    B, K = x.shape
    assert K == IN_FEATURES and weight.shape == (OUT_FEATURES, IN_FEATURES)
    x = x.astype(jnp.float32)
    if use_pallas is None:
        use_pallas = B >= MIN_PALLAS_BATCH
    if not use_pallas:
        # Tiny batches: pallas_call fixed cost + wrapper reshapes dwarf the work.
        return x @ weight.astype(jnp.float32).T + bias.astype(jnp.float32)
    return _linreg_pallas(x, weight, bias)


if __name__ == "__main__":
    key = jax.random.PRNGKey(0)
    kx, kw, kb = jax.random.split(key, 3)

    # Deterministic parameter init (mimics nn.Linear's uniform(-1/sqrt(fan_in), +))
    bound = 1.0 / (IN_FEATURES ** 0.5)
    weight = jax.random.uniform(
        kw, (OUT_FEATURES, IN_FEATURES), minval=-bound, maxval=bound,
        dtype=jnp.float32)
    bias = jax.random.uniform(
        kb, (OUT_FEATURES,), minval=-bound, maxval=bound, dtype=jnp.float32)

    # (batch, force_pallas): small fast-path check, ragged single-tile kernel,
    # and a multiple-of-128 multi-tile kernel run.
    for batch, force in ((8, False), (300, True), (2048, True)):
        x = jax.random.normal(kx, (batch, IN_FEATURES), dtype=jnp.float32)
        y = linear_regression_forward(x, weight, bias, use_pallas=force)
        y = jax.block_until_ready(y)

        ref = x @ weight.T + bias
        assert y.shape == (batch, OUT_FEATURES), f"bad shape at batch={batch}"
        assert jnp.allclose(y, ref, atol=1e-3, rtol=1e-3), f"mismatch at batch={batch}"

    print("KERNEL_OK")
</pallas_src>

<mosaic_0001>
module attributes {stable_mosaic.version = 11 : i64} {
  func.func @linreg_kernel(%arg0: i32, %arg1: memref<3x1280xf32, #tpu.memory_space<vmem>>, %arg2: memref<1280x128xf32, #tpu.memory_space<vmem>>, %arg3: memref<1x1xf32, #tpu.memory_space<smem>>, %arg4: memref<3x128xf32, #tpu.memory_space<vmem>>) attributes {dimension_semantics = [#tpu.dimension_semantics<parallel>], iteration_bounds = array<i64: 1>, scalar_prefetch = 0 : i64, scratch_operands = 0 : i64, tpu.core_type = #tpu.core_type<tc>, window_params = [{transform_indices = @transform_0, window_bounds = array<i64: 3, 1280>}, {pipeline_mode = #tpu.pipeline_mode<synchronous>, transform_indices = @transform_1, window_bounds = array<i64: 1280, 128>}, {transform_indices = @transform_2, window_bounds = array<i64: 1, 1>}, {transform_indices = @transform_3, window_bounds = array<i64: 3, 128>}]} {
    %c0 = arith.constant 0 : index
    %c0_0 = arith.constant 0 : index
    %0 = vector.load %arg1[%c0, %c0_0] : memref<3x1280xf32, #tpu.memory_space<vmem>>, vector<3x1280xf32>
    %c0_1 = arith.constant 0 : index
    %c0_2 = arith.constant 0 : index
    %1 = vector.load %arg2[%c0_1, %c0_2] : memref<1280x128xf32, #tpu.memory_space<vmem>>, vector<1280x128xf32>
    %cst = arith.constant dense<0.000000e+00> : vector<3x128xf32>
    %2 = tpu.matmul %0, %1, %cst {dimension_numbers = #tpu.dot_dimension_numbers<[1], [0], [0], [1], [0, 0, 1, 1], [], []>, precision = #tpu.contract_precision<fp32>} : vector<3x1280xf32>, vector<1280x128xf32>, vector<3x128xf32> -> vector<3x128xf32>
    %c0_3 = arith.constant 0 : index
    %c0_4 = arith.constant 0 : index
    %3 = memref.load %arg3[%c0_3, %c0_4] : memref<1x1xf32, #tpu.memory_space<smem>>
    %4 = vector.broadcast %3 : f32 to vector<3x128xf32>
    %5 = arith.addf %2, %4 : vector<3x128xf32>
    %c0_5 = arith.constant 0 : index
    %c0_6 = arith.constant 0 : index
    %6 = vector.load %arg4[%c0_5, %c0_6] : memref<3x128xf32, #tpu.memory_space<vmem>>, vector<3x128xf32>
    tpu.vector_store %arg4[%c0_5, %c0_6], %5 {strides = array<i32>} : memref<3x128xf32, #tpu.memory_space<vmem>>, vector<3x128xf32>,
    return
  }
  func.func @transform_0(%arg0: i32) -> (i32, i32) {
    %c0_i32 = arith.constant 0 : i32
    %c0_i32_0 = arith.constant 0 : i32
    return %arg0, %c0_i32 : i32, i32
  }
  func.func @transform_1(%arg0: i32) -> (i32, i32) {
    %c0_i32 = arith.constant 0 : i32
    %c0_i32_0 = arith.constant 0 : i32
    %c0_i32_1 = arith.constant 0 : i32
    return %c0_i32, %c0_i32_0 : i32, i32
  }
  func.func @transform_2(%arg0: i32) -> (i32, i32) {
    %c0_i32 = arith.constant 0 : i32
    %c0_i32_0 = arith.constant 0 : i32
    %c0_i32_1 = arith.constant 0 : i32
    return %c0_i32, %c0_i32_0 : i32, i32
  }
  func.func @transform_3(%arg0: i32) -> (i32, i32) {
    %c0_i32 = arith.constant 0 : i32
    %c0_i32_0 = arith.constant 0 : i32
    return %arg0, %c0_i32 : i32, i32
  }
}

</mosaic_0001>

<llo_original>
// kernel: tpu_custom_call.1
$region0: #{tpu_custom_call.1}
  #allocation0 [shape = 'u32[]', space=smem, size = 0x4, offset = 0x4, fixed_abs, tag = 'smem constant byte address 0x4 - core index']
  #allocation1 [shape = 'u32[144,128]{1,0:T(1,128)}', space=vmem, size = 0x12000, scoped, tag = 'internal scratch']
  #allocation2 [shape = 'f32[1,1]{1,0:T(1,128)S(6)}', space=smem, size = 0x200, scoped, tag = 'scoped memory for tpu_custom_call.1']
  %s0 = inlined_call_operand.hbm [shape: f32[3,1280], index: 0, kind: input, shape index: {}]
  %s1 = inlined_call_operand.hbm [shape: f32[1280,128], index: 1, kind: input, shape index: {}]
  %s2 = inlined_call_operand.<no memory space> [shape: f32[1,1], index: 2, kind: input, shape index: {}]
  %s3 = inlined_call_operand.hbm [shape: f32[3,128], index: 3, kind: output, shape index: {}]
  %s4 = sld [smem:[#allocation0]]
  $region30: #{tpu_custom_call.1} parent=0
    _
  %s6 = ssub.s32 1, %s4
  %s7 = scalar_select 0, %s6, %s4
  %8 = sst [smem:[#allocation2]] %s2
  $region1: #{tpu_custom_call.1} parent=0
    #allocation3 [shape = 'u8[20480]{0}', space=vmem, size = 0x5000, scoped, tag = 'input window, operand 0, single buffered']
    #allocation4 [shape = 's32[1]{0}', space=sflag, size = 0x4, scoped, tag = 'scoped memory for tpu_custom_call.1']
    #allocation5 [shape = 's32[1]{0}', space=sflag, size = 0x4, scoped, tag = 'scoped memory for tpu_custom_call.1']
    #allocation6 [shape = 'u8[655360]{0}', space=vmem, size = 0xa0000, scoped, tag = 'input window, operand 1, single buffered']
    #allocation7 [shape = 's32[1]{0}', space=sflag, size = 0x4, scoped, tag = 'scoped memory for tpu_custom_call.1']
    #allocation8 [shape = 'u8[2048]{0}', space=vmem, size = 0x800, scoped, tag = 'output window, operand 0, single buffered']
    %9 = vsyncpa [#allocation4], 0
    %10 = vsyncpa [#allocation7], 0
    %11 = vsyncpa [#allocation5], 0
    // Predicated region
    $region2: #{tpu_custom_call.1} parent=1 // pred_check
      _
    $region3: #{tpu_custom_call.1} parent=1 // pred_check_branch
      %13 = sbr.rel (0) target = $region5
    $region4: #{tpu_custom_call.1} parent=1 // pred_region
      %s15 = ssub.s32 640, 640
      %16 = vsyncadd [#allocation4], %s15
      %s18 = sshll.u32 [#allocation3], 4
      %s19 = int_to_ptr.vmem [resolvable:$true] %s18
      %21 = dma.hbm_to_vmem [thread:$0]  %s0, 640, %s19, [#allocation4]
    $region5: #{tpu_custom_call.1} parent=1 // pred_fallthru
      _
    // Predicated region
    $region6: #{tpu_custom_call.1} parent=1 // pred_check
      _
    $region7: #{tpu_custom_call.1} parent=1 // pred_check_branch
      %23 = sbr.rel (0) target = $region9
    $region8: #{tpu_custom_call.1} parent=1 // pred_region
      %s25 = ssub.s32 20480, 20480
      %26 = vsyncadd [#allocation7], %s25
      %s27 = sshll.u32 [#allocation6], 4
      %s28 = int_to_ptr.vmem [resolvable:$true] %s27
      %33 = dma.hbm_to_vmem [thread:$0]  %s1, 20480, %s28, [#allocation7], 128, 128, 8
    $region9: #{tpu_custom_call.1} parent=1 // pred_fallthru
      _
    // Predicated region
    $region10: #{tpu_custom_call.1} parent=1 // pred_check
      _
    $region11: #{tpu_custom_call.1} parent=1 // pred_check_branch
      %35 = sbr.rel (0) target = $region13
    $region12: #{tpu_custom_call.1} parent=1 // pred_region
      _
    $region13: #{tpu_custom_call.1} parent=1 // pred_fallthru
      _
    // Predicated region
    $region14: #{tpu_custom_call.1} parent=1 // pred_check
      _
    $region15: #{tpu_custom_call.1} parent=1 // pred_check_branch
      %37 = sbr.rel (0) target = $region17
    $region16: #{tpu_custom_call.1} parent=1 // pred_region
      %38 = dma.done [#allocation4], 640
    $region17: #{tpu_custom_call.1} parent=1 // pred_fallthru
      _
    // Predicated region
    $region18: #{tpu_custom_call.1} parent=1 // pred_check
      _
    $region19: #{tpu_custom_call.1} parent=1 // pred_check_branch
      %40 = sbr.rel (0) target = $region21
    $region20: #{tpu_custom_call.1} parent=1 // pred_region
      %41 = dma.done [#allocation7], 20480
    $region21: #{tpu_custom_call.1} parent=1 // pred_fallthru
      _
    %v42 = vld [vmem:[#allocation3] sm:$0x77]
    %v43 = vld [vmem:[#allocation3 + $0x8] sm:$0x77]
    %v44 = vld [vmem:[#allocation3 + $0x10] sm:$0x77]
    %v45 = vld [vmem:[#allocation3 + $0x18] sm:$0x77]
    %v46 = vld [vmem:[#allocation3 + $0x20] sm:$0x77]
    %v47 = vld [vmem:[#allocation6] sm:$0xff]
    %v48 = vld [vmem:[#allocation6 + $0x8] sm:$0xff]
    %v49 = vld [vmem:[#allocation6 + $0x10] sm:$0xff]
    %v50 = vld [vmem:[#allocation6 + $0x18] sm:$0xff]
    %v51 = vld [vmem:[#allocation6 + $0x20] sm:$0xff]
    %v52 = vld [vmem:[#allocation6 + $0x28] sm:$0xff]
    %v53 = vld [vmem:[#allocation6 + $0x30] sm:$0xff]
    %v54 = vld [vmem:[#allocation6 + $0x38] sm:$0xff]
    %v55 = vld [vmem:[#allocation6 + $0x40] sm:$0xff]
    %v56 = vld [vmem:[#allocation6 + $0x48] sm:$0xff]
    %v57 = vld [vmem:[#allocation6 + $0x50] sm:$0xff]
    %v58 = vld [vmem:[#allocation6 + $0x58] sm:$0xff]
    %v59 = vld [vmem:[#allocation6 + $0x60] sm:$0xff]
    %v60 = vld [vmem:[#allocation6 + $0x68] sm:$0xff]
    %v61 = vld [vmem:[#allocation6 + $0x70] sm:$0xff]
    %v62 = vld [vmem:[#allocation6 + $0x78] sm:$0xff]
    %v63 = vld [vmem:[#allocation6 + $0x80] sm:$0xff]
    %v64 = vld [vmem:[#allocation6 + $0x88] sm:$0xff]
    %v65 = vld [vmem:[#allocation6 + $0x90] sm:$0xff]
    %v66 = vld [vmem:[#allocation6 + $0x98] sm:$0xff]
    %v67 = vld [vmem:[#allocation6 + $0xa0] sm:$0xff]
    %v68 = vld [vmem:[#allocation6 + $0xa8] sm:$0xff]
    %v69 = vld [vmem:[#allocation6 + $0xb0] sm:$0xff]
    %v70 = vld [vmem:[#allocation6 + $0xb8] sm:$0xff]
    %v71 = vld [vmem:[#allocation6 + $0xc0] sm:$0xff]
    %v72 = vld [vmem:[#allocation6 + $0xc8] sm:$0xff]
    %v73 = vld [vmem:[#allocation6 + $0xd0] sm:$0xff]
    %v74 = vld [vmem:[#allocation6 + $0xd8] sm:$0xff]
    %v75 = vld [vmem:[#allocation6 + $0xe0] sm:$0xff]
    %v76 = vld [vmem:[#allocation6 + $0xe8] sm:$0xff]
    %v77 = vld [vmem:[#allocation6 + $0xf0] sm:$0xff]
    %v78 = vld [vmem:[#allocation6 + $0xf8] sm:$0xff]
    %v79 = vld [vmem:[#allocation6 + $0x100] sm:$0xff]
    %v80 = vld [vmem:[#allocation6 + $0x108] sm:$0xff]
    %v81 = vld [vmem:[#allocation6 + $0x110] sm:$0xff]
    %v82 = vld [vmem:[#allocation6 + $0x118] sm:$0xff]
    %v83 = vld [vmem:[#allocation6 + $0x120] sm:$0xff]
    %v84 = vld [vmem:[#allocation6 + $0x128] sm:$0xff]
    %v85 = vld [vmem:[#allocation6 + $0x130] sm:$0xff]
    %v86 = vld [vmem:[#allocation6 + $0x138] sm:$0xff]
    %v87 = vld [vmem:[#allocation6 + $0x140] sm:$0xff]
    %v88 = vld [vmem:[#allocation6 + $0x148] sm:$0xff]
    %v89 = vld [vmem:[#allocation6 + $0x150] sm:$0xff]
    %v90 = vld [vmem:[#allocation6 + $0x158] sm:$0xff]
    %v91 = vld [vmem:[#allocation6 + $0x160] sm:$0xff]
    %v92 = vld [vmem:[#allocation6 + $0x168] sm:$0xff]
    %v93 = vld [vmem:[#allocation6 + $0x170] sm:$0xff]
    %v94 = vld [vmem:[#allocation6 + $0x178] sm:$0xff]
    %v95 = vld [vmem:[#allocation6 + $0x180] sm:$0xff]
    %v96 = vld [vmem:[#allocation6 + $0x188] sm:$0xff]
    %v97 = vld [vmem:[#allocation6 + $0x190] sm:$0xff]
    %v98 = vld [vmem:[#allocation6 + $0x198] sm:$0xff]
    %v99 = vld [vmem:[#allocation6 + $0x1a0] sm:$0xff]
    %v100 = vld [vmem:[#allocation6 + $0x1a8] sm:$0xff]
    %v101 = vld [vmem:[#allocation6 + $0x1b0] sm:$0xff]
    %v102 = vld [vmem:[#allocation6 + $0x1b8] sm:$0xff]
    %v103 = vld [vmem:[#allocation6 + $0x1c0] sm:$0xff]
    %v104 = vld [vmem:[#allocation6 + $0x1c8] sm:$0xff]
    %v105 = vld [vmem:[#allocation6 + $0x1d0] sm:$0xff]
    %v106 = vld [vmem:[#allocation6 + $0x1d8] sm:$0xff]
    %v107 = vld [vmem:[#allocation6 + $0x1e0] sm:$0xff]
    %v108 = vld [vmem:[#allocation6 + $0x1e8] sm:$0xff]
    %v109 = vld [vmem:[#allocation6 + $0x1f0] sm:$0xff]
    %v110 = vld [vmem:[#allocation6 + $0x1f8] sm:$0xff]
    %v111 = vld [vmem:[#allocation6 + $0x200] sm:$0xff]
    %v112 = vld [vmem:[#allocation6 + $0x208] sm:$0xff]
    %v113 = vld [vmem:[#allocation6 + $0x210] sm:$0xff]
    %v114 = vld [vmem:[#allocation6 + $0x218] sm:$0xff]
    %v115 = vld [vmem:[#allocation6 + $0x220] sm:$0xff]
    %v116 = vld [vmem:[#allocation6 + $0x228] sm:$0xff]
    %v117 = vld [vmem:[#allocation6 + $0x230] sm:$0xff]
    %v118 = vld [vmem:[#allocation6 + $0x238] sm:$0xff]
    %v119 = vld [vmem:[#allocation6 + $0x240] sm:$0xff]
    %v120 = vld [vmem:[#allocation6 + $0x248] sm:$0xff]
    %v121 = vld [vmem:[#allocation6 + $0x250] sm:$0xff]
    %v122 = vld [vmem:[#allocation6 + $0x258] sm:$0xff]
    %v123 = vld [vmem:[#allocation6 + $0x260] sm:$0xff]
    %v124 = vld [vmem:[#allocation6 + $0x268] sm:$0xff]
    %v125 = vld [vmem:[#allocation6 + $0x270] sm:$0xff]
    %v126 = vld [vmem:[#allocation6 + $0x278] sm:$0xff]
    %v127 = vld [vmem:[#allocation6 + $0x280] sm:$0xff]
    %v128 = vld [vmem:[#allocation6 + $0x288] sm:$0xff]
    %v129 = vld [vmem:[#allocation6 + $0x290] sm:$0xff]
    %v130 = vld [vmem:[#allocation6 + $0x298] sm:$0xff]
    %v131 = vld [vmem:[#allocation6 + $0x2a0] sm:$0xff]
    %v132 = vld [vmem:[#allocation6 + $0x2a8] sm:$0xff]
    %v133 = vld [vmem:[#allocation6 + $0x2b0] sm:$0xff]
    %v134 = vld [vmem:[#allocation6 + $0x2b8] sm:$0xff]
    %v135 = vld [vmem:[#allocation6 + $0x2c0] sm:$0xff]
    %v136 = vld [vmem:[#allocation6 + $0x2c8] sm:$0xff]
    %v137 = vld [vmem:[#allocation6 + $0x2d0] sm:$0xff]
    %v138 = vld [vmem:[#allocation6 + $0x2d8] sm:$0xff]
    %v139 = vld [vmem:[#allocation6 + $0x2e0] sm:$0xff]
    %v140 = vld [vmem:[#allocation6 + $0x2e8] sm:$0xff]
    %v141 = vld [vmem:[#allocation6 + $0x2f0] sm:$0xff]
    %v142 = vld [vmem:[#allocation6 + $0x2f8] sm:$0xff]
    %v143 = vld [vmem:[#allocation6 + $0x300] sm:$0xff]
    %v144 = vld [vmem:[#allocation6 + $0x308] sm:$0xff]
    %v145 = vld [vmem:[#allocation6 + $0x310] sm:$0xff]
    %v146 = vld [vmem:[#allocation6 + $0x318] sm:$0xff]
    %v147 = vld [vmem:[#allocation6 + $0x320] sm:$0xff]
    %v148 = vld [vmem:[#allocation6 + $0x328] sm:$0xff]
    %v149 = vld [vmem:[#allocation6 + $0x330] sm:$0xff]
    %v150 = vld [vmem:[#allocation6 + $0x338] sm:$0xff]
    %v151 = vld [vmem:[#allocation6 + $0x340] sm:$0xff]
    %v152 = vld [vmem:[#allocation6 + $0x348] sm:$0xff]
    %v153 = vld [vmem:[#allocation6 + $0x350] sm:$0xff]
    %v154 = vld [vmem:[#allocation6 + $0x358] sm:$0xff]
    %v155 = vld [vmem:[#allocation6 + $0x360] sm:$0xff]
    %v156 = vld [vmem:[#allocation6 + $0x368] sm:$0xff]
    %v157 = vld [vmem:[#allocation6 + $0x370] sm:$0xff]
    %v158 = vld [vmem:[#allocation6 + $0x378] sm:$0xff]
    %v159 = vld [vmem:[#allocation6 + $0x380] sm:$0xff]
    %v160 = vld [vmem:[#allocation6 + $0x388] sm:$0xff]
    %v161 = vld [vmem:[#allocation6 + $0x390] sm:$0xff]
    %v162 = vld [vmem:[#allocation6 + $0x398] sm:$0xff]
    %v163 = vld [vmem:[#allocation6 + $0x3a0] sm:$0xff]
    %v164 = vld [vmem:[#allocation6 + $0x3a8] sm:$0xff]
    %v165 = vld [vmem:[#allocation6 + $0x3b0] sm:$0xff]
    %v166 = vld [vmem:[#allocation6 + $0x3b8] sm:$0xff]
    %v167 = vld [vmem:[#allocation6 + $0x3c0] sm:$0xff]
    %v168 = vld [vmem:[#allocation6 + $0x3c8] sm:$0xff]
    %v169 = vld [vmem:[#allocation6 + $0x3d0] sm:$0xff]
    %v170 = vld [vmem:[#allocation6 + $0x3d8] sm:$0xff]
    %v171 = vld [vmem:[#allocation6 + $0x3e0] sm:$0xff]
    %v172 = vld [vmem:[#allocation6 + $0x3e8] sm:$0xff]
    %v173 = vld [vmem:[#allocation6 + $0x3f0] sm:$0xff]
    %v174 = vld [vmem:[#allocation6 + $0x3f8] sm:$0xff]
    %v175 = vld [vmem:[#allocation6 + $0x400] sm:$0xff]
    %v176 = vld [vmem:[#allocation6 + $0x408] sm:$0xff]
    %v177 = vld [vmem:[#allocation6 + $0x410] sm:$0xff]
    %v178 = vld [vmem:[#allocation6 + $0x418] sm:$0xff]
    %v179 = vld [vmem:[#allocation6 + $0x420] sm:$0xff]
    %v180 = vld [vmem:[#allocation6 + $0x428] sm:$0xff]
    %v181 = vld [vmem:[#allocation6 + $0x430] sm:$0xff]
    %v182 = vld [vmem:[#allocation6 + $0x438] sm:$0xff]
    %v183 = vld [vmem:[#allocation6 + $0x440] sm:$0xff]
    %v184 = vld [vmem:[#allocation6 + $0x448] sm:$0xff]
    %v185 = vld [vmem:[#allocation6 + $0x450] sm:$0xff]
    %v186 = vld [vmem:[#allocation6 + $0x458] sm:$0xff]
    %v187 = vld [vmem:[#allocation6 + $0x460] sm:$0xff]
    %v188 = vld [vmem:[#allocation6 + $0x468] sm:$0xff]
    %v189 = vld [vmem:[#allocation6 + $0x470] sm:$0xff]
    %v190 = vld [vmem:[#allocation6 + $0x478] sm:$0xff]
    %v191 = vld [vmem:[#allocation6 + $0x480] sm:$0xff]
    %v192 = vld [vmem:[#allocation6 + $0x488] sm:$0xff]
    %v193 = vld [vmem:[#allocation6 + $0x490] sm:$0xff]
    %v194 = vld [vmem:[#allocation6 + $0x498] sm:$0xff]
    %v195 = vld [vmem:[#allocation6 + $0x4a0] sm:$0xff]
    %v196 = vld [vmem:[#allocation6 + $0x4a8] sm:$0xff]
    %v197 = vld [vmem:[#allocation6 + $0x4b0] sm:$0xff]
    %v198 = vld [vmem:[#allocation6 + $0x4b8] sm:$0xff]
    %v199 = vld [vmem:[#allocation6 + $0x4c0] sm:$0xff]
    %v200 = vld [vmem:[#allocation6 + $0x4c8] sm:$0xff]
    %v201 = vld [vmem:[#allocation6 + $0x4d0] sm:$0xff]
    %v202 = vld [vmem:[#allocation6 + $0x4d8] sm:$0xff]
    %v203 = vld [vmem:[#allocation6 + $0x4e0] sm:$0xff]
    %v204 = vld [vmem:[#allocation6 + $0x4e8] sm:$0xff]
    %v205 = vld [vmem:[#allocation6 + $0x4f0] sm:$0xff]
    %v206 = vld [vmem:[#allocation6 + $0x4f8] sm:$0xff]
    %s207 = sld [smem:[#allocation2]]
    %v208 = vstv %s207
    %v214 = vcombine.high %v42, %v42
    %v215 = vcombine.high %v43, %v43
    %v216 = vcombine.high %v44, %v44
    %v217 = vcombine.high %v45, %v45
    %v218 = vcombine.high %v46, %v46
    %224 = vmatprep.subr.mxu0 0.0
    %v225 = vand.u32 %v47, 4294901760
    %226 = vmatpush1.msra.mxu0 %v225
    %227 = vmatprep.subr.mxu0 0.0
    %v228 = vand.u32 %v48, 4294901760
    %229 = vmatpush1.msra.mxu0 %v228
    %230 = vmatprep.subr.mxu0 0.0
    %v231 = vand.u32 %v49, 4294901760
    %232 = vmatpush1.msra.mxu0 %v231
    %233 = vmatprep.subr.mxu0 0.0
    %v234 = vand.u32 %v50, 4294901760
    %235 = vmatpush1.msra.mxu0 %v234
    %236 = vmatprep.subr.mxu0 0.0
    %v237 = vand.u32 %v51, 4294901760
    %238 = vmatpush1.msra.mxu0 %v237
    %239 = vmatprep.subr.mxu0 0.0
    %v240 = vand.u32 %v52, 4294901760
    %241 = vmatpush1.msra.mxu0 %v240
    %242 = vmatprep.subr.mxu0 0.0
    %v243 = vand.u32 %v53, 4294901760
    %244 = vmatpush1.msra.mxu0 %v243
    %245 = vmatprep.subr.mxu0 0.0
    %v246 = vand.u32 %v54, 4294901760
    %247 = vmatpush1.msra.mxu0 %v246
    %248 = vmatprep.subr.mxu0 0.0
    %v249 = vand.u32 %v55, 4294901760
    %250 = vmatpush1.msra.mxu0 %v249
    %251 = vmatprep.subr.mxu0 0.0
    %v252 = vand.u32 %v56, 4294901760
    %253 = vmatpush1.msra.mxu0 %v252
    %254 = vmatprep.subr.mxu0 0.0
    %v255 = vand.u32 %v57, 4294901760
    %256 = vmatpush1.msra.mxu0 %v255
    %257 = vmatprep.subr.mxu0 0.0
    %v258 = vand.u32 %v58, 4294901760
    %259 = vmatpush1.msra.mxu0 %v258
    %260 = vmatprep.subr.mxu0 0.0
    %v261 = vand.u32 %v59, 4294901760
    %262 = vmatpush1.msra.mxu0 %v261
    %263 = vmatprep.subr.mxu0 0.0
    %v264 = vand.u32 %v60, 4294901760
    %265 = vmatpush1.msra.mxu0 %v264
    %266 = vmatprep.subr.mxu0 0.0
    %v267 = vand.u32 %v61, 4294901760
    %268 = vmatpush1.msra.mxu0 %v267
    %269 = vmatprep.subr.mxu0 0.0
    %v270 = vand.u32 %v62, 4294901760
    %271 = vmatpush1.msra.mxu0 %v270
    %272 = vmatprep.subr.mxu0 0.0
    %v273 = vand.u32 %v63, 4294901760
    %274 = vmatpush1.msra.mxu0 %v273
    %275 = vmatprep.subr.mxu0 0.0
    %v276 = vand.u32 %v64, 4294901760
    %277 = vmatpush1.msra.mxu0 %v276
    %278 = vmatprep.subr.mxu0 0.0
    %v279 = vand.u32 %v65, 4294901760
    %280 = vmatpush1.msra.mxu0 %v279
    %281 = vmatprep.subr.mxu0 0.0
    %v282 = vand.u32 %v66, 4294901760
    %283 = vmatpush1.msra.mxu0 %v282
    %284 = vmatprep.subr.mxu0 0.0
    %v285 = vand.u32 %v67, 4294901760
    %286 = vmatpush1.msra.mxu0 %v285
    %287 = vmatprep.subr.mxu0 0.0
    %v288 = vand.u32 %v68, 4294901760
    %289 = vmatpush1.msra.mxu0 %v288
    %290 = vmatprep.subr.mxu0 0.0
    %v291 = vand.u32 %v69, 4294901760
    %292 = vmatpush1.msra.mxu0 %v291
    %293 = vmatprep.subr.mxu0 0.0
    %v294 = vand.u32 %v70, 4294901760
    %295 = vmatpush1.msra.mxu0 %v294
    %296 = vmatprep.subr.mxu0 0.0
    %v297 = vand.u32 %v71, 4294901760
    %298 = vmatpush1.msra.mxu0 %v297
    %299 = vmatprep.subr.mxu0 0.0
    %v300 = vand.u32 %v72, 4294901760
    %301 = vmatpush1.msra.mxu0 %v300
    %302 = vmatprep.subr.mxu0 0.0
    %v303 = vand.u32 %v73, 4294901760
    %304 = vmatpush1.msra.mxu0 %v303
    %305 = vmatprep.subr.mxu0 0.0
    %v306 = vand.u32 %v74, 4294901760
    %307 = vmatpush1.msra.mxu0 %v306
    %308 = vmatprep.subr.mxu0 0.0
    %v309 = vand.u32 %v75, 4294901760
    %310 = vmatpush1.msra.mxu0 %v309
    %311 = vmatprep.subr.mxu0 0.0
    %v312 = vand.u32 %v76, 4294901760
    %313 = vmatpush1.msra.mxu0 %v312
    %314 = vmatprep.subr.mxu0 0.0
    %v315 = vand.u32 %v77, 4294901760
    %316 = vmatpush1.msra.mxu0 %v315
    %317 = vmatprep.subr.mxu0 0.0
    %v318 = vand.u32 %v78, 4294901760
    %319 = vmatpush1.msra.mxu0 %v318
    %v320 = vand.u32 %v214, 4294901760
    %v321 = vsub.f32 %v214, %v320
    %v322 = vand.u32 %v321, 4294901760
    %v323 = vsub.f32 %v321, %v322
    %v324 = vand.u32 %v323, 4294901760
    %325 = vmatprep.mubr.f32.mxu0 %v324
    %v326 = vand.u32 %v42, 4294901760
    %v327 = vsub.f32 %v42, %v326
    %v328 = vand.u32 %v327, 4294901760
    %v329 = vsub.f32 %v327, %v328
    %v330 = vand.u32 %v329, 4294901760
    %331 = vmatmul.mubr.f32.gmra.mrb[0].mxu0 %v330
    %v332 = vpop.f32.mrb[0].mxu0
    %v333 = vadd.f32 %v208, %v332
    %v334 = vpop.f32.mrb[0].mxu0
    %335 = vdwg.mxu0
    %336 = vmatprep.subr.mxu0 0.0
    %v337 = vand.u32 %v47, 4294901760
    %v338 = vsub.f32 %v47, %v337
    %v339 = vand.u32 %v338, 4294901760
    %v340 = vsub.f32 %v338, %v339
    %v341 = vand.u32 %v340, 4294901760
    %342 = vmatpush1.msra.mxu0 %v341
    %343 = vmatprep.subr.mxu0 0.0
    %v344 = vand.u32 %v48, 4294901760
    %v345 = vsub.f32 %v48, %v344
    %v346 = vand.u32 %v345, 4294901760
    %v347 = vsub.f32 %v345, %v346
    %v348 = vand.u32 %v347, 4294901760
    %349 = vmatpush1.msra.mxu0 %v348
    %350 = vmatprep.subr.mxu0 0.0
    %v351 = vand.u32 %v49, 4294901760
    %v352 = vsub.f32 %v49, %v351
    %v353 = vand.u32 %v352, 4294901760
    %v354 = vsub.f32 %v352, %v353
    %v355 = vand.u32 %v354, 4294901760
    %356 = vmatpush1.msra.mxu0 %v355
    %357 = vmatprep.subr.mxu0 0.0
    %v358 = vand.u32 %v50, 4294901760
    %v359 = vsub.f32 %v50, %v358
    %v360 = vand.u32 %v359, 4294901760
    %v361 = vsub.f32 %v359, %v360
    %v362 = vand.u32 %v361, 4294901760
    %363 = vmatpush1.msra.mxu0 %v362
    %364 = vmatprep.subr.mxu0 0.0
    %v365 = vand.u32 %v51, 4294901760
    %v366 = vsub.f32 %v51, %v365
    %v367 = vand.u32 %v366, 4294901760
    %v368 = vsub.f32 %v366, %v367
    %v369 = vand.u32 %v368, 4294901760
    %370 = vmatpush1.msra.mxu0 %v369
    %371 = vmatprep.subr.mxu0 0.0
    %v372 = vand.u32 %v52, 4294901760
    %v373 = vsub.f32 %v52, %v372
    %v374 = vand.u32 %v373, 4294901760
    %v375 = vsub.f32 %v373, %v374
    %v376 = vand.u32 %v375, 4294901760
    %377 = vmatpush1.msra.mxu0 %v376
    %378 = vmatprep.subr.mxu0 0.0
    %v379 = vand.u32 %v53, 4294901760
    %v380 = vsub.f32 %v53, %v379
    %v381 = vand.u32 %v380, 4294901760
    %v382 = vsub.f32 %v380, %v381
    %v383 = vand.u32 %v382, 4294901760
    %384 = vmatpush1.msra.mxu0 %v383
    %385 = vmatprep.subr.mxu0 0.0
    %v386 = vand.u32 %v54, 4294901760
    %v387 = vsub.f32 %v54, %v386
    %v388 = vand.u32 %v387, 4294901760
    %v389 = vsub.f32 %v387, %v388
    %v390 = vand.u32 %v389, 4294901760
    %391 = vmatpush1.msra.mxu0 %v390
    %392 = vmatprep.subr.mxu0 0.0
    %v393 = vand.u32 %v55, 4294901760
    %v394 = vsub.f32 %v55, %v393
    %v395 = vand.u32 %v394, 4294901760
    %v396 = vsub.f32 %v394, %v395
    %v397 = vand.u32 %v396, 4294901760
    %398 = vmatpush1.msra.mxu0 %v397
    %399 = vmatprep.subr.mxu0 0.0
    %v400 = vand.u32 %v56, 4294901760
    %v401 = vsub.f32 %v56, %v400
    %v402 = vand.u32 %v401, 4294901760
    %v403 = vsub.f32 %v401, %v402
    %v404 = vand.u32 %v403, 4294901760
    %405 = vmatpush1.msra.mxu0 %v404
    %406 = vmatprep.subr.mxu0 0.0
    %v407 = vand.u32 %v57, 4294901760
    %v408 = vsub.f32 %v57, %v407
    %v409 = vand.u32 %v408, 4294901760
    %v410 = vsub.f32 %v408, %v409
    %v411 = vand.u32 %v410, 4294901760
    %412 = vmatpush1.msra.mxu0 %v411
    %413 = vmatprep.subr.mxu0 0.0
    %v414 = vand.u32 %v58, 4294901760
    %v415 = vsub.f32 %v58, %v414
    %v416 = vand.u32 %v415, 4294901760
    %v417 = vsub.f32 %v415, %v416
    %v418 = vand.u32 %v417, 4294901760
    %419 = vmatpush1.msra.mxu0 %v418
    %420 = vmatprep.subr.mxu0 0.0
    %v421 = vand.u32 %v59, 4294901760
    %v422 = vsub.f32 %v59, %v421
    %v423 = vand.u32 %v422, 4294901760
    %v424 = vsub.f32 %v422, %v423
    %v425 = vand.u32 %v424, 4294901760
    %426 = vmatpush1.msra.mxu0 %v425
    %427 = vmatprep.subr.mxu0 0.0
    %v428 = vand.u32 %v60, 4294901760
    %v429 = vsub.f32 %v60, %v428
    %v430 = vand.u32 %v429, 4294901760
    %v431 = vsub.f32 %v429, %v430
    %v432 = vand.u32 %v431, 4294901760
    %433 = vmatpush1.msra.mxu0 %v432
    %434 = vmatprep.subr.mxu0 0.0
    %v435 = vand.u32 %v61, 4294901760
    %v436 = vsub.f32 %v61, %v435
    %v437 = vand.u32 %v436, 4294901760
    %v438 = vsub.f32 %v436, %v437
    %v439 = vand.u32 %v438, 4294901760
    %440 = vmatpush1.msra.mxu0 %v439
    %441 = vmatprep.subr.mxu0 0.0
    %v442 = vand.u32 %v62, 4294901760
    %v443 = vsub.f32 %v62, %v442
    %v444 = vand.u32 %v443, 4294901760
    %v445 = vsub.f32 %v443, %v444
    %v446 = vand.u32 %v445, 4294901760
    %447 = vmatpush1.msra.mxu0 %v446
    %448 = vmatprep.subr.mxu0 0.0
    %v449 = vand.u32 %v63, 4294901760
    %v450 = vsub.f32 %v63, %v449
    %v451 = vand.u32 %v450, 4294901760
    %v452 = vsub.f32 %v450, %v451
    %v453 = vand.u32 %v452, 4294901760
    %454 = vmatpush1.msra.mxu0 %v453
    %455 = vmatprep.subr.mxu0 0.0
    %v456 = vand.u32 %v64, 4294901760
    %v457 = vsub.f32 %v64, %v456
    %v458 = vand.u32 %v457, 4294901760
    %v459 = vsub.f32 %v457, %v458
    %v460 = vand.u32 %v459, 4294901760
    %461 = vmatpush1.msra.mxu0 %v460
    %462 = vmatprep.subr.mxu0 0.0
    %v463 = vand.u32 %v65, 4294901760
    %v464 = vsub.f32 %v65, %v463
    %v465 = vand.u32 %v464, 4294901760
    %v466 = vsub.f32 %v464, %v465
    %v467 = vand.u32 %v466, 4294901760
    %468 = vmatpush1.msra.mxu0 %v467
    %469 = vmatprep.subr.mxu0 0.0
    %v470 = vand.u32 %v66, 4294901760
    %v471 = vsub.f32 %v66, %v470
    %v472 = vand.u32 %v471, 4294901760
    %v473 = vsub.f32 %v471, %v472
    %v474 = vand.u32 %v473, 4294901760
    %475 = vmatpush1.msra.mxu0 %v474
    %476 = vmatprep.subr.mxu0 0.0
    %v477 = vand.u32 %v67, 4294901760
    %v478 = vsub.f32 %v67, %v477
    %v479 = vand.u32 %v478, 4294901760
    %v480 = vsub.f32 %v478, %v479
    %v481 = vand.u32 %v480, 4294901760
    %482 = vmatpush1.msra.mxu0 %v481
    %483 = vmatprep.subr.mxu0 0.0
    %v484 = vand.u32 %v68, 4294901760
    %v485 = vsub.f32 %v68, %v484
    %v486 = vand.u32 %v485, 4294901760
    %v487 = vsub.f32 %v485, %v486
    %v488 = vand.u32 %v487, 4294901760
    %489 = vmatpush1.msra.mxu0 %v488
    %490 = vmatprep.subr.mxu0 0.0
    %v491 = vand.u32 %v69, 4294901760
    %v492 = vsub.f32 %v69, %v491
    %v493 = vand.u32 %v492, 4294901760
    %v494 = vsub.f32 %v492, %v493
    %v495 = vand.u32 %v494, 4294901760
    %496 = vmatpush1.msra.mxu0 %v495
    %497 = vmatprep.subr.mxu0 0.0
    %v498 = vand.u32 %v70, 4294901760
    %v499 = vsub.f32 %v70, %v498
    %v500 = vand.u32 %v499, 4294901760
    %v501 = vsub.f32 %v499, %v500
    %v502 = vand.u32 %v501, 4294901760
    %503 = vmatpush1.msra.mxu0 %v502
    %504 = vmatprep.subr.mxu0 0.0
    %v505 = vand.u32 %v71, 4294901760
    %v506 = vsub.f32 %v71, %v505
    %v507 = vand.u32 %v506, 4294901760
    %v508 = vsub.f32 %v506, %v507
    %v509 = vand.u32 %v508, 4294901760
    %510 = vmatpush1.msra.mxu0 %v509
    %511 = vmatprep.subr.mxu0 0.0
    %v512 = vand.u32 %v72, 4294901760
    %v513 = vsub.f32 %v72, %v512
    %v514 = vand.u32 %v513, 4294901760
    %v515 = vsub.f32 %v513, %v514
    %v516 = vand.u32 %v515, 4294901760
    %517 = vmatpush1.msra.mxu0 %v516
    %518 = vmatprep.subr.mxu0 0.0
    %v519 = vand.u32 %v73, 4294901760
    %v520 = vsub.f32 %v73, %v519
    %v521 = vand.u32 %v520, 4294901760
    %v522 = vsub.f32 %v520, %v521
    %v523 = vand.u32 %v522, 4294901760
    %524 = vmatpush1.msra.mxu0 %v523
    %525 = vmatprep.subr.mxu0 0.0
    %v526 = vand.u32 %v74, 4294901760
    %v527 = vsub.f32 %v74, %v526
    %v528 = vand.u32 %v527, 4294901760
    %v529 = vsub.f32 %v527, %v528
    %v530 = vand.u32 %v529, 4294901760
    %531 = vmatpush1.msra.mxu0 %v530
    %532 = vmatprep.subr.mxu0 0.0
    %v533 = vand.u32 %v75, 4294901760
    %v534 = vsub.f32 %v75, %v533
    %v535 = vand.u32 %v534, 4294901760
    %v536 = vsub.f32 %v534, %v535
    %v537 = vand.u32 %v536, 4294901760
    %538 = vmatpush1.msra.mxu0 %v537
    %539 = vmatprep.subr.mxu0 0.0
    %v540 = vand.u32 %v76, 4294901760
    %v541 = vsub.f32 %v76, %v540
    %v542 = vand.u32 %v541, 4294901760
    %v543 = vsub.f32 %v541, %v542
    %v544 = vand.u32 %v543, 4294901760
    %545 = vmatpush1.msra.mxu0 %v544
    %546 = vmatprep.subr.mxu0 0.0
    %v547 = vand.u32 %v77, 4294901760
    %v548 = vsub.f32 %v77, %v547
    %v549 = vand.u32 %v548, 4294901760
    %v550 = vsub.f32 %v548, %v549
    %v551 = vand.u32 %v550, 4294901760
    %552 = vmatpush1.msra.mxu0 %v551
    %553 = vmatprep.subr.mxu0 0.0
    %v554 = vand.u32 %v78, 4294901760
    %v555 = vsub.f32 %v78, %v554
    %v556 = vand.u32 %v555, 4294901760
    %v557 = vsub.f32 %v555, %v556
    %v558 = vand.u32 %v557, 4294901760
    %559 = vmatpush1.msra.mxu0 %v558
    %v560 = vand.u32 %v214, 4294901760
    %561 = vmatprep.mubr.f32.mxu0 %v560
    %v562 = vand.u32 %v42, 4294901760
    %563 = vmatmul.mubr.f32.gmra.mrb[0].mxu0 %v562
    %v564 = vpop.f32.mrb[0].mxu0
    %v565 = vadd.f32 %v333, %v564
    %v566 = vpop.f32.mrb[0].mxu0
    %567 = vdwg.mxu0
    %568 = vmatprep.subr.mxu0 0.0
    %v569 = vand.u32 %v47, 4294901760
    %v570 = vsub.f32 %v47, %v569
    %571 = vmatpush1.msra.mxu0 %v570
    %572 = vmatprep.subr.mxu0 0.0
    %v573 = vand.u32 %v48, 4294901760
    %v574 = vsub.f32 %v48, %v573
    %575 = vmatpush1.msra.mxu0 %v574
    %576 = vmatprep.subr.mxu0 0.0
    %v577 = vand.u32 %v49, 4294901760
    %v578 = vsub.f32 %v49, %v577
    %579 = vmatpush1.msra.mxu0 %v578
    %580 = vmatprep.subr.mxu0 0.0
    %v581 = vand.u32 %v50, 4294901760
    %v582 = vsub.f32 %v50, %v581
    %583 = vmatpush1.msra.mxu0 %v582
    %584 = vmatprep.subr.mxu0 0.0
    %v585 = vand.u32 %v51, 4294901760
    %v586 = vsub.f32 %v51, %v585
    %587 = vmatpush1.msra.mxu0 %v586
    %588 = vmatprep.subr.mxu0 0.0
    %v589 = vand.u32 %v52, 4294901760
    %v590 = vsub.f32 %v52, %v589
    %591 = vmatpush1.msra.mxu0 %v590
    %592 = vmatprep.subr.mxu0 0.0
    %v593 = vand.u32 %v53, 4294901760
    %v594 = vsub.f32 %v53, %v593
    %595 = vmatpush1.msra.mxu0 %v594
    %596 = vmatprep.subr.mxu0 0.0
    %v597 = vand.u32 %v54, 4294901760
    %v598 = vsub.f32 %v54, %v597
    %599 = vmatpush1.msra.mxu0 %v598
    %600 = vmatprep.subr.mxu0 0.0
    %v601 = vand.u32 %v55, 4294901760
    %v602 = vsub.f32 %v55, %v601
    %603 = vmatpush1.msra.mxu0 %v602
    %604 = vmatprep.subr.mxu0 0.0
    %v605 = vand.u32 %v56, 4294901760
    %v606 = vsub.f32 %v56, %v605
    %607 = vmatpush1.msra.mxu0 %v606
    %608 = vmatprep.subr.mxu0 0.0
    %v609 = vand.u32 %v57, 4294901760
    %v610 = vsub.f32 %v57, %v609
    %611 = vmatpush1.msra.mxu0 %v610
    %612 = vmatprep.subr.mxu0 0.0
    %v613 = vand.u32 %v58, 4294901760
    %v614 = vsub.f32 %v58, %v613
    %615 = vmatpush1.msra.mxu0 %v614
    %616 = vmatprep.subr.mxu0 0.0
    %v617 = vand.u32 %v59, 4294901760
    %v618 = vsub.f32 %v59, %v617
    %619 = vmatpush1.msra.mxu0 %v618
    %620 = vmatprep.subr.mxu0 0.0
    %v621 = vand.u32 %v60, 4294901760
    %v622 = vsub.f32 %v60, %v621
    %623 = vmatpush1.msra.mxu0 %v622
    %624 = vmatprep.subr.mxu0 0.0
    %v625 = vand.u32 %v61, 4294901760
    %v626 = vsub.f32 %v61, %v625
    %627 = vmatpush1.msra.mxu0 %v626
    %628 = vmatprep.subr.mxu0 0.0
    %v629 = vand.u32 %v62, 4294901760
    %v630 = vsub.f32 %v62, %v629
    %631 = vmatpush1.msra.mxu0 %v630
    %632 = vmatprep.subr.mxu0 0.0
    %v633 = vand.u32 %v63, 4294901760
    %v634 = vsub.f32 %v63, %v633
    %635 = vmatpush1.msra.mxu0 %v634
    %636 = vmatprep.subr.mxu0 0.0
    %v637 = vand.u32 %v64, 4294901760
    %v638 = vsub.f32 %v64, %v637
    %639 = vmatpush1.msra.mxu0 %v638
    %640 = vmatprep.subr.mxu0 0.0
    %v641 = vand.u32 %v65, 4294901760
    %v642 = vsub.f32 %v65, %v641
    %643 = vmatpush1.msra.mxu0 %v642
    %644 = vmatprep.subr.mxu0 0.0
    %v645 = vand.u32 %v66, 4294901760
    %v646 = vsub.f32 %v66, %v645
    %647 = vmatpush1.msra.mxu0 %v646
    %648 = vmatprep.subr.mxu0 0.0
    %v649 = vand.u32 %v67, 4294901760
    %v650 = vsub.f32 %v67, %v649
    %651 = vmatpush1.msra.mxu0 %v650
    %652 = vmatprep.subr.mxu0 0.0
    %v653 = vand.u32 %v68, 4294901760
    %v654 = vsub.f32 %v68, %v653
    %655 = vmatpush1.msra.mxu0 %v654
    %656 = vmatprep.subr.mxu0 0.0
    %v657 = vand.u32 %v69, 4294901760
    %v658 = vsub.f32 %v69, %v657
    %659 = vmatpush1.msra.mxu0 %v658
    %660 = vmatprep.subr.mxu0 0.0
    %v661 = vand.u32 %v70, 4294901760
    %v662 = vsub.f32 %v70, %v661
    %663 = vmatpush1.msra.mxu0 %v662
    %664 = vmatprep.subr.mxu0 0.0
    %v665 = vand.u32 %v71, 4294901760
    %v666 = vsub.f32 %v71, %v665
    %667 = vmatpush1.msra.mxu0 %v666
    %668 = vmatprep.subr.mxu0 0.0
    %v669 = vand.u32 %v72, 4294901760
    %v670 = vsub.f32 %v72, %v669
    %671 = vmatpush1.msra.mxu0 %v670
    %672 = vmatprep.subr.mxu0 0.0
    %v673 = vand.u32 %v73, 4294901760
    %v674 = vsub.f32 %v73, %v673
    %675 = vmatpush1.msra.mxu0 %v674
    %676 = vmatprep.subr.mxu0 0.0
    %v677 = vand.u32 %v74, 4294901760
    %v678 = vsub.f32 %v74, %v677
    %679 = vmatpush1.msra.mxu0 %v678
    %680 = vmatprep.subr.mxu0 0.0
    %v681 = vand.u32 %v75, 4294901760
    %v682 = vsub.f32 %v75, %v681
    %683 = vmatpush1.msra.mxu0 %v682
    %684 = vmatprep.subr.mxu0 0.0
    %v685 = vand.u32 %v76, 4294901760
    %v686 = vsub.f32 %v76, %v685
    %687 = vmatpush1.msra.mxu0 %v686
    %688 = vmatprep.subr.mxu0 0.0
    %v689 = vand.u32 %v77, 4294901760
    %v690 = vsub.f32 %v77, %v689
    %691 = vmatpush1.msra.mxu0 %v690
    %692 = vmatprep.subr.mxu0 0.0
    %v693 = vand.u32 %v78, 4294901760
    %v694 = vsub.f32 %v78, %v693
    %695 = vmatpush1.msra.mxu0 %v694
    %v696 = vand.u32 %v214, 4294901760
    %v697 = vsub.f32 %v214, %v696
    %698 = vmatprep.mubr.f32.mxu0 %v697
    %v699 = vand.u32 %v42, 4294901760
    %v700 = vsub.f32 %v42, %v699
    %701 = vmatmul.mubr.f32.gmra.mrb[0].mxu0 %v700
    %v702 = vpop.f32.mrb[0].mxu0
    %v703 = vadd.f32 %v565, %v702
    %v704 = vpop.f32.mrb[0].mxu0
    %705 = vdwg.mxu0
    %706 = vmatprep.subr.mxu0 0.0
    %v707 = vand.u32 %v47, 4294901760
    %708 = vmatpush1.msra.mxu0 %v707
    %709 = vmatprep.subr.mxu0 0.0
    %v710 = vand.u32 %v48, 4294901760
    %711 = vmatpush1.msra.mxu0 %v710
    %712 = vmatprep.subr.mxu0 0.0
    %v713 = vand.u32 %v49, 4294901760
    %714 = vmatpush1.msra.mxu0 %v713
    %715 = vmatprep.subr.mxu0 0.0
    %v716 = vand.u32 %v50, 4294901760
    %717 = vmatpush1.msra.mxu0 %v716
    %718 = vmatprep.subr.mxu0 0.0
    %v719 = vand.u32 %v51, 4294901760
    %720 = vmatpush1.msra.mxu0 %v719
    %721 = vmatprep.subr.mxu0 0.0
    %v722 = vand.u32 %v52, 4294901760
    %723 = vmatpush1.msra.mxu0 %v722
    %724 = vmatprep.subr.mxu0 0.0
    %v725 = vand.u32 %v53, 4294901760
    %726 = vmatpush1.msra.mxu0 %v725
    %727 = vmatprep.subr.mxu0 0.0
    %v728 = vand.u32 %v54, 4294901760
    %729 = vmatpush1.msra.mxu0 %v728
    %730 = vmatprep.subr.mxu0 0.0
    %v731 = vand.u32 %v55, 4294901760
    %732 = vmatpush1.msra.mxu0 %v731
    %733 = vmatprep.subr.mxu0 0.0
    %v734 = vand.u32 %v56, 4294901760
    %735 = vmatpush1.msra.mxu0 %v734
    %736 = vmatprep.subr.mxu0 0.0
    %v737 = vand.u32 %v57, 4294901760
    %738 = vmatpush1.msra.mxu0 %v737
    %739 = vmatprep.subr.mxu0 0.0
    %v740 = vand.u32 %v58, 4294901760
    %741 = vmatpush1.msra.mxu0 %v740
    %742 = vmatprep.subr.mxu0 0.0
    %v743 = vand.u32 %v59, 4294901760
    %744 = vmatpush1.msra.mxu0 %v743
    %745 = vmatprep.subr.mxu0 0.0
    %v746 = vand.u32 %v60, 4294901760
    %747 = vmatpush1.msra.mxu0 %v746
    %748 = vmatprep.subr.mxu0 0.0
    %v749 = vand.u32 %v61, 4294901760
    %750 = vmatpush1.msra.mxu0 %v749
    %751 = vmatprep.subr.mxu0 0.0
    %v752 = vand.u32 %v62, 4294901760
    %753 = vmatpush1.msra.mxu0 %v752
    %754 = vmatprep.subr.mxu0 0.0
    %v755 = vand.u32 %v63, 4294901760
    %756 = vmatpush1.msra.mxu0 %v755
    %757 = vmatprep.subr.mxu0 0.0
    %v758 = vand.u32 %v64, 4294901760
    %759 = vmatpush1.msra.mxu0 %v758
    %760 = vmatprep.subr.mxu0 0.0
    %v761 = vand.u32 %v65, 4294901760
    %762 = vmatpush1.msra.mxu0 %v761
    %763 = vmatprep.subr.mxu0 0.0
    %v764 = vand.u32 %v66, 4294901760
    %765 = vmatpush1.msra.mxu0 %v764
    %766 = vmatprep.subr.mxu0 0.0
    %v767 = vand.u32 %v67, 4294901760
    %768 = vmatpush1.msra.mxu0 %v767
    %769 = vmatprep.subr.mxu0 0.0
    %v770 = vand.u32 %v68, 4294901760
    %771 = vmatpush1.msra.mxu0 %v770
    %772 = vmatprep.subr.mxu0 0.0
    %v773 = vand.u32 %v69, 4294901760
    %774 = vmatpush1.msra.mxu0 %v773
    %775 = vmatprep.subr.mxu0 0.0
    %v776 = vand.u32 %v70, 4294901760
    %777 = vmatpush1.msra.mxu0 %v776
    %778 = vmatprep.subr.mxu0 0.0
    %v779 = vand.u32 %v71, 4294901760
    %780 = vmatpush1.msra.mxu0 %v779
    %781 = vmatprep.subr.mxu0 0.0
    %v782 = vand.u32 %v72, 4294901760
    %783 = vmatpush1.msra.mxu0 %v782
    %784 = vmatprep.subr.mxu0 0.0
    %v785 = vand.u32 %v73, 4294901760
    %786 = vmatpush1.msra.mxu0 %v785
    %787 = vmatprep.subr.mxu0 0.0
    %v788 = vand.u32 %v74, 4294901760
    %789 = vmatpush1.msra.mxu0 %v788
    %790 = vmatprep.subr.mxu0 0.0
    %v791 = vand.u32 %v75, 4294901760
    %792 = vmatpush1.msra.mxu0 %v791
    %793 = vmatprep.subr.mxu0 0.0
    %v794 = vand.u32 %v76, 4294901760
    %795 = vmatpush1.msra.mxu0 %v794
    %796 = vmatprep.subr.mxu0 0.0
    %v797 = vand.u32 %v77, 4294901760
    %798 = vmatpush1.msra.mxu0 %v797
    %799 = vmatprep.subr.mxu0 0.0
    %v800 = vand.u32 %v78, 4294901760
    %801 = vmatpush1.msra.mxu0 %v800
    %v802 = vand.u32 %v214, 4294901760
    %v803 = vsub.f32 %v214, %v802
    %v804 = vand.u32 %v803, 4294901760
    %805 = vmatprep.mubr.f32.mxu0 %v804
    %v806 = vand.u32 %v42, 4294901760
    %v807 = vsub.f32 %v42, %v806
    %v808 = vand.u32 %v807, 4294901760
    %809 = vmatmul.mubr.f32.gmra.mrb[0].mxu0 %v808
    %v810 = vpop.f32.mrb[0].mxu0
    %v811 = vadd.f32 %v703, %v810
    %v812 = vpop.f32.mrb[0].mxu0
    %813 = vdwg.mxu0
    %814 = vmatprep.subr.mxu0 0.0
    %v815 = vand.u32 %v47, 4294901760
    %v816 = vsub.f32 %v47, %v815
    %v817 = vand.u32 %v816, 4294901760
    %818 = vmatpush1.msra.mxu0 %v817
    %819 = vmatprep.subr.mxu0 0.0
    %v820 = vand.u32 %v48, 4294901760
    %v821 = vsub.f32 %v48, %v820
    %v822 = vand.u32 %v821, 4294901760
    %823 = vmatpush1.msra.mxu0 %v822
    %824 = vmatprep.subr.mxu0 0.0
    %v825 = vand.u32 %v49, 4294901760
    %v826 = vsub.f32 %v49, %v825
    %v827 = vand.u32 %v826, 4294901760
    %828 = vmatpush1.msra.mxu0 %v827
    %829 = vmatprep.subr.mxu0 0.0
    %v830 = vand.u32 %v50, 4294901760
    %v831 = vsub.f32 %v50, %v830
    %v832 = vand.u32 %v831, 4294901760
    %833 = vmatpush1.msra.mxu0 %v832
    %834 = vmatprep.subr.mxu0 0.0
    %v835 = vand.u32 %v51, 4294901760
    %v836 = vsub.f32 %v51, %v835
    %v837 = vand.u32 %v836, 4294901760
    %838 = vmatpush1.msra.mxu0 %v837
    %839 = vmatprep.subr.mxu0 0.0
    %v840 = vand.u32 %v52, 4294901760
    %v841 = vsub.f32 %v52, %v840
    %v842 = vand.u32 %v841, 4294901760
    %843 = vmatpush1.msra.mxu0 %v842
    %844 = vmatprep.subr.mxu0 0.0
    %v845 = vand.u32 %v53, 4294901760
    %v846 = vsub.f32 %v53, %v845
    %v847 = vand.u32 %v846, 4294901760
    %848 = vmatpush1.msra.mxu0 %v847
    %849 = vmatprep.subr.mxu0 0.0
    %v850 = vand.u32 %v54, 4294901760
    %v851 = vsub.f32 %v54, %v850
    %v852 = vand.u32 %v851, 4294901760
    %853 = vmatpush1.msra.mxu0 %v852
    %854 = vmatprep.subr.mxu0 0.0
    %v855 = vand.u32 %v55, 4294901760
    %v856 = vsub.f32 %v55, %v855
    %v857 = vand.u32 %v856, 4294901760
    %858 = vmatpush1.msra.mxu0 %v857
    %859 = vmatprep.subr.mxu0 0.0
    %v860 = vand.u32 %v56, 4294901760
    %v861 = vsub.f32 %v56, %v860
    %v862 = vand.u32 %v861, 4294901760
    %863 = vmatpush1.msra.mxu0 %v862
    %864 = vmatprep.subr.mxu0 0.0
    %v865 = vand.u32 %v57, 4294901760
    %v866 = vsub.f32 %v57, %v865
    %v867 = vand.u32 %v866, 4294901760
    %868 = vmatpush1.msra.mxu0 %v867
    %869 = vmatprep.subr.mxu0 0.0
    %v870 = vand.u32 %v58, 4294901760
    %v871 = vsub.f32 %v58, %v870
    %v872 = vand.u32 %v871, 4294901760
    %873 = vmatpush1.msra.mxu0 %v872
    %874 = vmatprep.subr.mxu0 0.0
    %v875 = vand.u32 %v59, 4294901760
    %v876 = vsub.f32 %v59, %v875
    %v877 = vand.u32 %v876, 4294901760
    %878 = vmatpush1.msra.mxu0 %v877
    %879 = vmatprep.subr.mxu0 0.0
    %v880 = vand.u32 %v60, 4294901760
    %v881 = vsub.f32 %v60, %v880
    %v882 = vand.u32 %v881, 4294901760
    %883 = vmatpush1.msra.mxu0 %v882
    %884 = vmatprep.subr.mxu0 0.0
    %v885 = vand.u32 %v61, 4294901760
    %v886 = vsub.f32 %v61, %v885
    %v887 = vand.u32 %v886, 4294901760
    %888 = vmatpush1.msra.mxu0 %v887
    %889 = vmatprep.subr.mxu0 0.0
    %v890 = vand.u32 %v62, 4294901760
    %v891 = vsub.f32 %v62, %v890
    %v892 = vand.u32 %v891, 4294901760
    %893 = vmatpush1.msra.mxu0 %v892
    %894 = vmatprep.subr.mxu0 0.0
    %v895 = vand.u32 %v63, 4294901760
    %v896 = vsub.f32 %v63, %v895
    %v897 = vand.u32 %v896, 4294901760
    %898 = vmatpush1.msra.mxu0 %v897
    %899 = vmatprep.subr.mxu0 0.0
    %v900 = vand.u32 %v64, 4294901760
    %v901 = vsub.f32 %v64, %v900
    %v902 = vand.u32 %v901, 4294901760
    %903 = vmatpush1.msra.mxu0 %v902
    %904 = vmatprep.subr.mxu0 0.0
    %v905 = vand.u32 %v65, 4294901760
    %v906 = vsub.f32 %v65, %v905
    %v907 = vand.u32 %v906, 4294901760
    %908 = vmatpush1.msra.mxu0 %v907
    %909 = vmatprep.subr.mxu0 0.0
    %v910 = vand.u32 %v66, 4294901760
    %v911 = vsub.f32 %v66, %v910
    %v912 = vand.u32 %v911, 4294901760
    %913 = vmatpush1.msra.mxu0 %v912
    %914 = vmatprep.subr.mxu0 0.0
    %v915 = vand.u32 %v67, 4294901760
    %v916 = vsub.f32 %v67, %v915
    %v917 = vand.u32 %v916, 4294901760
    %918 = vmatpush1.msra.mxu0 %v917
    %919 = vmatprep.subr.mxu0 0.0
    %v920 = vand.u32 %v68, 4294901760
    %v921 = vsub.f32 %v68, %v920
    %v922 = vand.u32 %v921, 4294901760
    %923 = vmatpush1.msra.mxu0 %v922
    %924 = vmatprep.subr.mxu0 0.0
    %v925 = vand.u32 %v69, 4294901760
    %v926 = vsub.f32 %v69, %v925
    %v927 = vand.u32 %v926, 4294901760
    %928 = vmatpush1.msra.mxu0 %v927
    %929 = vmatprep.subr.mxu0 0.0
    %v930 = vand.u32 %v70, 4294901760
    %v931 = vsub.f32 %v70, %v930
    %v932 = vand.u32 %v931, 4294901760
    %933 = vmatpush1.msra.mxu0 %v932
    %934 = vmatprep.subr.mxu0 0.0
    %v935 = vand.u32 %v71, 4294901760
    %v936 = vsub.f32 %v71, %v935
    %v937 = vand.u32 %v936, 4294901760
    %938 = vmatpush1.msra.mxu0 %v937
    %939 = vmatprep.subr.mxu0 0.0
    %v940 = vand.u32 %v72, 4294901760
    %v941 = vsub.f32 %v72, %v940
    %v942 = vand.u32 %v941, 4294901760
    %943 = vmatpush1.msra.mxu0 %v942
    %944 = vmatprep.subr.mxu0 0.0
    %v945 = vand.u32 %v73, 4294901760
    %v946 = vsub.f32 %v73, %v945
    %v947 = vand.u32 %v946, 4294901760
    %948 = vmatpush1.msra.mxu0 %v947
    %949 = vmatprep.subr.mxu0 0.0
    %v950 = vand.u32 %v74, 4294901760
    %v951 = vsub.f32 %v74, %v950
    %v952 = vand.u32 %v951, 4294901760
    %953 = vmatpush1.msra.mxu0 %v952
    %954 = vmatprep.subr.mxu0 0.0
    %v955 = vand.u32 %v75, 4294901760
    %v956 = vsub.f32 %v75, %v955
    %v957 = vand.u32 %v956, 4294901760
    %958 = vmatpush1.msra.mxu0 %v957
    %959 = vmatprep.subr.mxu0 0.0
    %v960 = vand.u32 %v76, 4294901760
    %v961 = vsub.f32 %v76, %v960
    %v962 = vand.u32 %v961, 4294901760
    %963 = vmatpush1.msra.mxu0 %v962
    %964 = vmatprep.subr.mxu0 0.0
    %v965 = vand.u32 %v77, 4294901760
    %v966 = vsub.f32 %v77, %v965
    %v967 = vand.u32 %v966, 4294901760
    %968 = vmatpush1.msra.mxu0 %v967
    %969 = vmatprep.subr.mxu0 0.0
    %v970 = vand.u32 %v78, 4294901760
    %v971 = vsub.f32 %v78, %v970
    %v972 = vand.u32 %v971, 4294901760
    %973 = vmatpush1.msra.mxu0 %v972
    %v974 = vand.u32 %v214, 4294901760
    %975 = vmatprep.mubr.f32.mxu0 %v974
    %v976 = vand.u32 %v42, 4294901760
    %977 = vmatmul.mubr.f32.gmra.mrb[0].mxu0 %v976
    %v978 = vpop.f32.mrb[0].mxu0
    %v979 = vadd.f32 %v811, %v978
    %v980 = vpop.f32.mrb[0].mxu0
    %981 = vdwg.mxu0
    %982 = vmatprep.subr.mxu0 0.0
    %v983 = vand.u32 %v47, 4294901760
    %984 = vmatpush1.msra.mxu0 %v983
    %985 = vmatprep.subr.mxu0 0.0
    %v986 = vand.u32 %v48, 4294901760
    %987 = vmatpush1.msra.mxu0 %v986
    %988 = vmatprep.subr.mxu0 0.0
    %v989 = vand.u32 %v49, 4294901760
    %990 = vmatpush1.msra.mxu0 %v989
    %991 = vmatprep.subr.mxu0 0.0
    %v992 = vand.u32 %v50, 4294901760
    %993 = vmatpush1.msra.mxu0 %v992
    %994 = vmatprep.subr.mxu0 0.0
    %v995 = vand.u32 %v51, 4294901760
    %996 = vmatpush1.msra.mxu0 %v995
    %997 = vmatprep.subr.mxu0 0.0
    %v998 = vand.u32 %v52, 4294901760
    %999 = vmatpush1.msra.mxu0 %v998
    %1000 = vmatprep.subr.mxu0 0.0
    %v1001 = vand.u32 %v53, 4294901760
    %1002 = vmatpush1.msra.mxu0 %v1001
    %1003 = vmatprep.subr.mxu0 0.0
    %v1004 = vand.u32 %v54, 4294901760
    %1005 = vmatpush1.msra.mxu0 %v1004
    %1006 = vmatprep.subr.mxu0 0.0
    %v1007 = vand.u32 %v55, 4294901760
    %1008 = vmatpush1.msra.mxu0 %v1007
    %1009 = vmatprep.subr.mxu0 0.0
    %v1010 = vand.u32 %v56, 4294901760
    %1011 = vmatpush1.msra.mxu0 %v1010
    %1012 = vmatprep.subr.mxu0 0.0
    %v1013 = vand.u32 %v57, 4294901760
    %1014 = vmatpush1.msra.mxu0 %v1013
    %1015 = vmatprep.subr.mxu0 0.0
    %v1016 = vand.u32 %v58, 4294901760
    %1017 = vmatpush1.msra.mxu0 %v1016
    %1018 = vmatprep.subr.mxu0 0.0
    %v1019 = vand.u32 %v59, 4294901760
    %1020 = vmatpush1.msra.mxu0 %v1019
    %1021 = vmatprep.subr.mxu0 0.0
    %v1022 = vand.u32 %v60, 4294901760
    %1023 = vmatpush1.msra.mxu0 %v1022
    %1024 = vmatprep.subr.mxu0 0.0
    %v1025 = vand.u32 %v61, 4294901760
    %1026 = vmatpush1.msra.mxu0 %v1025
    %1027 = vmatprep.subr.mxu0 0.0
    %v1028 = vand.u32 %v62, 4294901760
    %1029 = vmatpush1.msra.mxu0 %v1028
    %1030 = vmatprep.subr.mxu0 0.0
    %v1031 = vand.u32 %v63, 4294901760
    %1032 = vmatpush1.msra.mxu0 %v1031
    %1033 = vmatprep.subr.mxu0 0.0
    %v1034 = vand.u32 %v64, 4294901760
    %1035 = vmatpush1.msra.mxu0 %v1034
    %1036 = vmatprep.subr.mxu0 0.0
    %v1037 = vand.u32 %v65, 4294901760
    %1038 = vmatpush1.msra.mxu0 %v1037
    %1039 = vmatprep.subr.mxu0 0.0
    %v1040 = vand.u32 %v66, 4294901760
    %1041 = vmatpush1.msra.mxu0 %v1040
    %1042 = vmatprep.subr.mxu0 0.0
    %v1043 = vand.u32 %v67, 4294901760
    %1044 = vmatpush1.msra.mxu0 %v1043
    %1045 = vmatprep.subr.mxu0 0.0
    %v1046 = vand.u32 %v68, 4294901760
    %1047 = vmatpush1.msra.mxu0 %v1046
    %1048 = vmatprep.subr.mxu0 0.0
    %v1049 = vand.u32 %v69, 4294901760
    %1050 = vmatpush1.msra.mxu0 %v1049
    %1051 = vmatprep.subr.mxu0 0.0
    %v1052 = vand.u32 %v70, 4294901760
    %1053 = vmatpush1.msra.mxu0 %v1052
    %1054 = vmatprep.subr.mxu0 0.0
    %v1055 = vand.u32 %v71, 4294901760
    %1056 = vmatpush1.msra.mxu0 %v1055
    %1057 = vmatprep.subr.mxu0 0.0
    %v1058 = vand.u32 %v72, 4294901760
    %1059 = vmatpush1.msra.mxu0 %v1058
    %1060 = vmatprep.subr.mxu0 0.0
    %v1061 = vand.u32 %v73, 4294901760
    %1062 = vmatpush1.msra.mxu0 %v1061
    %1063 = vmatprep.subr.mxu0 0.0
    %v1064 = vand.u32 %v74, 4294901760
    %1065 = vmatpush1.msra.mxu0 %v1064
    %1066 = vmatprep.subr.mxu0 0.0
    %v1067 = vand.u32 %v75, 4294901760
    %1068 = vmatpush1.msra.mxu0 %v1067
    %1069 = vmatprep.subr.mxu0 0.0
    %v1070 = vand.u32 %v76, 4294901760
    %1071 = vmatpush1.msra.mxu0 %v1070
    %1072 = vmatprep.subr.mxu0 0.0
    %v1073 = vand.u32 %v77, 4294901760
    %1074 = vmatpush1.msra.mxu0 %v1073
    %1075 = vmatprep.subr.mxu0 0.0
    %v1076 = vand.u32 %v78, 4294901760
    %1077 = vmatpush1.msra.mxu0 %v1076
    %v1078 = vand.u32 %v214, 4294901760
    %1079 = vmatprep.mubr.f32.mxu0 %v1078
    %v1080 = vand.u32 %v42, 4294901760
    %1081 = vmatmul.mubr.f32.gmra.mrb[0].mxu0 %v1080
    %v1082 = vpop.f32.mrb[0].mxu0
    %v1083 = vadd.f32 %v979, %v1082
    %v1084 = vpop.f32.mrb[0].mxu0
    %1085 = vdwg.mxu0
    %1086 = vmatprep.subr.mxu0 0.0
    %v1087 = vand.u32 %v79, 4294901760
    %1088 = vmatpush1.msra.mxu0 %v1087
    %1089 = vmatprep.subr.mxu0 0.0
    %v1090 = vand.u32 %v80, 4294901760
    %1091 = vmatpush1.msra.mxu0 %v1090
    %1092 = vmatprep.subr.mxu0 0.0
    %v1093 = vand.u32 %v81, 4294901760
    %1094 = vmatpush1.msra.mxu0 %v1093
    %1095 = vmatprep.subr.mxu0 0.0
    %v1096 = vand.u32 %v82, 4294901760
    %1097 = vmatpush1.msra.mxu0 %v1096
    %1098 = vmatprep.subr.mxu0 0.0
    %v1099 = vand.u32 %v83, 4294901760
    %1100 = vmatpush1.msra.mxu0 %v1099
    %1101 = vmatprep.subr.mxu0 0.0
    %v1102 = vand.u32 %v84, 4294901760
    %1103 = vmatpush1.msra.mxu0 %v1102
    %1104 = vmatprep.subr.mxu0 0.0
    %v1105 = vand.u32 %v85, 4294901760
    %1106 = vmatpush1.msra.mxu0 %v1105
    %1107 = vmatprep.subr.mxu0 0.0
    %v1108 = vand.u32 %v86, 4294901760
    %1109 = vmatpush1.msra.mxu0 %v1108
    %1110 = vmatprep.subr.mxu0 0.0
    %v1111 = vand.u32 %v87, 4294901760
    %1112 = vmatpush1.msra.mxu0 %v1111
    %1113 = vmatprep.subr.mxu0 0.0
    %v1114 = vand.u32 %v88, 4294901760
    %1115 = vmatpush1.msra.mxu0 %v1114
    %1116 = vmatprep.subr.mxu0 0.0
    %v1117 = vand.u32 %v89, 4294901760
    %1118 = vmatpush1.msra.mxu0 %v1117
    %1119 = vmatprep.subr.mxu0 0.0
    %v1120 = vand.u32 %v90, 4294901760
    %1121 = vmatpush1.msra.mxu0 %v1120
    %1122 = vmatprep.subr.mxu0 0.0
    %v1123 = vand.u32 %v91, 4294901760
    %1124 = vmatpush1.msra.mxu0 %v1123
    %1125 = vmatprep.subr.mxu0 0.0
    %v1126 = vand.u32 %v92, 4294901760
    %1127 = vmatpush1.msra.mxu0 %v1126
    %1128 = vmatprep.subr.mxu0 0.0
    %v1129 = vand.u32 %v93, 4294901760
    %1130 = vmatpush1.msra.mxu0 %v1129
    %1131 = vmatprep.subr.mxu0 0.0
    %v1132 = vand.u32 %v94, 4294901760
    %1133 = vmatpush1.msra.mxu0 %v1132
    %1134 = vmatprep.subr.mxu0 0.0
    %v1135 = vand.u32 %v95, 4294901760
    %1136 = vmatpush1.msra.mxu0 %v1135
    %1137 = vmatprep.subr.mxu0 0.0
    %v1138 = vand.u32 %v96, 4294901760
    %1139 = vmatpush1.msra.mxu0 %v1138
    %1140 = vmatprep.subr.mxu0 0.0
    %v1141 = vand.u32 %v97, 4294901760
    %1142 = vmatpush1.msra.mxu0 %v1141
    %1143 = vmatprep.subr.mxu0 0.0
    %v1144 = vand.u32 %v98, 4294901760
    %1145 = vmatpush1.msra.mxu0 %v1144
    %1146 = vmatprep.subr.mxu0 0.0
    %v1147 = vand.u32 %v99, 4294901760
    %1148 = vmatpush1.msra.mxu0 %v1147
    %1149 = vmatprep.subr.mxu0 0.0
    %v1150 = vand.u32 %v100, 4294901760
    %1151 = vmatpush1.msra.mxu0 %v1150
    %1152 = vmatprep.subr.mxu0 0.0
    %v1153 = vand.u32 %v101, 4294901760
    %1154 = vmatpush1.msra.mxu0 %v1153
    %1155 = vmatprep.subr.mxu0 0.0
    %v1156 = vand.u32 %v102, 4294901760
    %1157 = vmatpush1.msra.mxu0 %v1156
    %1158 = vmatprep.subr.mxu0 0.0
    %v1159 = vand.u32 %v103, 4294901760
    %1160 = vmatpush1.msra.mxu0 %v1159
    %1161 = vmatprep.subr.mxu0 0.0
    %v1162 = vand.u32 %v104, 4294901760
    %1163 = vmatpush1.msra.mxu0 %v1162
    %1164 = vmatprep.subr.mxu0 0.0
    %v1165 = vand.u32 %v105, 4294901760
    %1166 = vmatpush1.msra.mxu0 %v1165
    %1167 = vmatprep.subr.mxu0 0.0
    %v1168 = vand.u32 %v106, 4294901760
    %1169 = vmatpush1.msra.mxu0 %v1168
    %1170 = vmatprep.subr.mxu0 0.0
    %v1171 = vand.u32 %v107, 4294901760
    %1172 = vmatpush1.msra.mxu0 %v1171
    %1173 = vmatprep.subr.mxu0 0.0
    %v1174 = vand.u32 %v108, 4294901760
    %1175 = vmatpush1.msra.mxu0 %v1174
    %1176 = vmatprep.subr.mxu0 0.0
    %v1177 = vand.u32 %v109, 4294901760
    %1178 = vmatpush1.msra.mxu0 %v1177
    %1179 = vmatprep.subr.mxu0 0.0
    %v1180 = vand.u32 %v110, 4294901760
    %1181 = vmatpush1.msra.mxu0 %v1180
    %v1182 = vand.u32 %v215, 4294901760
    %v1183 = vsub.f32 %v215, %v1182
    %v1184 = vand.u32 %v1183, 4294901760
    %v1185 = vsub.f32 %v1183, %v1184
    %v1186 = vand.u32 %v1185, 4294901760
    %1187 = vmatprep.mubr.f32.mxu0 %v1186
    %v1188 = vand.u32 %v43, 4294901760
    %v1189 = vsub.f32 %v43, %v1188
    %v1190 = vand.u32 %v1189, 4294901760
    %v1191 = vsub.f32 %v1189, %v1190
    %v1192 = vand.u32 %v1191, 4294901760
    %1193 = vmatmul.mubr.f32.gmra.mrb[0].mxu0 %v1192
    %v1194 = vpop.f32.mrb[0].mxu0
    %v1195 = vadd.f32 %v1083, %v1194
    %v1196 = vpop.f32.mrb[0].mxu0
    %1197 = vdwg.mxu0
    %1198 = vmatprep.subr.mxu0 0.0
    %v1199 = vand.u32 %v79, 4294901760
    %v1200 = vsub.f32 %v79, %v1199
    %v1201 = vand.u32 %v1200, 4294901760
    %v1202 = vsub.f32 %v1200, %v1201
    %v1203 = vand.u32 %v1202, 4294901760
    %1204 = vmatpush1.msra.mxu0 %v1203
    %1205 = vmatprep.subr.mxu0 0.0
    %v1206 = vand.u32 %v80, 4294901760
    %v1207 = vsub.f32 %v80, %v1206
    %v1208 = vand.u32 %v1207, 4294901760
    %v1209 = vsub.f32 %v1207, %v1208
    %v1210 = vand.u32 %v1209, 4294901760
    %1211 = vmatpush1.msra.mxu0 %v1210
    %1212 = vmatprep.subr.mxu0 0.0
    %v1213 = vand.u32 %v81, 4294901760
    %v1214 = vsub.f32 %v81, %v1213
    %v1215 = vand.u32 %v1214, 4294901760
    %v1216 = vsub.f32 %v1214, %v1215
    %v1217 = vand.u32 %v1216, 4294901760
    %1218 = vmatpush1.msra.mxu0 %v1217
    %1219 = vmatprep.subr.mxu0 0.0
    %v1220 = vand.u32 %v82, 4294901760
    %v1221 = vsub.f32 %v82, %v1220
    %v1222 = vand.u32 %v1221, 4294901760
    %v1223 = vsub.f32 %v1221, %v1222
    %v1224 = vand.u32 %v1223, 4294901760
    %1225 = vmatpush1.msra.mxu0 %v1224
    %1226 = vmatprep.subr.mxu0 0.0
    %v1227 = vand.u32 %v83, 4294901760
    %v1228 = vsub.f32 %v83, %v1227
    %v1229 = vand.u32 %v1228, 4294901760
    %v1230 = vsub.f32 %v1228, %v1229
    %v1231 = vand.u32 %v1230, 4294901760
    %1232 = vmatpush1.msra.mxu0 %v1231
    %1233 = vmatprep.subr.mxu0 0.0
    %v1234 = vand.u32 %v84, 4294901760
    %v1235 = vsub.f32 %v84, %v1234
    %v1236 = vand.u32 %v1235, 4294901760
    %v1237 = vsub.f32 %v1235, %v1236
    %v1238 = vand.u32 %v1237, 4294901760
    %1239 = vmatpush1.msra.mxu0 %v1238
    %1240 = vmatprep.subr.mxu0 0.0
    %v1241 = vand.u32 %v85, 4294901760
    %v1242 = vsub.f32 %v85, %v1241
    %v1243 = vand.u32 %v1242, 4294901760
    %v1244 = vsub.f32 %v1242, %v1243
    %v1245 = vand.u32 %v1244, 4294901760
    %1246 = vmatpush1.msra.mxu0 %v1245
    %1247 = vmatprep.subr.mxu0 0.0
    %v1248 = vand.u32 %v86, 4294901760
    %v1249 = vsub.f32 %v86, %v1248
    %v1250 = vand.u32 %v1249, 4294901760
    %v1251 = vsub.f32 %v1249, %v1250
    %v1252 = vand.u32 %v1251, 4294901760
    %1253 = vmatpush1.msra.mxu0 %v1252
    %1254 = vmatprep.subr.mxu0 0.0
    %v1255 = vand.u32 %v87, 4294901760
    %v1256 = vsub.f32 %v87, %v1255
    %v1257 = vand.u32 %v1256, 4294901760
    %v1258 = vsub.f32 %v1256, %v1257
    %v1259 = vand.u32 %v1258, 4294901760
    %1260 = vmatpush1.msra.mxu0 %v1259
    %1261 = vmatprep.subr.mxu0 0.0
    %v1262 = vand.u32 %v88, 4294901760
    %v1263 = vsub.f32 %v88, %v1262
    %v1264 = vand.u32 %v1263, 4294901760
    %v1265 = vsub.f32 %v1263, %v1264
    %v1266 = vand.u32 %v1265, 4294901760
    %1267 = vmatpush1.msra.mxu0 %v1266
    %1268 = vmatprep.subr.mxu0 0.0
    %v1269 = vand.u32 %v89, 4294901760
    %v1270 = vsub.f32 %v89, %v1269
    %v1271 = vand.u32 %v1270, 4294901760
    %v1272 = vsub.f32 %v1270, %v1271
    %v1273 = vand.u32 %v1272, 4294901760
    %1274 = vmatpush1.msra.mxu0 %v1273
    %1275 = vmatprep.subr.mxu0 0.0
    %v1276 = vand.u32 %v90, 4294901760
    %v1277 = vsub.f32 %v90, %v1276
    %v1278 = vand.u32 %v1277, 4294901760
    %v1279 = vsub.f32 %v1277, %v1278
    %v1280 = vand.u32 %v1279, 4294901760
    %1281 = vmatpush1.msra.mxu0 %v1280
    %1282 = vmatprep.subr.mxu0 0.0
    %v1283 = vand.u32 %v91, 4294901760
    %v1284 = vsub.f32 %v91, %v1283
    %v1285 = vand.u32 %v1284, 4294901760
    %v1286 = vsub.f32 %v1284, %v1285
    %v1287 = vand.u32 %v1286, 4294901760
    %1288 = vmatpush1.msra.mxu0 %v1287
    %1289 = vmatprep.subr.mxu0 0.0
    %v1290 = vand.u32 %v92, 4294901760
    %v1291 = vsub.f32 %v92, %v1290
    %v1292 = vand.u32 %v1291, 4294901760
    %v1293 = vsub.f32 %v1291, %v1292
    %v1294 = vand.u32 %v1293, 4294901760
    %1295 = vmatpush1.msra.mxu0 %v1294
    %1296 = vmatprep.subr.mxu0 0.0
    %v1297 = vand.u32 %v93, 4294901760
    %v1298 = vsub.f32 %v93, %v1297
    %v1299 = vand.u32 %v1298, 4294901760
    %v1300 = vsub.f32 %v1298, %v1299
    %v1301 = vand.u32 %v1300, 4294901760
    %1302 = vmatpush1.msra.mxu0 %v1301
    %1303 = vmatprep.subr.mxu0 0.0
    %v1304 = vand.u32 %v94, 4294901760
    %v1305 = vsub.f32 %v94, %v1304
    %v1306 = vand.u32 %v1305, 4294901760
    %v1307 = vsub.f32 %v1305, %v1306
    %v1308 = vand.u32 %v1307, 4294901760
    %1309 = vmatpush1.msra.mxu0 %v1308
    %1310 = vmatprep.subr.mxu0 0.0
    %v1311 = vand.u32 %v95, 4294901760
    %v1312 = vsub.f32 %v95, %v1311
    %v1313 = vand.u32 %v1312, 4294901760
    %v1314 = vsub.f32 %v1312, %v1313
    %v1315 = vand.u32 %v1314, 4294901760
    %1316 = vmatpush1.msra.mxu0 %v1315
    %1317 = vmatprep.subr.mxu0 0.0
    %v1318 = vand.u32 %v96, 4294901760
    %v1319 = vsub.f32 %v96, %v1318
    %v1320 = vand.u32 %v1319, 4294901760
    %v1321 = vsub.f32 %v1319, %v1320
    %v1322 = vand.u32 %v1321, 4294901760
    %1323 = vmatpush1.msra.mxu0 %v1322
    %1324 = vmatprep.subr.mxu0 0.0
    %v1325 = vand.u32 %v97, 4294901760
    %v1326 = vsub.f32 %v97, %v1325
    %v1327 = vand.u32 %v1326, 4294901760
    %v1328 = vsub.f32 %v1326, %v1327
    %v1329 = vand.u32 %v1328, 4294901760
    %1330 = vmatpush1.msra.mxu0 %v1329
    %1331 = vmatprep.subr.mxu0 0.0
    %v1332 = vand.u32 %v98, 4294901760
    %v1333 = vsub.f32 %v98, %v1332
    %v1334 = vand.u32 %v1333, 4294901760
    %v1335 = vsub.f32 %v1333, %v1334
    %v1336 = vand.u32 %v1335, 4294901760
    %1337 = vmatpush1.msra.mxu0 %v1336
    %1338 = vmatprep.subr.mxu0 0.0
    %v1339 = vand.u32 %v99, 4294901760
    %v1340 = vsub.f32 %v99, %v1339
    %v1341 = vand.u32 %v1340, 4294901760
    %v1342 = vsub.f32 %v1340, %v1341
    %v1343 = vand.u32 %v1342, 4294901760
    %1344 = vmatpush1.msra.mxu0 %v1343
    %1345 = vmatprep.subr.mxu0 0.0
    %v1346 = vand.u32 %v100, 4294901760
    %v1347 = vsub.f32 %v100, %v1346
    %v1348 = vand.u32 %v1347, 4294901760
    %v1349 = vsub.f32 %v1347, %v1348
    %v1350 = vand.u32 %v1349, 4294901760
    %1351 = vmatpush1.msra.mxu0 %v1350
    %1352 = vmatprep.subr.mxu0 0.0
    %v1353 = vand.u32 %v101, 4294901760
    %v1354 = vsub.f32 %v101, %v1353
    %v1355 = vand.u32 %v1354, 4294901760
    %v1356 = vsub.f32 %v1354, %v1355
    %v1357 = vand.u32 %v1356, 4294901760
    %1358 = vmatpush1.msra.mxu0 %v1357
    %1359 = vmatprep.subr.mxu0 0.0
    %v1360 = vand.u32 %v102, 4294901760
    %v1361 = vsub.f32 %v102, %v1360
    %v1362 = vand.u32 %v1361, 4294901760
    %v1363 = vsub.f32 %v1361, %v1362
    %v1364 = vand.u32 %v1363, 4294901760
    %1365 = vmatpush1.msra.mxu0 %v1364
    %1366 = vmatprep.subr.mxu0 0.0
    %v1367 = vand.u32 %v103, 4294901760
    %v1368 = vsub.f32 %v103, %v1367
    %v1369 = vand.u32 %v1368, 4294901760
    %v1370 = vsub.f32 %v1368, %v1369
    %v1371 = vand.u32 %v1370, 4294901760
    %1372 = vmatpush1.msra.mxu0 %v1371
    %1373 = vmatprep.subr.mxu0 0.0
    %v1374 = vand.u32 %v104, 4294901760
    %v1375 = vsub.f32 %v104, %v1374
    %v1376 = vand.u32 %v1375, 4294901760
    %v1377 = vsub.f32 %v1375, %v1376
    %v1378 = vand.u32 %v1377, 4294901760
    %1379 = vmatpush1.msra.mxu0 %v1378
    %1380 = vmatprep.subr.mxu0 0.0
    %v1381 = vand.u32 %v105, 4294901760
    %v1382 = vsub.f32 %v105, %v1381
    %v1383 = vand.u32 %v1382, 4294901760
    %v1384 = vsub.f32 %v1382, %v1383
    %v1385 = vand.u32 %v1384, 4294901760
    %1386 = vmatpush1.msra.mxu0 %v1385
    %1387 = vmatprep.subr.mxu0 0.0
    %v1388 = vand.u32 %v106, 4294901760
    %v1389 = vsub.f32 %v106, %v1388
    %v1390 = vand.u32 %v1389, 4294901760
    %v1391 = vsub.f32 %v1389, %v1390
    %v1392 = vand.u32 %v1391, 4294901760
    %1393 = vmatpush1.msra.mxu0 %v1392
    %1394 = vmatprep.subr.mxu0 0.0
    %v1395 = vand.u32 %v107, 4294901760
    %v1396 = vsub.f32 %v107, %v1395
    %v1397 = vand.u32 %v1396, 4294901760
    %v1398 = vsub.f32 %v1396, %v1397
    %v1399 = vand.u32 %v1398, 4294901760
    %1400 = vmatpush1.msra.mxu0 %v1399
    %1401 = vmatprep.subr.mxu0 0.0
    %v1402 = vand.u32 %v108, 4294901760
    %v1403 = vsub.f32 %v108, %v1402
    %v1404 = vand.u32 %v1403, 4294901760
    %v1405 = vsub.f32 %v1403, %v1404
    %v1406 = vand.u32 %v1405, 4294901760
    %1407 = vmatpush1.msra.mxu0 %v1406
    %1408 = vmatprep.subr.mxu0 0.0
    %v1409 = vand.u32 %v109, 4294901760
    %v1410 = vsub.f32 %v109, %v1409
    %v1411 = vand.u32 %v1410, 4294901760
    %v1412 = vsub.f32 %v1410, %v1411
    %v1413 = vand.u32 %v1412, 4294901760
    %1414 = vmatpush1.msra.mxu0 %v1413
    %1415 = vmatprep.subr.mxu0 0.0
    %v1416 = vand.u32 %v110, 4294901760
    %v1417 = vsub.f32 %v110, %v1416
    %v1418 = vand.u32 %v1417, 4294901760
    %v1419 = vsub.f32 %v1417, %v1418
    %v1420 = vand.u32 %v1419, 4294901760
    %1421 = vmatpush1.msra.mxu0 %v1420
    %v1422 = vand.u32 %v215, 4294901760
    %1423 = vmatprep.mubr.f32.mxu0 %v1422
    %v1424 = vand.u32 %v43, 4294901760
    %1425 = vmatmul.mubr.f32.gmra.mrb[0].mxu0 %v1424
    %v1426 = vpop.f32.mrb[0].mxu0
    %v1427 = vadd.f32 %v1195, %v1426
    %v1428 = vpop.f32.mrb[0].mxu0
    %1429 = vdwg.mxu0
    %1430 = vmatprep.subr.mxu0 0.0
    %v1431 = vand.u32 %v79, 4294901760
    %v1432 = vsub.f32 %v79, %v1431
    %1433 = vmatpush1.msra.mxu0 %v1432
    %1434 = vmatprep.subr.mxu0 0.0
    %v1435 = vand.u32 %v80, 4294901760
    %v1436 = vsub.f32 %v80, %v1435
    %1437 = vmatpush1.msra.mxu0 %v1436
    %1438 = vmatprep.subr.mxu0 0.0
    %v1439 = vand.u32 %v81, 4294901760
    %v1440 = vsub.f32 %v81, %v1439
    %1441 = vmatpush1.msra.mxu0 %v1440
    %1442 = vmatprep.subr.mxu0 0.0
    %v1443 = vand.u32 %v82, 4294901760
    %v1444 = vsub.f32 %v82, %v1443
    %1445 = vmatpush1.msra.mxu0 %v1444
    %1446 = vmatprep.subr.mxu0 0.0
    %v1447 = vand.u32 %v83, 4294901760
    %v1448 = vsub.f32 %v83, %v1447
    %1449 = vmatpush1.msra.mxu0 %v1448
    %1450 = vmatprep.subr.mxu0 0.0
    %v1451 = vand.u32 %v84, 4294901760
    %v1452 = vsub.f32 %v84, %v1451
    %1453 = vmatpush1.msra.mxu0 %v1452
    %1454 = vmatprep.subr.mxu0 0.0
    %v1455 = vand.u32 %v85, 4294901760
    %v1456 = vsub.f32 %v85, %v1455
    %1457 = vmatpush1.msra.mxu0 %v1456
    %1458 = vmatprep.subr.mxu0 0.0
    %v1459 = vand.u32 %v86, 4294901760
    %v1460 = vsub.f32 %v86, %v1459
    %1461 = vmatpush1.msra.mxu0 %v1460
    %1462 = vmatprep.subr.mxu0 0.0
    %v1463 = vand.u32 %v87, 4294901760
    %v1464 = vsub.f32 %v87, %v1463
    %1465 = vmatpush1.msra.mxu0 %v1464
    %1466 = vmatprep.subr.mxu0 0.0
    %v1467 = vand.u32 %v88, 4294901760
    %v1468 = vsub.f32 %v88, %v1467
    %1469 = vmatpush1.msra.mxu0 %v1468
    %1470 = vmatprep.subr.mxu0 0.0
    %v1471 = vand.u32 %v89, 4294901760
    %v1472 = vsub.f32 %v89, %v1471
    %1473 = vmatpush1.msra.mxu0 %v1472
    %1474 = vmatprep.subr.mxu0 0.0
    %v1475 = vand.u32 %v90, 4294901760
    %v1476 = vsub.f32 %v90, %v1475
    %1477 = vmatpush1.msra.mxu0 %v1476
    %1478 = vmatprep.subr.mxu0 0.0
    %v1479 = vand.u32 %v91, 4294901760
    %v1480 = vsub.f32 %v91, %v1479
    %1481 = vmatpush1.msra.mxu0 %v1480
    %1482 = vmatprep.subr.mxu0 0.0
    %v1483 = vand.u32 %v92, 4294901760
    %v1484 = vsub.f32 %v92, %v1483
    %1485 = vmatpush1.msra.mxu0 %v1484
    %1486 = vmatprep.subr.mxu0 0.0
    %v1487 = vand.u32 %v93, 4294901760
    %v1488 = vsub.f32 %v93, %v1487
    %1489 = vmatpush1.msra.mxu0 %v1488
    %1490 = vmatprep.subr.mxu0 0.0
    %v1491 = vand.u32 %v94, 4294901760
    %v1492 = vsub.f32 %v94, %v1491
    %1493 = vmatpush1.msra.mxu0 %v1492
    %1494 = vmatprep.subr.mxu0 0.0
    %v1495 = vand.u32 %v95, 4294901760
    %v1496 = vsub.f32 %v95, %v1495
    %1497 = vmatpush1.msra.mxu0 %v1496
    %1498 = vmatprep.subr.mxu0 0.0
    %v1499 = vand.u32 %v96, 4294901760
    %v1500 = vsub.f32 %v96, %v1499
    %1501 = vmatpush1.msra.mxu0 %v1500
    %1502 = vmatprep.subr.mxu0 0.0
    %v1503 = vand.u32 %v97, 4294901760
    %v1504 = vsub.f32 %v97, %v1503
    %1505 = vmatpush1.msra.mxu0 %v1504
    %1506 = vmatprep.subr.mxu0 0.0
    %v1507 = vand.u32 %v98, 4294901760
    %v1508 = vsub.f32 %v98, %v1507
    %1509 = vmatpush1.msra.mxu0 %v1508
    %1510 = vmatprep.subr.mxu0 0.0
    %v1511 = vand.u32 %v99, 4294901760
    %v1512 = vsub.f32 %v99, %v1511
    %1513 = vmatpush1.msra.mxu0 %v1512
    %1514 = vmatprep.subr.mxu0 0.0
    %v1515 = vand.u32 %v100, 4294901760
    %v1516 = vsub.f32 %v100, %v1515
    %1517 = vmatpush1.msra.mxu0 %v1516
    %1518 = vmatprep.subr.mxu0 0.0
    %v1519 = vand.u32 %v101, 4294901760
    %v1520 = vsub.f32 %v101, %v1519
    %1521 = vmatpush1.msra.mxu0 %v1520
    %1522 = vmatprep.subr.mxu0 0.0
    %v1523 = vand.u32 %v102, 4294901760
    %v1524 = vsub.f32 %v102, %v1523
    %1525 = vmatpush1.msra.mxu0 %v1524
    %1526 = vmatprep.subr.mxu0 0.0
    %v1527 = vand.u32 %v103, 4294901760
    %v1528 = vsub.f32 %v103, %v1527
    %1529 = vmatpush1.msra.mxu0 %v1528
    %1530 = vmatprep.subr.mxu0 0.0
    %v1531 = vand.u32 %v104, 4294901760
    %v1532 = vsub.f32 %v104, %v1531
    %1533 = vmatpush1.msra.mxu0 %v1532
    %1534 = vmatprep.subr.mxu0 0.0
    %v1535 = vand.u32 %v105, 4294901760
    %v1536 = vsub.f32 %v105, %v1535
    %1537 = vmatpush1.msra.mxu0 %v1536
    %1538 = vmatprep.subr.mxu0 0.0
    %v1539 = vand.u32 %v106, 4294901760
    %v1540 = vsub.f32 %v106, %v1539
    %1541 = vmatpush1.msra.mxu0 %v1540
    %1542 = vmatprep.subr.mxu0 0.0
    %v1543 = vand.u32 %v107, 4294901760
    %v1544 = vsub.f32 %v107, %v1543
    %1545 = vmatpush1.msra.mxu0 %v1544
    %1546 = vmatprep.subr.mxu0 0.0
    %v1547 = vand.u32 %v108, 4294901760
    %v1548 = vsub.f32 %v108, %v1547
    %1549 = vmatpush1.msra.mxu0 %v1548
    %1550 = vmatprep.subr.mxu0 0.0
    %v1551 = vand.u32 %v109, 4294901760
    %v1552 = vsub.f32 %v109, %v1551
    %1553 = vmatpush1.msra.mxu0 %v1552
    %1554 = vmatprep.subr.mxu0 0.0
    %v1555 = vand.u32 %v110, 4294901760
    %v1556 = vsub.f32 %v110, %v1555
    %1557 = vmatpush1.msra.mxu0 %v1556
    %v1558 = vand.u32 %v215, 4294901760
    %v1559 = vsub.f32 %v215, %v1558
    %1560 = vmatprep.mubr.f32.mxu0 %v1559
    %v1561 = vand.u32 %v43, 4294901760
    %v1562 = vsub.f32 %v43, %v1561
    %1563 = vmatmul.mubr.f32.gmra.mrb[0].mxu0 %v1562
    %v1564 = vpop.f32.mrb[0].mxu0
    %v1565 = vadd.f32 %v1427, %v1564
    %v1566 = vpop.f32.mrb[0].mxu0
    %1567 = vdwg.mxu0
    %1568 = vmatprep.subr.mxu0 0.0
    %v1569 = vand.u32 %v79, 4294901760
    %1570 = vmatpush1.msra.mxu0 %v1569
    %1571 = vmatprep.subr.mxu0 0.0
    %v1572 = vand.u32 %v80, 4294901760
    %1573 = vmatpush1.msra.mxu0 %v1572
    %1574 = vmatprep.subr.mxu0 0.0
    %v1575 = vand.u32 %v81, 4294901760
    %1576 = vmatpush1.msra.mxu0 %v1575
    %1577 = vmatprep.subr.mxu0 0.0
    %v1578 = vand.u32 %v82, 4294901760
    %1579 = vmatpush1.msra.mxu0 %v1578
    %1580 = vmatprep.subr.mxu0 0.0
    %v1581 = vand.u32 %v83, 4294901760
    %1582 = vmatpush1.msra.mxu0 %v1581
    %1583 = vmatprep.subr.mxu0 0.0
    %v1584 = vand.u32 %v84, 4294901760
    %1585 = vmatpush1.msra.mxu0 %v1584
    %1586 = vmatprep.subr.mxu0 0.0
    %v1587 = vand.u32 %v85, 4294901760
    %1588 = vmatpush1.msra.mxu0 %v1587
    %1589 = vmatprep.subr.mxu0 0.0
    %v1590 = vand.u32 %v86, 4294901760
    %1591 = vmatpush1.msra.mxu0 %v1590
    %1592 = vmatprep.subr.mxu0 0.0
    %v1593 = vand.u32 %v87, 4294901760
    %1594 = vmatpush1.msra.mxu0 %v1593
    %1595 = vmatprep.subr.mxu0 0.0
    %v1596 = vand.u32 %v88, 4294901760
    %1597 = vmatpush1.msra.mxu0 %v1596
    %1598 = vmatprep.subr.mxu0 0.0
    %v1599 = vand.u32 %v89, 4294901760
    %1600 = vmatpush1.msra.mxu0 %v1599
    %1601 = vmatprep.subr.mxu0 0.0
    %v1602 = vand.u32 %v90, 4294901760
    %1603 = vmatpush1.msra.mxu0 %v1602
    %1604 = vmatprep.subr.mxu0 0.0
    %v1605 = vand.u32 %v91, 4294901760
    %1606 = vmatpush1.msra.mxu0 %v1605
    %1607 = vmatprep.subr.mxu0 0.0
    %v1608 = vand.u32 %v92, 4294901760
    %1609 = vmatpush1.msra.mxu0 %v1608
    %1610 = vmatprep.subr.mxu0 0.0
    %v1611 = vand.u32 %v93, 4294901760
    %1612 = vmatpush1.msra.mxu0 %v1611
    %1613 = vmatprep.subr.mxu0 0.0
    %v1614 = vand.u32 %v94, 4294901760
    %1615 = vmatpush1.msra.mxu0 %v1614
    %1616 = vmatprep.subr.mxu0 0.0
    %v1617 = vand.u32 %v95, 4294901760
    %1618 = vmatpush1.msra.mxu0 %v1617
    %1619 = vmatprep.subr.mxu0 0.0
    %v1620 = vand.u32 %v96, 4294901760
    %1621 = vmatpush1.msra.mxu0 %v1620
    %1622 = vmatprep.subr.mxu0 0.0
    %v1623 = vand.u32 %v97, 4294901760
    %1624 = vmatpush1.msra.mxu0 %v1623
    %1625 = vmatprep.subr.mxu0 0.0
    %v1626 = vand.u32 %v98, 4294901760
    %1627 = vmatpush1.msra.mxu0 %v1626
    %1628 = vmatprep.subr.mxu0 0.0
    %v1629 = vand.u32 %v99, 4294901760
    %1630 = vmatpush1.msra.mxu0 %v1629
    %1631 = vmatprep.subr.mxu0 0.0
    %v1632 = vand.u32 %v100, 4294901760
    %1633 = vmatpush1.msra.mxu0 %v1632
    %1634 = vmatprep.subr.mxu0 0.0
    %v1635 = vand.u32 %v101, 4294901760
    %1636 = vmatpush1.msra.mxu0 %v1635
    %1637 = vmatprep.subr.mxu0 0.0
    %v1638 = vand.u32 %v102, 4294901760
    %1639 = vmatpush1.msra.mxu0 %v1638
    %1640 = vmatprep.subr.mxu0 0.0
    %v1641 = vand.u32 %v103, 4294901760
    %1642 = vmatpush1.msra.mxu0 %v1641
    %1643 = vmatprep.subr.mxu0 0.0
    %v1644 = vand.u32 %v104, 4294901760
    %1645 = vmatpush1.msra.mxu0 %v1644
    %1646 = vmatprep.subr.mxu0 0.0
    %v1647 = vand.u32 %v105, 4294901760
    %1648 = vmatpush1.msra.mxu0 %v1647
    %1649 = vmatprep.subr.mxu0 0.0
    %v1650 = vand.u32 %v106, 4294901760
    %1651 = vmatpush1.msra.mxu0 %v1650
    %1652 = vmatprep.subr.mxu0 0.0
    %v1653 = vand.u32 %v107, 4294901760
    %1654 = vmatpush1.msra.mxu0 %v1653
    %1655 = vmatprep.subr.mxu0 0.0
    %v1656 = vand.u32 %v108, 4294901760
    %1657 = vmatpush1.msra.mxu0 %v1656
    %1658 = vmatprep.subr.mxu0 0.0
    %v1659 = vand.u32 %v109, 4294901760
    %1660 = vmatpush1.msra.mxu0 %v1659
    %1661 = vmatprep.subr.mxu0 0.0
    %v1662 = vand.u32 %v110, 4294901760
    %1663 = vmatpush1.msra.mxu0 %v1662
    %v1664 = vand.u32 %v215, 4294901760
    %v1665 = vsub.f32 %v215, %v1664
    %v1666 = vand.u32 %v1665, 4294901760
    %1667 = vmatprep.mubr.f32.mxu0 %v1666
    %v1668 = vand.u32 %v43, 4294901760
    %v1669 = vsub.f32 %v43, %v1668
    %v1670 = vand.u32 %v1669, 4294901760
    %1671 = vmatmul.mubr.f32.gmra.mrb[0].mxu0 %v1670
    %v1672 = vpop.f32.mrb[0].mxu0
    %v1673 = vadd.f32 %v1565, %v1672
    %v1674 = vpop.f32.mrb[0].mxu0
    %1675 = vdwg.mxu0
    %1676 = vmatprep.subr.mxu0 0.0
    %v1677 = vand.u32 %v79, 4294901760
    %v1678 = vsub.f32 %v79, %v1677
    %v1679 = vand.u32 %v1678, 4294901760
    %1680 = vmatpush1.msra.mxu0 %v1679
    %1681 = vmatprep.subr.mxu0 0.0
    %v1682 = vand.u32 %v80, 4294901760
    %v1683 = vsub.f32 %v80, %v1682
    %v1684 = vand.u32 %v1683, 4294901760
    %1685 = vmatpush1.msra.mxu0 %v1684
    %1686 = vmatprep.subr.mxu0 0.0
    %v1687 = vand.u32 %v81, 4294901760
    %v1688 = vsub.f32 %v81, %v1687
    %v1689 = vand.u32 %v1688, 4294901760
    %1690 = vmatpush1.msra.mxu0 %v1689
    %1691 = vmatprep.subr.mxu0 0.0
    %v1692 = vand.u32 %v82, 4294901760
    %v1693 = vsub.f32 %v82, %v1692
    %v1694 = vand.u32 %v1693, 4294901760
    %1695 = vmatpush1.msra.mxu0 %v1694
    %1696 = vmatprep.subr.mxu0 0.0
    %v1697 = vand.u32 %v83, 4294901760
    %v1698 = vsub.f32 %v83, %v1697
    %v1699 = vand.u32 %v1698, 4294901760
    %1700 = vmatpush1.msra.mxu0 %v1699
    %1701 = vmatprep.subr.mxu0 0.0
    %v1702 = vand.u32 %v84, 4294901760
    %v1703 = vsub.f32 %v84, %v1702
    %v1704 = vand.u32 %v1703, 4294901760
    %1705 = vmatpush1.msra.mxu0 %v1704
    %1706 = vmatprep.subr.mxu0 0.0
    %v1707 = vand.u32 %v85, 4294901760
    %v1708 = vsub.f32 %v85, %v1707
    %v1709 = vand.u32 %v1708, 4294901760
    %1710 = vmatpush1.msra.mxu0 %v1709
    %1711 = vmatprep.subr.mxu0 0.0
    %v1712 = vand.u32 %v86, 4294901760
    %v1713 = vsub.f32 %v86, %v1712
    %v1714 = vand.u32 %v1713, 4294901760
    %1715 = vmatpush1.msra.mxu0 %v1714
    %1716 = vmatprep.subr.mxu0 0.0
    %v1717 = vand.u32 %v87, 4294901760
    %v1718 = vsub.f32 %v87, %v1717
    %v1719 = vand.u32 %v1718, 4294901760
    %1720 = vmatpush1.msra.mxu0 %v1719
    %1721 = vmatprep.subr.mxu0 0.0
    %v1722 = vand.u32 %v88, 4294901760
    %v1723 = vsub.f32 %v88, %v1722
    %v1724 = vand.u32 %v1723, 4294901760
    %1725 = vmatpush1.msra.mxu0 %v1724
    %1726 = vmatprep.subr.mxu0 0.0
    %v1727 = vand.u32 %v89, 4294901760
    %v1728 = vsub.f32 %v89, %v1727
    %v1729 = vand.u32 %v1728, 4294901760
    %1730 = vmatpush1.msra.mxu0 %v1729
    %1731 = vmatprep.subr.mxu0 0.0
    %v1732 = vand.u32 %v90, 4294901760
    %v1733 = vsub.f32 %v90, %v1732
    %v1734 = vand.u32 %v1733, 4294901760
    %1735 = vmatpush1.msra.mxu0 %v1734
    %1736 = vmatprep.subr.mxu0 0.0
    %v1737 = vand.u32 %v91, 4294901760
    %v1738 = vsub.f32 %v91, %v1737
    %v1739 = vand.u32 %v1738, 4294901760
    %1740 = vmatpush1.msra.mxu0 %v1739
    %1741 = vmatprep.subr.mxu0 0.0
    %v1742 = vand.u32 %v92, 4294901760
    %v1743 = vsub.f32 %v92, %v1742
    %v1744 = vand.u32 %v1743, 4294901760
    %1745 = vmatpush1.msra.mxu0 %v1744
    %1746 = vmatprep.subr.mxu0 0.0
    %v1747 = vand.u32 %v93, 4294901760
    %v1748 = vsub.f32 %v93, %v1747
    %v1749 = vand.u32 %v1748, 4294901760
    %1750 = vmatpush1.msra.mxu0 %v1749
    %1751 = vmatprep.subr.mxu0 0.0
    %v1752 = vand.u32 %v94, 4294901760
    %v1753 = vsub.f32 %v94, %v1752
    %v1754 = vand.u32 %v1753, 4294901760
    %1755 = vmatpush1.msra.mxu0 %v1754
    %1756 = vmatprep.subr.mxu0 0.0
    %v1757 = vand.u32 %v95, 4294901760
    %v1758 = vsub.f32 %v95, %v1757
    %v1759 = vand.u32 %v1758, 4294901760
    %1760 = vmatpush1.msra.mxu0 %v1759
    %1761 = vmatprep.subr.mxu0 0.0
    %v1762 = vand.u32 %v96, 4294901760
    %v1763 = vsub.f32 %v96, %v1762
    %v1764 = vand.u32 %v1763, 4294901760
    %1765 = vmatpush1.msra.mxu0 %v1764
    %1766 = vmatprep.subr.mxu0 0.0
    %v1767 = vand.u32 %v97, 4294901760
    %v1768 = vsub.f32 %v97, %v1767
    %v1769 = vand.u32 %v1768, 4294901760
    %1770 = vmatpush1.msra.mxu0 %v1769
    %1771 = vmatprep.subr.mxu0 0.0
    %v1772 = vand.u32 %v98, 4294901760
    %v1773 = vsub.f32 %v98, %v1772
    %v1774 = vand.u32 %v1773, 4294901760
    %1775 = vmatpush1.msra.mxu0 %v1774
    %1776 = vmatprep.subr.mxu0 0.0
    %v1777 = vand.u32 %v99, 4294901760
    %v1778 = vsub.f32 %v99, %v1777
    %v1779 = vand.u32 %v1778, 4294901760
    %1780 = vmatpush1.msra.mxu0 %v1779
    %1781 = vmatprep.subr.mxu0 0.0
    %v1782 = vand.u32 %v100, 4294901760
    %v1783 = vsub.f32 %v100, %v1782
    %v1784 = vand.u32 %v1783, 4294901760
    %1785 = vmatpush1.msra.mxu0 %v1784
    %1786 = vmatprep.subr.mxu0 0.0
    %v1787 = vand.u32 %v101, 4294901760
    %v1788 = vsub.f32 %v101, %v1787
    %v1789 = vand.u32 %v1788, 4294901760
    %1790 = vmatpush1.msra.mxu0 %v1789
    %1791 = vmatprep.subr.mxu0 0.0
    %v1792 = vand.u32 %v102, 4294901760
    %v1793 = vsub.f32 %v102, %v1792
    %v1794 = vand.u32 %v1793, 4294901760
    %1795 = vmatpush1.msra.mxu0 %v1794
    %1796 = vmatprep.subr.mxu0 0.0
    %v1797 = vand.u32 %v103, 4294901760
    %v1798 = vsub.f32 %v103, %v1797
    %v1799 = vand.u32 %v1798, 4294901760
    %1800 = vmatpush1.msra.mxu0 %v1799
    %1801 = vmatprep.subr.mxu0 0.0
    %v1802 = vand.u32 %v104, 4294901760
    %v1803 = vsub.f32 %v104, %v1802
    %v1804 = vand.u32 %v1803, 4294901760
    %1805 = vmatpush1.msra.mxu0 %v1804
    %1806 = vmatprep.subr.mxu0 0.0
    %v1807 = vand.u32 %v105, 4294901760
    %v1808 = vsub.f32 %v105, %v1807
    %v1809 = vand.u32 %v1808, 4294901760
    %1810 = vmatpush1.msra.mxu0 %v1809
    %1811 = vmatprep.subr.mxu0 0.0
    %v1812 = vand.u32 %v106, 4294901760
    %v1813 = vsub.f32 %v106, %v1812
    %v1814 = vand.u32 %v1813, 4294901760
    %1815 = vmatpush1.msra.mxu0 %v1814
    %1816 = vmatprep.subr.mxu0 0.0
    %v1817 = vand.u32 %v107, 4294901760
    %v1818 = vsub.f32 %v107, %v1817
    %v1819 = vand.u32 %v1818, 4294901760
    %1820 = vmatpush1.msra.mxu0 %v1819
    %1821 = vmatprep.subr.mxu0 0.0
    %v1822 = vand.u32 %v108, 4294901760
    %v1823 = vsub.f32 %v108, %v1822
    %v1824 = vand.u32 %v1823, 4294901760
    %1825 = vmatpush1.msra.mxu0 %v1824
    %1826 = vmatprep.subr.mxu0 0.0
    %v1827 = vand.u32 %v109, 4294901760
    %v1828 = vsub.f32 %v109, %v1827
    %v1829 = vand.u32 %v1828, 4294901760
    %1830 = vmatpush1.msra.mxu0 %v1829
    %1831 = vmatprep.subr.mxu0 0.0
    %v1832 = vand.u32 %v110, 4294901760
    %v1833 = vsub.f32 %v110, %v1832
    %v1834 = vand.u32 %v1833, 4294901760
    %1835 = vmatpush1.msra.mxu0 %v1834
    %v1836 = vand.u32 %v215, 4294901760
    %1837 = vmatprep.mubr.f32.mxu0 %v1836
    %v1838 = vand.u32 %v43, 4294901760
    %1839 = vmatmul.mubr.f32.gmra.mrb[0].mxu0 %v1838
    %v1840 = vpop.f32.mrb[0].mxu0
    %v1841 = vadd.f32 %v1673, %v1840
    %v1842 = vpop.f32.mrb[0].mxu0
    %1843 = vdwg.mxu0
    %1844 = vmatprep.subr.mxu0 0.0
    %v1845 = vand.u32 %v79, 4294901760
    %1846 = vmatpush1.msra.mxu0 %v1845
    %1847 = vmatprep.subr.mxu0 0.0
    %v1848 = vand.u32 %v80, 4294901760
    %1849 = vmatpush1.msra.mxu0 %v1848
    %1850 = vmatprep.subr.mxu0 0.0
    %v1851 = vand.u32 %v81, 4294901760
    %1852 = vmatpush1.msra.mxu0 %v1851
    %1853 = vmatprep.subr.mxu0 0.0
    %v1854 = vand.u32 %v82, 4294901760
    %1855 = vmatpush1.msra.mxu0 %v1854
    %1856 = vmatprep.subr.mxu0 0.0
    %v1857 = vand.u32 %v83, 4294901760
    %1858 = vmatpush1.msra.mxu0 %v1857
    %1859 = vmatprep.subr.mxu0 0.0
    %v1860 = vand.u32 %v84, 4294901760
    %1861 = vmatpush1.msra.mxu0 %v1860
    %1862 = vmatprep.subr.mxu0 0.0
    %v1863 = vand.u32 %v85, 4294901760
    %1864 = vmatpush1.msra.mxu0 %v1863
    %1865 = vmatprep.subr.mxu0 0.0
    %v1866 = vand.u32 %v86, 4294901760
    %1867 = vmatpush1.msra.mxu0 %v1866
    %1868 = vmatprep.subr.mxu0 0.0
    %v1869 = vand.u32 %v87, 4294901760
    %1870 = vmatpush1.msra.mxu0 %v1869
    %1871 = vmatprep.subr.mxu0 0.0
    %v1872 = vand.u32 %v88, 4294901760
    %1873 = vmatpush1.msra.mxu0 %v1872
    %1874 = vmatprep.subr.mxu0 0.0
    %v1875 = vand.u32 %v89, 4294901760
    %1876 = vmatpush1.msra.mxu0 %v1875
    %1877 = vmatprep.subr.mxu0 0.0
    %v1878 = vand.u32 %v90, 4294901760
    %1879 = vmatpush1.msra.mxu0 %v1878
    %1880 = vmatprep.subr.mxu0 0.0
    %v1881 = vand.u32 %v91, 4294901760
    %1882 = vmatpush1.msra.mxu0 %v1881
    %1883 = vmatprep.subr.mxu0 0.0
    %v1884 = vand.u32 %v92, 4294901760
    %1885 = vmatpush1.msra.mxu0 %v1884
    %1886 = vmatprep.subr.mxu0 0.0
    %v1887 = vand.u32 %v93, 4294901760
    %1888 = vmatpush1.msra.mxu0 %v1887
    %1889 = vmatprep.subr.mxu0 0.0
    %v1890 = vand.u32 %v94, 4294901760
    %1891 = vmatpush1.msra.mxu0 %v1890
    %1892 = vmatprep.subr.mxu0 0.0
    %v1893 = vand.u32 %v95, 4294901760
    %1894 = vmatpush1.msra.mxu0 %v1893
    %1895 = vmatprep.subr.mxu0 0.0
    %v1896 = vand.u32 %v96, 4294901760
    %1897 = vmatpush1.msra.mxu0 %v1896
    %1898 = vmatprep.subr.mxu0 0.0
    %v1899 = vand.u32 %v97, 4294901760
    %1900 = vmatpush1.msra.mxu0 %v1899
    %1901 = vmatprep.subr.mxu0 0.0
    %v1902 = vand.u32 %v98, 4294901760
    %1903 = vmatpush1.msra.mxu0 %v1902
    %1904 = vmatprep.subr.mxu0 0.0
    %v1905 = vand.u32 %v99, 4294901760
    %1906 = vmatpush1.msra.mxu0 %v1905
    %1907 = vmatprep.subr.mxu0 0.0
    %v1908 = vand.u32 %v100, 4294901760
    %1909 = vmatpush1.msra.mxu0 %v1908
    %1910 = vmatprep.subr.mxu0 0.0
    %v1911 = vand.u32 %v101, 4294901760
    %1912 = vmatpush1.msra.mxu0 %v1911
    %1913 = vmatprep.subr.mxu0 0.0
    %v1914 = vand.u32 %v102, 4294901760
    %1915 = vmatpush1.msra.mxu0 %v1914
    %1916 = vmatprep.subr.mxu0 0.0
    %v1917 = vand.u32 %v103, 4294901760
    %1918 = vmatpush1.msra.mxu0 %v1917
    %1919 = vmatprep.subr.mxu0 0.0
    %v1920 = vand.u32 %v104, 4294901760
    %1921 = vmatpush1.msra.mxu0 %v1920
    %1922 = vmatprep.subr.mxu0 0.0
    %v1923 = vand.u32 %v105, 4294901760
    %1924 = vmatpush1.msra.mxu0 %v1923
    %1925 = vmatprep.subr.mxu0 0.0
    %v1926 = vand.u32 %v106, 4294901760
    %1927 = vmatpush1.msra.mxu0 %v1926
    %1928 = vmatprep.subr.mxu0 0.0
    %v1929 = vand.u32 %v107, 4294901760
    %1930 = vmatpush1.msra.mxu0 %v1929
    %1931 = vmatprep.subr.mxu0 0.0
    %v1932 = vand.u32 %v108, 4294901760
    %1933 = vmatpush1.msra.mxu0 %v1932
    %1934 = vmatprep.subr.mxu0 0.0
    %v1935 = vand.u32 %v109, 4294901760
    %1936 = vmatpush1.msra.mxu0 %v1935
    %1937 = vmatprep.subr.mxu0 0.0
    %v1938 = vand.u32 %v110, 4294901760
    %1939 = vmatpush1.msra.mxu0 %v1938
    %v1940 = vand.u32 %v215, 4294901760
    %1941 = vmatprep.mubr.f32.mxu0 %v1940
    %v1942 = vand.u32 %v43, 4294901760
    %1943 = vmatmul.mubr.f32.gmra.mrb[0].mxu0 %v1942
    %v1944 = vpop.f32.mrb[0].mxu0
    %v1945 = vadd.f32 %v1841, %v1944
    %v1946 = vpop.f32.mrb[0].mxu0
    %1947 = vdwg.mxu0
    %1948 = vmatprep.subr.mxu0 0.0
    %v1949 = vand.u32 %v111, 4294901760
    %1950 = vmatpush1.msra.mxu0 %v1949
    %1951 = vmatprep.subr.mxu0 0.0
    %v1952 = vand.u32 %v112, 4294901760
    %1953 = vmatpush1.msra.mxu0 %v1952
    %1954 = vmatprep.subr.mxu0 0.0
    %v1955 = vand.u32 %v113, 4294901760
    %1956 = vmatpush1.msra.mxu0 %v1955
    %1957 = vmatprep.subr.mxu0 0.0
    %v1958 = vand.u32 %v114, 4294901760
    %1959 = vmatpush1.msra.mxu0 %v1958
    %1960 = vmatprep.subr.mxu0 0.0
    %v1961 = vand.u32 %v115, 4294901760
    %1962 = vmatpush1.msra.mxu0 %v1961
    %1963 = vmatprep.subr.mxu0 0.0
    %v1964 = vand.u32 %v116, 4294901760
    %1965 = vmatpush1.msra.mxu0 %v1964
    %1966 = vmatprep.subr.mxu0 0.0
    %v1967 = vand.u32 %v117, 4294901760
    %1968 = vmatpush1.msra.mxu0 %v1967
    %1969 = vmatprep.subr.mxu0 0.0
    %v1970 = vand.u32 %v118, 4294901760
    %1971 = vmatpush1.msra.mxu0 %v1970
    %1972 = vmatprep.subr.mxu0 0.0
    %v1973 = vand.u32 %v119, 4294901760
    %1974 = vmatpush1.msra.mxu0 %v1973
    %1975 = vmatprep.subr.mxu0 0.0
    %v1976 = vand.u32 %v120, 4294901760
    %1977 = vmatpush1.msra.mxu0 %v1976
    %1978 = vmatprep.subr.mxu0 0.0
    %v1979 = vand.u32 %v121, 4294901760
    %1980 = vmatpush1.msra.mxu0 %v1979
    %1981 = vmatprep.subr.mxu0 0.0
    %v1982 = vand.u32 %v122, 4294901760
    %1983 = vmatpush1.msra.mxu0 %v1982
    %1984 = vmatprep.subr.mxu0 0.0
    %v1985 = vand.u32 %v123, 4294901760
    %1986 = vmatpush1.msra.mxu0 %v1985
    %1987 = vmatprep.subr.mxu0 0.0
    %v1988 = vand.u32 %v124, 4294901760
    %1989 = vmatpush1.msra.mxu0 %v1988
    %1990 = vmatprep.subr.mxu0 0.0
    %v1991 = vand.u32 %v125, 4294901760
    %1992 = vmatpush1.msra.mxu0 %v1991
    %1993 = vmatprep.subr.mxu0 0.0
    %v1994 = vand.u32 %v126, 4294901760
    %1995 = vmatpush1.msra.mxu0 %v1994
    %1996 = vmatprep.subr.mxu0 0.0
    %v1997 = vand.u32 %v127, 4294901760
    %1998 = vmatpush1.msra.mxu0 %v1997
    %1999 = vmatprep.subr.mxu0 0.0
    %v2000 = vand.u32 %v128, 4294901760
    %2001 = vmatpush1.msra.mxu0 %v2000
    %2002 = vmatprep.subr.mxu0 0.0
    %v2003 = vand.u32 %v129, 4294901760
    %2004 = vmatpush1.msra.mxu0 %v2003
    %2005 = vmatprep.subr.mxu0 0.0
    %v2006 = vand.u32 %v130, 4294901760
    %2007 = vmatpush1.msra.mxu0 %v2006
    %2008 = vmatprep.subr.mxu0 0.0
    %v2009 = vand.u32 %v131, 4294901760
    %2010 = vmatpush1.msra.mxu0 %v2009
    %2011 = vmatprep.subr.mxu0 0.0
    %v2012 = vand.u32 %v132, 4294901760
    %2013 = vmatpush1.msra.mxu0 %v2012
    %2014 = vmatprep.subr.mxu0 0.0
    %v2015 = vand.u32 %v133, 4294901760
    %2016 = vmatpush1.msra.mxu0 %v2015
    %2017 = vmatprep.subr.mxu0 0.0
    %v2018 = vand.u32 %v134, 4294901760
    %2019 = vmatpush1.msra.mxu0 %v2018
    %2020 = vmatprep.subr.mxu0 0.0
    %v2021 = vand.u32 %v135, 4294901760
    %2022 = vmatpush1.msra.mxu0 %v2021
    %2023 = vmatprep.subr.mxu0 0.0
    %v2024 = vand.u32 %v136, 4294901760
    %2025 = vmatpush1.msra.mxu0 %v2024
    %2026 = vmatprep.subr.mxu0 0.0
    %v2027 = vand.u32 %v137, 4294901760
    %2028 = vmatpush1.msra.mxu0 %v2027
    %2029 = vmatprep.subr.mxu0 0.0
    %v2030 = vand.u32 %v138, 4294901760
    %2031 = vmatpush1.msra.mxu0 %v2030
    %2032 = vmatprep.subr.mxu0 0.0
    %v2033 = vand.u32 %v139, 4294901760
    %2034 = vmatpush1.msra.mxu0 %v2033
    %2035 = vmatprep.subr.mxu0 0.0
    %v2036 = vand.u32 %v140, 4294901760
    %2037 = vmatpush1.msra.mxu0 %v2036
    %2038 = vmatprep.subr.mxu0 0.0
    %v2039 = vand.u32 %v141, 4294901760
    %2040 = vmatpush1.msra.mxu0 %v2039
    %2041 = vmatprep.subr.mxu0 0.0
    %v2042 = vand.u32 %v142, 4294901760
    %2043 = vmatpush1.msra.mxu0 %v2042
    %v2044 = vand.u32 %v216, 4294901760
    %v2045 = vsub.f32 %v216, %v2044
    %v2046 = vand.u32 %v2045, 4294901760
    %v2047 = vsub.f32 %v2045, %v2046
    %v2048 = vand.u32 %v2047, 4294901760
    %2049 = vmatprep.mubr.f32.mxu0 %v2048
    %v2050 = vand.u32 %v44, 4294901760
    %v2051 = vsub.f32 %v44, %v2050
    %v2052 = vand.u32 %v2051, 4294901760
    %v2053 = vsub.f32 %v2051, %v2052
    %v2054 = vand.u32 %v2053, 4294901760
    %2055 = vmatmul.mubr.f32.gmra.mrb[0].mxu0 %v2054
    %v2056 = vpop.f32.mrb[0].mxu0
    %v2057 = vadd.f32 %v1945, %v2056
    %v2058 = vpop.f32.mrb[0].mxu0
    %2059 = vdwg.mxu0
    %2060 = vmatprep.subr.mxu0 0.0
    %v2061 = vand.u32 %v111, 4294901760
    %v2062 = vsub.f32 %v111, %v2061
    %v2063 = vand.u32 %v2062, 4294901760
    %v2064 = vsub.f32 %v2062, %v2063
    %v2065 = vand.u32 %v2064, 4294901760
    %2066 = vmatpush1.msra.mxu0 %v2065
    %2067 = vmatprep.subr.mxu0 0.0
    %v2068 = vand.u32 %v112, 4294901760
    %v2069 = vsub.f32 %v112, %v2068
    %v2070 = vand.u32 %v2069, 4294901760
    %v2071 = vsub.f32 %v2069, %v2070
    %v2072 = vand.u32 %v2071, 4294901760
    %2073 = vmatpush1.msra.mxu0 %v2072
    %2074 = vmatprep.subr.mxu0 0.0
    %v2075 = vand.u32 %v113, 4294901760
    %v2076 = vsub.f32 %v113, %v2075
    %v2077 = vand.u32 %v2076, 4294901760
    %v2078 = vsub.f32 %v2076, %v2077
    %v2079 = vand.u32 %v2078, 4294901760
    %2080 = vmatpush1.msra.mxu0 %v2079
    %2081 = vmatprep.subr.mxu0 0.0
    %v2082 = vand.u32 %v114, 4294901760
    %v2083 = vsub.f32 %v114, %v2082
    %v2084 = vand.u32 %v2083, 4294901760
    %v2085 = vsub.f32 %v2083, %v2084
    %v2086 = vand.u32 %v2085, 4294901760
    %2087 = vmatpush1.msra.mxu0 %v2086
    %2088 = vmatprep.subr.mxu0 0.0
    %v2089 = vand.u32 %v115, 4294901760
    %v2090 = vsub.f32 %v115, %v2089
    %v2091 = vand.u32 %v2090, 4294901760
    %v2092 = vsub.f32 %v2090, %v2091
    %v2093 = vand.u32 %v2092, 4294901760
    %2094 = vmatpush1.msra.mxu0 %v2093
    %2095 = vmatprep.subr.mxu0 0.0
    %v2096 = vand.u32 %v116, 4294901760
    %v2097 = vsub.f32 %v116, %v2096
    %v2098 = vand.u32 %v2097, 4294901760
    %v2099 = vsub.f32 %v2097, %v2098
    %v2100 = vand.u32 %v2099, 4294901760
    %2101 = vmatpush1.msra.mxu0 %v2100
    %2102 = vmatprep.subr.mxu0 0.0
    %v2103 = vand.u32 %v117, 4294901760
    %v2104 = vsub.f32 %v117, %v2103
    %v2105 = vand.u32 %v2104, 4294901760
    %v2106 = vsub.f32 %v2104, %v2105
    %v2107 = vand.u32 %v2106, 4294901760
    %2108 = vmatpush1.msra.mxu0 %v2107
    %2109 = vmatprep.subr.mxu0 0.0
    %v2110 = vand.u32 %v118, 4294901760
    %v2111 = vsub.f32 %v118, %v2110
    %v2112 = vand.u32 %v2111, 4294901760
    %v2113 = vsub.f32 %v2111, %v2112
    %v2114 = vand.u32 %v2113, 4294901760
    %2115 = vmatpush1.msra.mxu0 %v2114
    %2116 = vmatprep.subr.mxu0 0.0
    %v2117 = vand.u32 %v119, 4294901760
    %v2118 = vsub.f32 %v119, %v2117
    %v2119 = vand.u32 %v2118, 4294901760
    %v2120 = vsub.f32 %v2118, %v2119
    %v2121 = vand.u32 %v2120, 4294901760
    %2122 = vmatpush1.msra.mxu0 %v2121
    %2123 = vmatprep.subr.mxu0 0.0
    %v2124 = vand.u32 %v120, 4294901760
    %v2125 = vsub.f32 %v120, %v2124
    %v2126 = vand.u32 %v2125, 4294901760
    %v2127 = vsub.f32 %v2125, %v2126
    %v2128 = vand.u32 %v2127, 4294901760
    %2129 = vmatpush1.msra.mxu0 %v2128
    %2130 = vmatprep.subr.mxu0 0.0
    %v2131 = vand.u32 %v121, 4294901760
    %v2132 = vsub.f32 %v121, %v2131
    %v2133 = vand.u32 %v2132, 4294901760
    %v2134 = vsub.f32 %v2132, %v2133
    %v2135 = vand.u32 %v2134, 4294901760
    %2136 = vmatpush1.msra.mxu0 %v2135
    %2137 = vmatprep.subr.mxu0 0.0
    %v2138 = vand.u32 %v122, 4294901760
    %v2139 = vsub.f32 %v122, %v2138
    %v2140 = vand.u32 %v2139, 4294901760
    %v2141 = vsub.f32 %v2139, %v2140
    %v2142 = vand.u32 %v2141, 4294901760
    %2143 = vmatpush1.msra.mxu0 %v2142
    %2144 = vmatprep.subr.mxu0 0.0
    %v2145 = vand.u32 %v123, 4294901760
    %v2146 = vsub.f32 %v123, %v2145
    %v2147 = vand.u32 %v2146, 4294901760
    %v2148 = vsub.f32 %v2146, %v2147
    %v2149 = vand.u32 %v2148, 4294901760
    %2150 = vmatpush1.msra.mxu0 %v2149
    %2151 = vmatprep.subr.mxu0 0.0
    %v2152 = vand.u32 %v124, 4294901760
    %v2153 = vsub.f32 %v124, %v2152
    %v2154 = vand.u32 %v2153, 4294901760
    %v2155 = vsub.f32 %v2153, %v2154
    %v2156 = vand.u32 %v2155, 4294901760
    %2157 = vmatpush1.msra.mxu0 %v2156
    %2158 = vmatprep.subr.mxu0 0.0
    %v2159 = vand.u32 %v125, 4294901760
    %v2160 = vsub.f32 %v125, %v2159
    %v2161 = vand.u32 %v2160, 4294901760
    %v2162 = vsub.f32 %v2160, %v2161
    %v2163 = vand.u32 %v2162, 4294901760
    %2164 = vmatpush1.msra.mxu0 %v2163
    %2165 = vmatprep.subr.mxu0 0.0
    %v2166 = vand.u32 %v126, 4294901760
    %v2167 = vsub.f32 %v126, %v2166
    %v2168 = vand.u32 %v2167, 4294901760
    %v2169 = vsub.f32 %v2167, %v2168
    %v2170 = vand.u32 %v2169, 4294901760
    %2171 = vmatpush1.msra.mxu0 %v2170
    %2172 = vmatprep.subr.mxu0 0.0
    %v2173 = vand.u32 %v127, 4294901760
    %v2174 = vsub.f32 %v127, %v2173
    %v2175 = vand.u32 %v2174, 4294901760
    %v2176 = vsub.f32 %v2174, %v2175
    %v2177 = vand.u32 %v2176, 4294901760
    %2178 = vmatpush1.msra.mxu0 %v2177
    %2179 = vmatprep.subr.mxu0 0.0
    %v2180 = vand.u32 %v128, 4294901760
    %v2181 = vsub.f32 %v128, %v2180
    %v2182 = vand.u32 %v2181, 4294901760
    %v2183 = vsub.f32 %v2181, %v2182
    %v2184 = vand.u32 %v2183, 4294901760
    %2185 = vmatpush1.msra.mxu0 %v2184
    %2186 = vmatprep.subr.mxu0 0.0
    %v2187 = vand.u32 %v129, 4294901760
    %v2188 = vsub.f32 %v129, %v2187
    %v2189 = vand.u32 %v2188, 4294901760
    %v2190 = vsub.f32 %v2188, %v2189
    %v2191 = vand.u32 %v2190, 4294901760
    %2192 = vmatpush1.msra.mxu0 %v2191
    %2193 = vmatprep.subr.mxu0 0.0
    %v2194 = vand.u32 %v130, 4294901760
    %v2195 = vsub.f32 %v130, %v2194
    %v2196 = vand.u32 %v2195, 4294901760
    %v2197 = vsub.f32 %v2195, %v2196
    %v2198 = vand.u32 %v2197, 4294901760
    %2199 = vmatpush1.msra.mxu0 %v2198
    %2200 = vmatprep.subr.mxu0 0.0
    %v2201 = vand.u32 %v131, 4294901760
    %v2202 = vsub.f32 %v131, %v2201
    %v2203 = vand.u32 %v2202, 4294901760
    %v2204 = vsub.f32 %v2202, %v2203
    %v2205 = vand.u32 %v2204, 4294901760
    %2206 = vmatpush1.msra.mxu0 %v2205
    %2207 = vmatprep.subr.mxu0 0.0
    %v2208 = vand.u32 %v132, 4294901760
    %v2209 = vsub.f32 %v132, %v2208
    %v2210 = vand.u32 %v2209, 4294901760
    %v2211 = vsub.f32 %v2209, %v2210
    %v2212 = vand.u32 %v2211, 4294901760
    %2213 = vmatpush1.msra.mxu0 %v2212
    %2214 = vmatprep.subr.mxu0 0.0
    %v2215 = vand.u32 %v133, 4294901760
    %v2216 = vsub.f32 %v133, %v2215
    %v2217 = vand.u32 %v2216, 4294901760
    %v2218 = vsub.f32 %v2216, %v2217
    %v2219 = vand.u32 %v2218, 4294901760
    %2220 = vmatpush1.msra.mxu0 %v2219
    %2221 = vmatprep.subr.mxu0 0.0
    %v2222 = vand.u32 %v134, 4294901760
    %v2223 = vsub.f32 %v134, %v2222
    %v2224 = vand.u32 %v2223, 4294901760
    %v2225 = vsub.f32 %v2223, %v2224
    %v2226 = vand.u32 %v2225, 4294901760
    %2227 = vmatpush1.msra.mxu0 %v2226
    %2228 = vmatprep.subr.mxu0 0.0
    %v2229 = vand.u32 %v135, 4294901760
    %v2230 = vsub.f32 %v135, %v2229
    %v2231 = vand.u32 %v2230, 4294901760
    %v2232 = vsub.f32 %v2230, %v2231
    %v2233 = vand.u32 %v2232, 4294901760
    %2234 = vmatpush1.msra.mxu0 %v2233
    %2235 = vmatprep.subr.mxu0 0.0
    %v2236 = vand.u32 %v136, 4294901760
    %v2237 = vsub.f32 %v136, %v2236
    %v2238 = vand.u32 %v2237, 4294901760
    %v2239 = vsub.f32 %v2237, %v2238
    %v2240 = vand.u32 %v2239, 4294901760
    %2241 = vmatpush1.msra.mxu0 %v2240
    %2242 = vmatprep.subr.mxu0 0.0
    %v2243 = vand.u32 %v137, 4294901760
    %v2244 = vsub.f32 %v137, %v2243
    %v2245 = vand.u32 %v2244, 4294901760
    %v2246 = vsub.f32 %v2244, %v2245
    %v2247 = vand.u32 %v2246, 4294901760
    %2248 = vmatpush1.msra.mxu0 %v2247
    %2249 = vmatprep.subr.mxu0 0.0
    %v2250 = vand.u32 %v138, 4294901760
    %v2251 = vsub.f32 %v138, %v2250
    %v2252 = vand.u32 %v2251, 4294901760
    %v2253 = vsub.f32 %v2251, %v2252
    %v2254 = vand.u32 %v2253, 4294901760
    %2255 = vmatpush1.msra.mxu0 %v2254
    %2256 = vmatprep.subr.mxu0 0.0
    %v2257 = vand.u32 %v139, 4294901760
    %v2258 = vsub.f32 %v139, %v2257
    %v2259 = vand.u32 %v2258, 4294901760
    %v2260 = vsub.f32 %v2258, %v2259
    %v2261 = vand.u32 %v2260, 4294901760
    %2262 = vmatpush1.msra.mxu0 %v2261
    %2263 = vmatprep.subr.mxu0 0.0
    %v2264 = vand.u32 %v140, 4294901760
    %v2265 = vsub.f32 %v140, %v2264
    %v2266 = vand.u32 %v2265, 4294901760
    %v2267 = vsub.f32 %v2265, %v2266
    %v2268 = vand.u32 %v2267, 4294901760
    %2269 = vmatpush1.msra.mxu0 %v2268
    %2270 = vmatprep.subr.mxu0 0.0
    %v2271 = vand.u32 %v141, 4294901760
    %v2272 = vsub.f32 %v141, %v2271
    %v2273 = vand.u32 %v2272, 4294901760
    %v2274 = vsub.f32 %v2272, %v2273
    %v2275 = vand.u32 %v2274, 4294901760
    %2276 = vmatpush1.msra.mxu0 %v2275
    %2277 = vmatprep.subr.mxu0 0.0
    %v2278 = vand.u32 %v142, 4294901760
    %v2279 = vsub.f32 %v142, %v2278
    %v2280 = vand.u32 %v2279, 4294901760
    %v2281 = vsub.f32 %v2279, %v2280
    %v2282 = vand.u32 %v2281, 4294901760
    %2283 = vmatpush1.msra.mxu0 %v2282
    %v2284 = vand.u32 %v216, 4294901760
    %2285 = vmatprep.mubr.f32.mxu0 %v2284
    %v2286 = vand.u32 %v44, 4294901760
    %2287 = vmatmul.mubr.f32.gmra.mrb[0].mxu0 %v2286
    %v2288 = vpop.f32.mrb[0].mxu0
    %v2289 = vadd.f32 %v2057, %v2288
    %v2290 = vpop.f32.mrb[0].mxu0
    %2291 = vdwg.mxu0
    %2292 = vmatprep.subr.mxu0 0.0
    %v2293 = vand.u32 %v111, 4294901760
    %v2294 = vsub.f32 %v111, %v2293
    %2295 = vmatpush1.msra.mxu0 %v2294
    %2296 = vmatprep.subr.mxu0 0.0
    %v2297 = vand.u32 %v112, 4294901760
    %v2298 = vsub.f32 %v112, %v2297
    %2299 = vmatpush1.msra.mxu0 %v2298
    %2300 = vmatprep.subr.mxu0 0.0
    %v2301 = vand.u32 %v113, 4294901760
    %v2302 = vsub.f32 %v113, %v2301
    %2303 = vmatpush1.msra.mxu0 %v2302
    %2304 = vmatprep.subr.mxu0 0.0
    %v2305 = vand.u32 %v114, 4294901760
    %v2306 = vsub.f32 %v114, %v2305
    %2307 = vmatpush1.msra.mxu0 %v2306
    %2308 = vmatprep.subr.mxu0 0.0
    %v2309 = vand.u32 %v115, 4294901760
    %v2310 = vsub.f32 %v115, %v2309
    %2311 = vmatpush1.msra.mxu0 %v2310
    %2312 = vmatprep.subr.mxu0 0.0
    %v2313 = vand.u32 %v116, 4294901760
    %v2314 = vsub.f32 %v116, %v2313
    %2315 = vmatpush1.msra.mxu0 %v2314
    %2316 = vmatprep.subr.mxu0 0.0
    %v2317 = vand.u32 %v117, 4294901760
    %v2318 = vsub.f32 %v117, %v2317
    %2319 = vmatpush1.msra.mxu0 %v2318
    %2320 = vmatprep.subr.mxu0 0.0
    %v2321 = vand.u32 %v118, 4294901760
    %v2322 = vsub.f32 %v118, %v2321
    %2323 = vmatpush1.msra.mxu0 %v2322
    %2324 = vmatprep.subr.mxu0 0.0
    %v2325 = vand.u32 %v119, 4294901760
    %v2326 = vsub.f32 %v119, %v2325
    %2327 = vmatpush1.msra.mxu0 %v2326
    %2328 = vmatprep.subr.mxu0 0.0
    %v2329 = vand.u32 %v120, 4294901760
    %v2330 = vsub.f32 %v120, %v2329
    %2331 = vmatpush1.msra.mxu0 %v2330
    %2332 = vmatprep.subr.mxu0 0.0
    %v2333 = vand.u32 %v121, 4294901760
    %v2334 = vsub.f32 %v121, %v2333
    %2335 = vmatpush1.msra.mxu0 %v2334
    %2336 = vmatprep.subr.mxu0 0.0
    %v2337 = vand.u32 %v122, 4294901760
    %v2338 = vsub.f32 %v122, %v2337
    %2339 = vmatpush1.msra.mxu0 %v2338
    %2340 = vmatprep.subr.mxu0 0.0
    %v2341 = vand.u32 %v123, 4294901760
    %v2342 = vsub.f32 %v123, %v2341
    %2343 = vmatpush1.msra.mxu0 %v2342
    %2344 = vmatprep.subr.mxu0 0.0
    %v2345 = vand.u32 %v124, 4294901760
    %v2346 = vsub.f32 %v124, %v2345
    %2347 = vmatpush1.msra.mxu0 %v2346
    %2348 = vmatprep.subr.mxu0 0.0
    %v2349 = vand.u32 %v125, 4294901760
    %v2350 = vsub.f32 %v125, %v2349
    %2351 = vmatpush1.msra.mxu0 %v2350
    %2352 = vmatprep.subr.mxu0 0.0
    %v2353 = vand.u32 %v126, 4294901760
    %v2354 = vsub.f32 %v126, %v2353
    %2355 = vmatpush1.msra.mxu0 %v2354
    %2356 = vmatprep.subr.mxu0 0.0
    %v2357 = vand.u32 %v127, 4294901760
    %v2358 = vsub.f32 %v127, %v2357
    %2359 = vmatpush1.msra.mxu0 %v2358
    %2360 = vmatprep.subr.mxu0 0.0
    %v2361 = vand.u32 %v128, 4294901760
    %v2362 = vsub.f32 %v128, %v2361
    %2363 = vmatpush1.msra.mxu0 %v2362
    %2364 = vmatprep.subr.mxu0 0.0
    %v2365 = vand.u32 %v129, 4294901760
    %v2366 = vsub.f32 %v129, %v2365
    %2367 = vmatpush1.msra.mxu0 %v2366
    %2368 = vmatprep.subr.mxu0 0.0
    %v2369 = vand.u32 %v130, 4294901760
    %v2370 = vsub.f32 %v130, %v2369
    %2371 = vmatpush1.msra.mxu0 %v2370
    %2372 = vmatprep.subr.mxu0 0.0
    %v2373 = vand.u32 %v131, 4294901760
    %v2374 = vsub.f32 %v131, %v2373
    %2375 = vmatpush1.msra.mxu0 %v2374
    %2376 = vmatprep.subr.mxu0 0.0
    %v2377 = vand.u32 %v132, 4294901760
    %v2378 = vsub.f32 %v132, %v2377
    %2379 = vmatpush1.msra.mxu0 %v2378
    %2380 = vmatprep.subr.mxu0 0.0
    %v2381 = vand.u32 %v133, 4294901760
    %v2382 = vsub.f32 %v133, %v2381
    %2383 = vmatpush1.msra.mxu0 %v2382
    %2384 = vmatprep.subr.mxu0 0.0
    %v2385 = vand.u32 %v134, 4294901760
    %v2386 = vsub.f32 %v134, %v2385
    %2387 = vmatpush1.msra.mxu0 %v2386
    %2388 = vmatprep.subr.mxu0 0.0
    %v2389 = vand.u32 %v135, 4294901760
    %v2390 = vsub.f32 %v135, %v2389
    %2391 = vmatpush1.msra.mxu0 %v2390
    %2392 = vmatprep.subr.mxu0 0.0
    %v2393 = vand.u32 %v136, 4294901760
    %v2394 = vsub.f32 %v136, %v2393
    %2395 = vmatpush1.msra.mxu0 %v2394
    %2396 = vmatprep.subr.mxu0 0.0
    %v2397 = vand.u32 %v137, 4294901760
    %v2398 = vsub.f32 %v137, %v2397
    %2399 = vmatpush1.msra.mxu0 %v2398
    %2400 = vmatprep.subr.mxu0 0.0
    %v2401 = vand.u32 %v138, 4294901760
    %v2402 = vsub.f32 %v138, %v2401
    %2403 = vmatpush1.msra.mxu0 %v2402
    %2404 = vmatprep.subr.mxu0 0.0
    %v2405 = vand.u32 %v139, 4294901760
    %v2406 = vsub.f32 %v139, %v2405
    %2407 = vmatpush1.msra.mxu0 %v2406
    %2408 = vmatprep.subr.mxu0 0.0
    %v2409 = vand.u32 %v140, 4294901760
    %v2410 = vsub.f32 %v140, %v2409
    %2411 = vmatpush1.msra.mxu0 %v2410
    %2412 = vmatprep.subr.mxu0 0.0
    %v2413 = vand.u32 %v141, 4294901760
    %v2414 = vsub.f32 %v141, %v2413
    %2415 = vmatpush1.msra.mxu0 %v2414
    %2416 = vmatprep.subr.mxu0 0.0
    %v2417 = vand.u32 %v142, 4294901760
    %v2418 = vsub.f32 %v142, %v2417
    %2419 = vmatpush1.msra.mxu0 %v2418
    %v2420 = vand.u32 %v216, 4294901760
    %v2421 = vsub.f32 %v216, %v2420
    %2422 = vmatprep.mubr.f32.mxu0 %v2421
    %v2423 = vand.u32 %v44, 4294901760
    %v2424 = vsub.f32 %v44, %v2423
    %2425 = vmatmul.mubr.f32.gmra.mrb[0].mxu0 %v2424
    %v2426 = vpop.f32.mrb[0].mxu0
    %v2427 = vadd.f32 %v2289, %v2426
    %v2428 = vpop.f32.mrb[0].mxu0
    %2429 = vdwg.mxu0
    %2430 = vmatprep.subr.mxu0 0.0
    %v2431 = vand.u32 %v111, 4294901760
    %2432 = vmatpush1.msra.mxu0 %v2431
    %2433 = vmatprep.subr.mxu0 0.0
    %v2434 = vand.u32 %v112, 4294901760
    %2435 = vmatpush1.msra.mxu0 %v2434
    %2436 = vmatprep.subr.mxu0 0.0
    %v2437 = vand.u32 %v113, 4294901760
    %2438 = vmatpush1.msra.mxu0 %v2437
    %2439 = vmatprep.subr.mxu0 0.0
    %v2440 = vand.u32 %v114, 4294901760
    %2441 = vmatpush1.msra.mxu0 %v2440
    %2442 = vmatprep.subr.mxu0 0.0
    %v2443 = vand.u32 %v115, 4294901760
    %2444 = vmatpush1.msra.mxu0 %v2443
    %2445 = vmatprep.subr.mxu0 0.0
    %v2446 = vand.u32 %v116, 4294901760
    %2447 = vmatpush1.msra.mxu0 %v2446
    %2448 = vmatprep.subr.mxu0 0.0
    %v2449 = vand.u32 %v117, 4294901760
    %2450 = vmatpush1.msra.mxu0 %v2449
    %2451 = vmatprep.subr.mxu0 0.0
    %v2452 = vand.u32 %v118, 4294901760
    %2453 = vmatpush1.msra.mxu0 %v2452
    %2454 = vmatprep.subr.mxu0 0.0
    %v2455 = vand.u32 %v119, 4294901760
    %2456 = vmatpush1.msra.mxu0 %v2455
    %2457 = vmatprep.subr.mxu0 0.0
    %v2458 = vand.u32 %v120, 4294901760
    %2459 = vmatpush1.msra.mxu0 %v2458
    %2460 = vmatprep.subr.mxu0 0.0
    %v2461 = vand.u32 %v121, 4294901760
    %2462 = vmatpush1.msra.mxu0 %v2461
    %2463 = vmatprep.subr.mxu0 0.0
    %v2464 = vand.u32 %v122, 4294901760
    %2465 = vmatpush1.msra.mxu0 %v2464
    %2466 = vmatprep.subr.mxu0 0.0
    %v2467 = vand.u32 %v123, 4294901760
    %2468 = vmatpush1.msra.mxu0 %v2467
    %2469 = vmatprep.subr.mxu0 0.0
    %v2470 = vand.u32 %v124, 4294901760
    %2471 = vmatpush1.msra.mxu0 %v2470
    %2472 = vmatprep.subr.mxu0 0.0
    %v2473 = vand.u32 %v125, 4294901760
    %2474 = vmatpush1.msra.mxu0 %v2473
    %2475 = vmatprep.subr.mxu0 0.0
    %v2476 = vand.u32 %v126, 4294901760
    %2477 = vmatpush1.msra.mxu0 %v2476
    %2478 = vmatprep.subr.mxu0 0.0
    %v2479 = vand.u32 %v127, 4294901760
    %2480 = vmatpush1.msra.mxu0 %v2479
    %2481 = vmatprep.subr.mxu0 0.0
    %v2482 = vand.u32 %v128, 4294901760
    %2483 = vmatpush1.msra.mxu0 %v2482
    %2484 = vmatprep.subr.mxu0 0.0
    %v2485 = vand.u32 %v129, 4294901760
    %2486 = vmatpush1.msra.mxu0 %v2485
    %2487 = vmatprep.subr.mxu0 0.0
    %v2488 = vand.u32 %v130, 4294901760
    %2489 = vmatpush1.msra.mxu0 %v2488
    %2490 = vmatprep.subr.mxu0 0.0
    %v2491 = vand.u32 %v131, 4294901760
    %2492 = vmatpush1.msra.mxu0 %v2491
    %2493 = vmatprep.subr.mxu0 0.0
    %v2494 = vand.u32 %v132, 4294901760
    %2495 = vmatpush1.msra.mxu0 %v2494
    %2496 = vmatprep.subr.mxu0 0.0
    %v2497 = vand.u32 %v133, 4294901760
    %2498 = vmatpush1.msra.mxu0 %v2497
    %2499 = vmatprep.subr.mxu0 0.0
    %v2500 = vand.u32 %v134, 4294901760
    %2501 = vmatpush1.msra.mxu0 %v2500
    %2502 = vmatprep.subr.mxu0 0.0
    %v2503 = vand.u32 %v135, 4294901760
    %2504 = vmatpush1.msra.mxu0 %v2503
    %2505 = vmatprep.subr.mxu0 0.0
    %v2506 = vand.u32 %v136, 4294901760
    %2507 = vmatpush1.msra.mxu0 %v2506
    %2508 = vmatprep.subr.mxu0 0.0
    %v2509 = vand.u32 %v137, 4294901760
    %2510 = vmatpush1.msra.mxu0 %v2509
    %2511 = vmatprep.subr.mxu0 0.0
    %v2512 = vand.u32 %v138, 4294901760
    %2513 = vmatpush1.msra.mxu0 %v2512
    %2514 = vmatprep.subr.mxu0 0.0
    %v2515 = vand.u32 %v139, 4294901760
    %2516 = vmatpush1.msra.mxu0 %v2515
    %2517 = vmatprep.subr.mxu0 0.0
    %v2518 = vand.u32 %v140, 4294901760
    %2519 = vmatpush1.msra.mxu0 %v2518
    %2520 = vmatprep.subr.mxu0 0.0
    %v2521 = vand.u32 %v141, 4294901760
    %2522 = vmatpush1.msra.mxu0 %v2521
    %2523 = vmatprep.subr.mxu0 0.0
    %v2524 = vand.u32 %v142, 4294901760
    %2525 = vmatpush1.msra.mxu0 %v2524
    %v2526 = vand.u32 %v216, 4294901760
    %v2527 = vsub.f32 %v216, %v2526
    %v2528 = vand.u32 %v2527, 4294901760
    %2529 = vmatprep.mubr.f32.mxu0 %v2528
    %v2530 = vand.u32 %v44, 4294901760
    %v2531 = vsub.f32 %v44, %v2530
    %v2532 = vand.u32 %v2531, 4294901760
    %2533 = vmatmul.mubr.f32.gmra.mrb[0].mxu0 %v2532
    %v2534 = vpop.f32.mrb[0].mxu0
    %v2535 = vadd.f32 %v2427, %v2534
    %v2536 = vpop.f32.mrb[0].mxu0
    %2537 = vdwg.mxu0
    %2538 = vmatprep.subr.mxu0 0.0
    %v2539 = vand.u32 %v111, 4294901760
    %v2540 = vsub.f32 %v111, %v2539
    %v2541 = vand.u32 %v2540, 4294901760
    %2542 = vmatpush1.msra.mxu0 %v2541
    %2543 = vmatprep.subr.mxu0 0.0
    %v2544 = vand.u32 %v112, 4294901760
    %v2545 = vsub.f32 %v112, %v2544
    %v2546 = vand.u32 %v2545, 4294901760
    %2547 = vmatpush1.msra.mxu0 %v2546
    %2548 = vmatprep.subr.mxu0 0.0
    %v2549 = vand.u32 %v113, 4294901760
    %v2550 = vsub.f32 %v113, %v2549
    %v2551 = vand.u32 %v2550, 4294901760
    %2552 = vmatpush1.msra.mxu0 %v2551
    %2553 = vmatprep.subr.mxu0 0.0
    %v2554 = vand.u32 %v114, 4294901760
    %v2555 = vsub.f32 %v114, %v2554
    %v2556 = vand.u32 %v2555, 4294901760
    %2557 = vmatpush1.msra.mxu0 %v2556
    %2558 = vmatprep.subr.mxu0 0.0
    %v2559 = vand.u32 %v115, 4294901760
    %v2560 = vsub.f32 %v115, %v2559
    %v2561 = vand.u32 %v2560, 4294901760
    %2562 = vmatpush1.msra.mxu0 %v2561
    %2563 = vmatprep.subr.mxu0 0.0
    %v2564 = vand.u32 %v116, 4294901760
    %v2565 = vsub.f32 %v116, %v2564
    %v2566 = vand.u32 %v2565, 4294901760
    %2567 = vmatpush1.msra.mxu0 %v2566
    %2568 = vmatprep.subr.mxu0 0.0
    %v2569 = vand.u32 %v117, 4294901760
    %v2570 = vsub.f32 %v117, %v2569
    %v2571 = vand.u32 %v2570, 4294901760
    %2572 = vmatpush1.msra.mxu0 %v2571
    %2573 = vmatprep.subr.mxu0 0.0
    %v2574 = vand.u32 %v118, 4294901760
    %v2575 = vsub.f32 %v118, %v2574
    %v2576 = vand.u32 %v2575, 4294901760
    %2577 = vmatpush1.msra.mxu0 %v2576
    %2578 = vmatprep.subr.mxu0 0.0
    %v2579 = vand.u32 %v119, 4294901760
    %v2580 = vsub.f32 %v119, %v2579
    %v2581 = vand.u32 %v2580, 4294901760
    %2582 = vmatpush1.msra.mxu0 %v2581
    %2583 = vmatprep.subr.mxu0 0.0
    %v2584 = vand.u32 %v120, 4294901760
    %v2585 = vsub.f32 %v120, %v2584
    %v2586 = vand.u32 %v2585, 4294901760
    %2587 = vmatpush1.msra.mxu0 %v2586
    %2588 = vmatprep.subr.mxu0 0.0
    %v2589 = vand.u32 %v121, 4294901760
    %v2590 = vsub.f32 %v121, %v2589
    %v2591 = vand.u32 %v2590, 4294901760
    %2592 = vmatpush1.msra.mxu0 %v2591
    %2593 = vmatprep.subr.mxu0 0.0
    %v2594 = vand.u32 %v122, 4294901760
    %v2595 = vsub.f32 %v122, %v2594
    %v2596 = vand.u32 %v2595, 4294901760
    %2597 = vmatpush1.msra.mxu0 %v2596
    %2598 = vmatprep.subr.mxu0 0.0
    %v2599 = vand.u32 %v123, 4294901760
    %v2600 = vsub.f32 %v123, %v2599
    %v2601 = vand.u32 %v2600, 4294901760
    %2602 = vmatpush1.msra.mxu0 %v2601
    %2603 = vmatprep.subr.mxu0 0.0
    %v2604 = vand.u32 %v124, 4294901760
    %v2605 = vsub.f32 %v124, %v2604
    %v2606 = vand.u32 %v2605, 4294901760
    %2607 = vmatpush1.msra.mxu0 %v2606
    %2608 = vmatprep.subr.mxu0 0.0
    %v2609 = vand.u32 %v125, 4294901760
    %v2610 = vsub.f32 %v125, %v2609
    %v2611 = vand.u32 %v2610, 4294901760
    %2612 = vmatpush1.msra.mxu0 %v2611
    %2613 = vmatprep.subr.mxu0 0.0
    %v2614 = vand.u32 %v126, 4294901760
    %v2615 = vsub.f32 %v126, %v2614
    %v2616 = vand.u32 %v2615, 4294901760
    %2617 = vmatpush1.msra.mxu0 %v2616
    %2618 = vmatprep.subr.mxu0 0.0
    %v2619 = vand.u32 %v127, 4294901760
    %v2620 = vsub.f32 %v127, %v2619
    %v2621 = vand.u32 %v2620, 4294901760
    %2622 = vmatpush1.msra.mxu0 %v2621
    %2623 = vmatprep.subr.mxu0 0.0
    %v2624 = vand.u32 %v128, 4294901760
    %v2625 = vsub.f32 %v128, %v2624
    %v2626 = vand.u32 %v2625, 4294901760
    %2627 = vmatpush1.msra.mxu0 %v2626
    %2628 = vmatprep.subr.mxu0 0.0
    %v2629 = vand.u32 %v129, 4294901760
    %v2630 = vsub.f32 %v129, %v2629
    %v2631 = vand.u32 %v2630, 4294901760
    %2632 = vmatpush1.msra.mxu0 %v2631
    %2633 = vmatprep.subr.mxu0 0.0
    %v2634 = vand.u32 %v130, 4294901760
    %v2635 = vsub.f32 %v130, %v2634
    %v2636 = vand.u32 %v2635, 4294901760
    %2637 = vmatpush1.msra.mxu0 %v2636
    %2638 = vmatprep.subr.mxu0 0.0
    %v2639 = vand.u32 %v131, 4294901760
    %v2640 = vsub.f32 %v131, %v2639
    %v2641 = vand.u32 %v2640, 4294901760
    %2642 = vmatpush1.msra.mxu0 %v2641
    %2643 = vmatprep.subr.mxu0 0.0
    %v2644 = vand.u32 %v132, 4294901760
    %v2645 = vsub.f32 %v132, %v2644
    %v2646 = vand.u32 %v2645, 4294901760
    %2647 = vmatpush1.msra.mxu0 %v2646
    %2648 = vmatprep.subr.mxu0 0.0
    %v2649 = vand.u32 %v133, 4294901760
    %v2650 = vsub.f32 %v133, %v2649
    %v2651 = vand.u32 %v2650, 4294901760
    %2652 = vmatpush1.msra.mxu0 %v2651
    %2653 = vmatprep.subr.mxu0 0.0
    %v2654 = vand.u32 %v134, 4294901760
    %v2655 = vsub.f32 %v134, %v2654
    %v2656 = vand.u32 %v2655, 4294901760
    %2657 = vmatpush1.msra.mxu0 %v2656
    %2658 = vmatprep.subr.mxu0 0.0
    %v2659 = vand.u32 %v135, 4294901760
    %v2660 = vsub.f32 %v135, %v2659
    %v2661 = vand.u32 %v2660, 4294901760
    %2662 = vmatpush1.msra.mxu0 %v2661
    %2663 = vmatprep.subr.mxu0 0.0
    %v2664 = vand.u32 %v136, 4294901760
    %v2665 = vsub.f32 %v136, %v2664
    %v2666 = vand.u32 %v2665, 4294901760
    %2667 = vmatpush1.msra.mxu0 %v2666
    %2668 = vmatprep.subr.mxu0 0.0
    %v2669 = vand.u32 %v137, 4294901760
    %v2670 = vsub.f32 %v137, %v2669
    %v2671 = vand.u32 %v2670, 4294901760
    %2672 = vmatpush1.msra.mxu0 %v2671
    %2673 = vmatprep.subr.mxu0 0.0
    %v2674 = vand.u32 %v138, 4294901760
    %v2675 = vsub.f32 %v138, %v2674
    %v2676 = vand.u32 %v2675, 4294901760
    %2677 = vmatpush1.msra.mxu0 %v2676
    %2678 = vmatprep.subr.mxu0 0.0
    %v2679 = vand.u32 %v139, 4294901760
    %v2680 = vsub.f32 %v139, %v2679
    %v2681 = vand.u32 %v2680, 4294901760
    %2682 = vmatpush1.msra.mxu0 %v2681
    %2683 = vmatprep.subr.mxu0 0.0
    %v2684 = vand.u32 %v140, 4294901760
    %v2685 = vsub.f32 %v140, %v2684
    %v2686 = vand.u32 %v2685, 4294901760
    %2687 = vmatpush1.msra.mxu0 %v2686
    %2688 = vmatprep.subr.mxu0 0.0
    %v2689 = vand.u32 %v141, 4294901760
    %v2690 = vsub.f32 %v141, %v2689
    %v2691 = vand.u32 %v2690, 4294901760
    %2692 = vmatpush1.msra.mxu0 %v2691
    %2693 = vmatprep.subr.mxu0 0.0
    %v2694 = vand.u32 %v142, 4294901760
    %v2695 = vsub.f32 %v142, %v2694
    %v2696 = vand.u32 %v2695, 4294901760
    %2697 = vmatpush1.msra.mxu0 %v2696
    %v2698 = vand.u32 %v216, 4294901760
    %2699 = vmatprep.mubr.f32.mxu0 %v2698
    %v2700 = vand.u32 %v44, 4294901760
    %2701 = vmatmul.mubr.f32.gmra.mrb[0].mxu0 %v2700
    %v2702 = vpop.f32.mrb[0].mxu0
    %v2703 = vadd.f32 %v2535, %v2702
    %v2704 = vpop.f32.mrb[0].mxu0
    %2705 = vdwg.mxu0
    %2706 = vmatprep.subr.mxu0 0.0
    %v2707 = vand.u32 %v111, 4294901760
    %2708 = vmatpush1.msra.mxu0 %v2707
    %2709 = vmatprep.subr.mxu0 0.0
    %v2710 = vand.u32 %v112, 4294901760
    %2711 = vmatpush1.msra.mxu0 %v2710
    %2712 = vmatprep.subr.mxu0 0.0
    %v2713 = vand.u32 %v113, 4294901760
    %2714 = vmatpush1.msra.mxu0 %v2713
    %2715 = vmatprep.subr.mxu0 0.0
    %v2716 = vand.u32 %v114, 4294901760
    %2717 = vmatpush1.msra.mxu0 %v2716
    %2718 = vmatprep.subr.mxu0 0.0
    %v2719 = vand.u32 %v115, 4294901760
    %2720 = vmatpush1.msra.mxu0 %v2719
    %2721 = vmatprep.subr.mxu0 0.0
    %v2722 = vand.u32 %v116, 4294901760
    %2723 = vmatpush1.msra.mxu0 %v2722
    %2724 = vmatprep.subr.mxu0 0.0
    %v2725 = vand.u32 %v117, 4294901760
    %2726 = vmatpush1.msra.mxu0 %v2725
    %2727 = vmatprep.subr.mxu0 0.0
    %v2728 = vand.u32 %v118, 4294901760
    %2729 = vmatpush1.msra.mxu0 %v2728
    %2730 = vmatprep.subr.mxu0 0.0
    %v2731 = vand.u32 %v119, 4294901760
    %2732 = vmatpush1.msra.mxu0 %v2731
    %2733 = vmatprep.subr.mxu0 0.0
    %v2734 = vand.u32 %v120, 4294901760
    %2735 = vmatpush1.msra.mxu0 %v2734
    %2736 = vmatprep.subr.mxu0 0.0
    %v2737 = vand.u32 %v121, 4294901760
    %2738 = vmatpush1.msra.mxu0 %v2737
    %2739 = vmatprep.subr.mxu0 0.0
    %v2740 = vand.u32 %v122, 4294901760
    %2741 = vmatpush1.msra.mxu0 %v2740
    %2742 = vmatprep.subr.mxu0 0.0
    %v2743 = vand.u32 %v123, 4294901760
    %2744 = vmatpush1.msra.mxu0 %v2743
    %2745 = vmatprep.subr.mxu0 0.0
    %v2746 = vand.u32 %v124, 4294901760
    %2747 = vmatpush1.msra.mxu0 %v2746
    %2748 = vmatprep.subr.mxu0 0.0
    %v2749 = vand.u32 %v125, 4294901760
    %2750 = vmatpush1.msra.mxu0 %v2749
    %2751 = vmatprep.subr.mxu0 0.0
    %v2752 = vand.u32 %v126, 4294901760
    %2753 = vmatpush1.msra.mxu0 %v2752
    %2754 = vmatprep.subr.mxu0 0.0
    %v2755 = vand.u32 %v127, 4294901760
    %2756 = vmatpush1.msra.mxu0 %v2755
    %2757 = vmatprep.subr.mxu0 0.0
    %v2758 = vand.u32 %v128, 4294901760
    %2759 = vmatpush1.msra.mxu0 %v2758
    %2760 = vmatprep.subr.mxu0 0.0
    %v2761 = vand.u32 %v129, 4294901760
    %2762 = vmatpush1.msra.mxu0 %v2761
    %2763 = vmatprep.subr.mxu0 0.0
    %v2764 = vand.u32 %v130, 4294901760
    %2765 = vmatpush1.msra.mxu0 %v2764
    %2766 = vmatprep.subr.mxu0 0.0
    %v2767 = vand.u32 %v131, 4294901760
    %2768 = vmatpush1.msra.mxu0 %v2767
    %2769 = vmatprep.subr.mxu0 0.0
    %v2770 = vand.u32 %v132, 4294901760
    %2771 = vmatpush1.msra.mxu0 %v2770
    %2772 = vmatprep.subr.mxu0 0.0
    %v2773 = vand.u32 %v133, 4294901760
    %2774 = vmatpush1.msra.mxu0 %v2773
    %2775 = vmatprep.subr.mxu0 0.0
    %v2776 = vand.u32 %v134, 4294901760
    %2777 = vmatpush1.msra.mxu0 %v2776
    %2778 = vmatprep.subr.mxu0 0.0
    %v2779 = vand.u32 %v135, 4294901760
    %2780 = vmatpush1.msra.mxu0 %v2779
    %2781 = vmatprep.subr.mxu0 0.0
    %v2782 = vand.u32 %v136, 4294901760
    %2783 = vmatpush1.msra.mxu0 %v2782
    %2784 = vmatprep.subr.mxu0 0.0
    %v2785 = vand.u32 %v137, 4294901760
    %2786 = vmatpush1.msra.mxu0 %v2785
    %2787 = vmatprep.subr.mxu0 0.0
    %v2788 = vand.u32 %v138, 4294901760
    %2789 = vmatpush1.msra.mxu0 %v2788
    %2790 = vmatprep.subr.mxu0 0.0
    %v2791 = vand.u32 %v139, 4294901760
    %2792 = vmatpush1.msra.mxu0 %v2791
    %2793 = vmatprep.subr.mxu0 0.0
    %v2794 = vand.u32 %v140, 4294901760
    %2795 = vmatpush1.msra.mxu0 %v2794
    %2796 = vmatprep.subr.mxu0 0.0
    %v2797 = vand.u32 %v141, 4294901760
    %2798 = vmatpush1.msra.mxu0 %v2797
    %2799 = vmatprep.subr.mxu0 0.0
    %v2800 = vand.u32 %v142, 4294901760
    %2801 = vmatpush1.msra.mxu0 %v2800
    %v2802 = vand.u32 %v216, 4294901760
    %2803 = vmatprep.mubr.f32.mxu0 %v2802
    %v2804 = vand.u32 %v44, 4294901760
    %2805 = vmatmul.mubr.f32.gmra.mrb[0].mxu0 %v2804
    %v2806 = vpop.f32.mrb[0].mxu0
    %v2807 = vadd.f32 %v2703, %v2806
    %v2808 = vpop.f32.mrb[0].mxu0
    %2809 = vdwg.mxu0
    %2810 = vmatprep.subr.mxu0 0.0
    %v2811 = vand.u32 %v143, 4294901760
    %2812 = vmatpush1.msra.mxu0 %v2811
    %2813 = vmatprep.subr.mxu0 0.0
    %v2814 = vand.u32 %v144, 4294901760
    %2815 = vmatpush1.msra.mxu0 %v2814
    %2816 = vmatprep.subr.mxu0 0.0
    %v2817 = vand.u32 %v145, 4294901760
    %2818 = vmatpush1.msra.mxu0 %v2817
    %2819 = vmatprep.subr.mxu0 0.0
    %v2820 = vand.u32 %v146, 4294901760
    %2821 = vmatpush1.msra.mxu0 %v2820
    %2822 = vmatprep.subr.mxu0 0.0
    %v2823 = vand.u32 %v147, 4294901760
    %2824 = vmatpush1.msra.mxu0 %v2823
    %2825 = vmatprep.subr.mxu0 0.0
    %v2826 = vand.u32 %v148, 4294901760
    %2827 = vmatpush1.msra.mxu0 %v2826
    %2828 = vmatprep.subr.mxu0 0.0
    %v2829 = vand.u32 %v149, 4294901760
    %2830 = vmatpush1.msra.mxu0 %v2829
    %2831 = vmatprep.subr.mxu0 0.0
    %v2832 = vand.u32 %v150, 4294901760
    %2833 = vmatpush1.msra.mxu0 %v2832
    %2834 = vmatprep.subr.mxu0 0.0
    %v2835 = vand.u32 %v151, 4294901760
    %2836 = vmatpush1.msra.mxu0 %v2835
    %2837 = vmatprep.subr.mxu0 0.0
    %v2838 = vand.u32 %v152, 4294901760
    %2839 = vmatpush1.msra.mxu0 %v2838
    %2840 = vmatprep.subr.mxu0 0.0
    %v2841 = vand.u32 %v153, 4294901760
    %2842 = vmatpush1.msra.mxu0 %v2841
    %2843 = vmatprep.subr.mxu0 0.0
    %v2844 = vand.u32 %v154, 4294901760
    %2845 = vmatpush1.msra.mxu0 %v2844
    %2846 = vmatprep.subr.mxu0 0.0
    %v2847 = vand.u32 %v155, 4294901760
    %2848 = vmatpush1.msra.mxu0 %v2847
    %2849 = vmatprep.subr.mxu0 0.0
    %v2850 = vand.u32 %v156, 4294901760
    %2851 = vmatpush1.msra.mxu0 %v2850
    %2852 = vmatprep.subr.mxu0 0.0
    %v2853 = vand.u32 %v157, 4294901760
    %2854 = vmatpush1.msra.mxu0 %v2853
    %2855 = vmatprep.subr.mxu0 0.0
    %v2856 = vand.u32 %v158, 4294901760
    %2857 = vmatpush1.msra.mxu0 %v2856
    %2858 = vmatprep.subr.mxu0 0.0
    %v2859 = vand.u32 %v159, 4294901760
    %2860 = vmatpush1.msra.mxu0 %v2859
    %2861 = vmatprep.subr.mxu0 0.0
    %v2862 = vand.u32 %v160, 4294901760
    %2863 = vmatpush1.msra.mxu0 %v2862
    %2864 = vmatprep.subr.mxu0 0.0
    %v2865 = vand.u32 %v161, 4294901760
    %2866 = vmatpush1.msra.mxu0 %v2865
    %2867 = vmatprep.subr.mxu0 0.0
    %v2868 = vand.u32 %v162, 4294901760
    %2869 = vmatpush1.msra.mxu0 %v2868
    %2870 = vmatprep.subr.mxu0 0.0
    %v2871 = vand.u32 %v163, 4294901760
    %2872 = vmatpush1.msra.mxu0 %v2871
    %2873 = vmatprep.subr.mxu0 0.0
    %v2874 = vand.u32 %v164, 4294901760
    %2875 = vmatpush1.msra.mxu0 %v2874
    %2876 = vmatprep.subr.mxu0 0.0
    %v2877 = vand.u32 %v165, 4294901760
    %2878 = vmatpush1.msra.mxu0 %v2877
    %2879 = vmatprep.subr.mxu0 0.0
    %v2880 = vand.u32 %v166, 4294901760
    %2881 = vmatpush1.msra.mxu0 %v2880
    %2882 = vmatprep.subr.mxu0 0.0
    %v2883 = vand.u32 %v167, 4294901760
    %2884 = vmatpush1.msra.mxu0 %v2883
    %2885 = vmatprep.subr.mxu0 0.0
    %v2886 = vand.u32 %v168, 4294901760
    %2887 = vmatpush1.msra.mxu0 %v2886
    %2888 = vmatprep.subr.mxu0 0.0
    %v2889 = vand.u32 %v169, 4294901760
    %2890 = vmatpush1.msra.mxu0 %v2889
    %2891 = vmatprep.subr.mxu0 0.0
    %v2892 = vand.u32 %v170, 4294901760
    %2893 = vmatpush1.msra.mxu0 %v2892
    %2894 = vmatprep.subr.mxu0 0.0
    %v2895 = vand.u32 %v171, 4294901760
    %2896 = vmatpush1.msra.mxu0 %v2895
    %2897 = vmatprep.subr.mxu0 0.0
    %v2898 = vand.u32 %v172, 4294901760
    %2899 = vmatpush1.msra.mxu0 %v2898
    %2900 = vmatprep.subr.mxu0 0.0
    %v2901 = vand.u32 %v173, 4294901760
    %2902 = vmatpush1.msra.mxu0 %v2901
    %2903 = vmatprep.subr.mxu0 0.0
    %v2904 = vand.u32 %v174, 4294901760
    %2905 = vmatpush1.msra.mxu0 %v2904
    %v2906 = vand.u32 %v217, 4294901760
    %v2907 = vsub.f32 %v217, %v2906
    %v2908 = vand.u32 %v2907, 4294901760
    %v2909 = vsub.f32 %v2907, %v2908
    %v2910 = vand.u32 %v2909, 4294901760
    %2911 = vmatprep.mubr.f32.mxu0 %v2910
    %v2912 = vand.u32 %v45, 4294901760
    %v2913 = vsub.f32 %v45, %v2912
    %v2914 = vand.u32 %v2913, 4294901760
    %v2915 = vsub.f32 %v2913, %v2914
    %v2916 = vand.u32 %v2915, 4294901760
    %2917 = vmatmul.mubr.f32.gmra.mrb[0].mxu0 %v2916
    %v2918 = vpop.f32.mrb[0].mxu0
    %v2919 = vadd.f32 %v2807, %v2918
    %v2920 = vpop.f32.mrb[0].mxu0
    %2921 = vdwg.mxu0
    %2922 = vmatprep.subr.mxu0 0.0
    %v2923 = vand.u32 %v143, 4294901760
    %v2924 = vsub.f32 %v143, %v2923
    %v2925 = vand.u32 %v2924, 4294901760
    %v2926 = vsub.f32 %v2924, %v2925
    %v2927 = vand.u32 %v2926, 4294901760
    %2928 = vmatpush1.msra.mxu0 %v2927
    %2929 = vmatprep.subr.mxu0 0.0
    %v2930 = vand.u32 %v144, 4294901760
    %v2931 = vsub.f32 %v144, %v2930
    %v2932 = vand.u32 %v2931, 4294901760
    %v2933 = vsub.f32 %v2931, %v2932
    %v2934 = vand.u32 %v2933, 4294901760
    %2935 = vmatpush1.msra.mxu0 %v2934
    %2936 = vmatprep.subr.mxu0 0.0
    %v2937 = vand.u32 %v145, 4294901760
    %v2938 = vsub.f32 %v145, %v2937
    %v2939 = vand.u32 %v2938, 4294901760
    %v2940 = vsub.f32 %v2938, %v2939
    %v2941 = vand.u32 %v2940, 4294901760
    %2942 = vmatpush1.msra.mxu0 %v2941
    %2943 = vmatprep.subr.mxu0 0.0
    %v2944 = vand.u32 %v146, 4294901760
    %v2945 = vsub.f32 %v146, %v2944
    %v2946 = vand.u32 %v2945, 4294901760
    %v2947 = vsub.f32 %v2945, %v2946
    %v2948 = vand.u32 %v2947, 4294901760
    %2949 = vmatpush1.msra.mxu0 %v2948
    %2950 = vmatprep.subr.mxu0 0.0
    %v2951 = vand.u32 %v147, 4294901760
    %v2952 = vsub.f32 %v147, %v2951
    %v2953 = vand.u32 %v2952, 4294901760
    %v2954 = vsub.f32 %v2952, %v2953
    %v2955 = vand.u32 %v2954, 4294901760
    %2956 = vmatpush1.msra.mxu0 %v2955
    %2957 = vmatprep.subr.mxu0 0.0
    %v2958 = vand.u32 %v148, 4294901760
    %v2959 = vsub.f32 %v148, %v2958
    %v2960 = vand.u32 %v2959, 4294901760
    %v2961 = vsub.f32 %v2959, %v2960
    %v2962 = vand.u32 %v2961, 4294901760
    %2963 = vmatpush1.msra.mxu0 %v2962
    %2964 = vmatprep.subr.mxu0 0.0
    %v2965 = vand.u32 %v149, 4294901760
    %v2966 = vsub.f32 %v149, %v2965
    %v2967 = vand.u32 %v2966, 4294901760
    %v2968 = vsub.f32 %v2966, %v2967
    %v2969 = vand.u32 %v2968, 4294901760
    %2970 = vmatpush1.msra.mxu0 %v2969
    %2971 = vmatprep.subr.mxu0 0.0
    %v2972 = vand.u32 %v150, 4294901760
    %v2973 = vsub.f32 %v150, %v2972
    %v2974 = vand.u32 %v2973, 4294901760
    %v2975 = vsub.f32 %v2973, %v2974
    %v2976 = vand.u32 %v2975, 4294901760
    %2977 = vmatpush1.msra.mxu0 %v2976
    %2978 = vmatprep.subr.mxu0 0.0
    %v2979 = vand.u32 %v151, 4294901760
    %v2980 = vsub.f32 %v151, %v2979
    %v2981 = vand.u32 %v2980, 4294901760
    %v2982 = vsub.f32 %v2980, %v2981
    %v2983 = vand.u32 %v2982, 4294901760
    %2984 = vmatpush1.msra.mxu0 %v2983
    %2985 = vmatprep.subr.mxu0 0.0
    %v2986 = vand.u32 %v152, 4294901760
    %v2987 = vsub.f32 %v152, %v2986
    %v2988 = vand.u32 %v2987, 4294901760
    %v2989 = vsub.f32 %v2987, %v2988
    %v2990 = vand.u32 %v2989, 4294901760
    %2991 = vmatpush1.msra.mxu0 %v2990
    %2992 = vmatprep.subr.mxu0 0.0
    %v2993 = vand.u32 %v153, 4294901760
    %v2994 = vsub.f32 %v153, %v2993
    %v2995 = vand.u32 %v2994, 4294901760
    %v2996 = vsub.f32 %v2994, %v2995
    %v2997 = vand.u32 %v2996, 4294901760
    %2998 = vmatpush1.msra.mxu0 %v2997
    %2999 = vmatprep.subr.mxu0 0.0
    %v3000 = vand.u32 %v154, 4294901760
    %v3001 = vsub.f32 %v154, %v3000
    %v3002 = vand.u32 %v3001, 4294901760
    %v3003 = vsub.f32 %v3001, %v3002
    %v3004 = vand.u32 %v3003, 4294901760
    %3005 = vmatpush1.msra.mxu0 %v3004
    %3006 = vmatprep.subr.mxu0 0.0
    %v3007 = vand.u32 %v155, 4294901760
    %v3008 = vsub.f32 %v155, %v3007
    %v3009 = vand.u32 %v3008, 4294901760
    %v3010 = vsub.f32 %v3008, %v3009
    %v3011 = vand.u32 %v3010, 4294901760
    %3012 = vmatpush1.msra.mxu0 %v3011
    %3013 = vmatprep.subr.mxu0 0.0
    %v3014 = vand.u32 %v156, 4294901760
    %v3015 = vsub.f32 %v156, %v3014
    %v3016 = vand.u32 %v3015, 4294901760
    %v3017 = vsub.f32 %v3015, %v3016
    %v3018 = vand.u32 %v3017, 4294901760
    %3019 = vmatpush1.msra.mxu0 %v3018
    %3020 = vmatprep.subr.mxu0 0.0
    %v3021 = vand.u32 %v157, 4294901760
    %v3022 = vsub.f32 %v157, %v3021
    %v3023 = vand.u32 %v3022, 4294901760
    %v3024 = vsub.f32 %v3022, %v3023
    %v3025 = vand.u32 %v3024, 4294901760
    %3026 = vmatpush1.msra.mxu0 %v3025
    %3027 = vmatprep.subr.mxu0 0.0
    %v3028 = vand.u32 %v158, 4294901760
    %v3029 = vsub.f32 %v158, %v3028
    %v3030 = vand.u32 %v3029, 4294901760
    %v3031 = vsub.f32 %v3029, %v3030
    %v3032 = vand.u32 %v3031, 4294901760
    %3033 = vmatpush1.msra.mxu0 %v3032
    %3034 = vmatprep.subr.mxu0 0.0
    %v3035 = vand.u32 %v159, 4294901760
    %v3036 = vsub.f32 %v159, %v3035
    %v3037 = vand.u32 %v3036, 4294901760
    %v3038 = vsub.f32 %v3036, %v3037
    %v3039 = vand.u32 %v3038, 4294901760
    %3040 = vmatpush1.msra.mxu0 %v3039
    %3041 = vmatprep.subr.mxu0 0.0
    %v3042 = vand.u32 %v160, 4294901760
    %v3043 = vsub.f32 %v160, %v3042
    %v3044 = vand.u32 %v3043, 4294901760
    %v3045 = vsub.f32 %v3043, %v3044
    %v3046 = vand.u32 %v3045, 4294901760
    %3047 = vmatpush1.msra.mxu0 %v3046
    %3048 = vmatprep.subr.mxu0 0.0
    %v3049 = vand.u32 %v161, 4294901760
    %v3050 = vsub.f32 %v161, %v3049
    %v3051 = vand.u32 %v3050, 4294901760
    %v3052 = vsub.f32 %v3050, %v3051
    %v3053 = vand.u32 %v3052, 4294901760
    %3054 = vmatpush1.msra.mxu0 %v3053
    %3055 = vmatprep.subr.mxu0 0.0
    %v3056 = vand.u32 %v162, 4294901760
    %v3057 = vsub.f32 %v162, %v3056
    %v3058 = vand.u32 %v3057, 4294901760
    %v3059 = vsub.f32 %v3057, %v3058
    %v3060 = vand.u32 %v3059, 4294901760
    %3061 = vmatpush1.msra.mxu0 %v3060
    %3062 = vmatprep.subr.mxu0 0.0
    %v3063 = vand.u32 %v163, 4294901760
    %v3064 = vsub.f32 %v163, %v3063
    %v3065 = vand.u32 %v3064, 4294901760
    %v3066 = vsub.f32 %v3064, %v3065
    %v3067 = vand.u32 %v3066, 4294901760
    %3068 = vmatpush1.msra.mxu0 %v3067
    %3069 = vmatprep.subr.mxu0 0.0
    %v3070 = vand.u32 %v164, 4294901760
    %v3071 = vsub.f32 %v164, %v3070
    %v3072 = vand.u32 %v3071, 4294901760
    %v3073 = vsub.f32 %v3071, %v3072
    %v3074 = vand.u32 %v3073, 4294901760
    %3075 = vmatpush1.msra.mxu0 %v3074
    %3076 = vmatprep.subr.mxu0 0.0
    %v3077 = vand.u32 %v165, 4294901760
    %v3078 = vsub.f32 %v165, %v3077
    %v3079 = vand.u32 %v3078, 4294901760
    %v3080 = vsub.f32 %v3078, %v3079
    %v3081 = vand.u32 %v3080, 4294901760
    %3082 = vmatpush1.msra.mxu0 %v3081
    %3083 = vmatprep.subr.mxu0 0.0
    %v3084 = vand.u32 %v166, 4294901760
    %v3085 = vsub.f32 %v166, %v3084
    %v3086 = vand.u32 %v3085, 4294901760
    %v3087 = vsub.f32 %v3085, %v3086
    %v3088 = vand.u32 %v3087, 4294901760
    %3089 = vmatpush1.msra.mxu0 %v3088
    %3090 = vmatprep.subr.mxu0 0.0
    %v3091 = vand.u32 %v167, 4294901760
    %v3092 = vsub.f32 %v167, %v3091
    %v3093 = vand.u32 %v3092, 4294901760
    %v3094 = vsub.f32 %v3092, %v3093
    %v3095 = vand.u32 %v3094, 4294901760
    %3096 = vmatpush1.msra.mxu0 %v3095
    %3097 = vmatprep.subr.mxu0 0.0
    %v3098 = vand.u32 %v168, 4294901760
    %v3099 = vsub.f32 %v168, %v3098
    %v3100 = vand.u32 %v3099, 4294901760
    %v3101 = vsub.f32 %v3099, %v3100
    %v3102 = vand.u32 %v3101, 4294901760
    %3103 = vmatpush1.msra.mxu0 %v3102
    %3104 = vmatprep.subr.mxu0 0.0
    %v3105 = vand.u32 %v169, 4294901760
    %v3106 = vsub.f32 %v169, %v3105
    %v3107 = vand.u32 %v3106, 4294901760
    %v3108 = vsub.f32 %v3106, %v3107
    %v3109 = vand.u32 %v3108, 4294901760
    %3110 = vmatpush1.msra.mxu0 %v3109
    %3111 = vmatprep.subr.mxu0 0.0
    %v3112 = vand.u32 %v170, 4294901760
    %v3113 = vsub.f32 %v170, %v3112
    %v3114 = vand.u32 %v3113, 4294901760
    %v3115 = vsub.f32 %v3113, %v3114
    %v3116 = vand.u32 %v3115, 4294901760
    %3117 = vmatpush1.msra.mxu0 %v3116
    %3118 = vmatprep.subr.mxu0 0.0
    %v3119 = vand.u32 %v171, 4294901760
    %v3120 = vsub.f32 %v171, %v3119
    %v3121 = vand.u32 %v3120, 4294901760
    %v3122 = vsub.f32 %v3120, %v3121
    %v3123 = vand.u32 %v3122, 4294901760
    %3124 = vmatpush1.msra.mxu0 %v3123
    %3125 = vmatprep.subr.mxu0 0.0
    %v3126 = vand.u32 %v172, 4294901760
    %v3127 = vsub.f32 %v172, %v3126
    %v3128 = vand.u32 %v3127, 4294901760
    %v3129 = vsub.f32 %v3127, %v3128
    %v3130 = vand.u32 %v3129, 4294901760
    %3131 = vmatpush1.msra.mxu0 %v3130
    %3132 = vmatprep.subr.mxu0 0.0
    %v3133 = vand.u32 %v173, 4294901760
    %v3134 = vsub.f32 %v173, %v3133
    %v3135 = vand.u32 %v3134, 4294901760
    %v3136 = vsub.f32 %v3134, %v3135
    %v3137 = vand.u32 %v3136, 4294901760
    %3138 = vmatpush1.msra.mxu0 %v3137
    %3139 = vmatprep.subr.mxu0 0.0
    %v3140 = vand.u32 %v174, 4294901760
    %v3141 = vsub.f32 %v174, %v3140
    %v3142 = vand.u32 %v3141, 4294901760
    %v3143 = vsub.f32 %v3141, %v3142
    %v3144 = vand.u32 %v3143, 4294901760
    %3145 = vmatpush1.msra.mxu0 %v3144
    %v3146 = vand.u32 %v217, 4294901760
    %3147 = vmatprep.mubr.f32.mxu0 %v3146
    %v3148 = vand.u32 %v45, 4294901760
    %3149 = vmatmul.mubr.f32.gmra.mrb[0].mxu0 %v3148
    %v3150 = vpop.f32.mrb[0].mxu0
    %v3151 = vadd.f32 %v2919, %v3150
    %v3152 = vpop.f32.mrb[0].mxu0
    %3153 = vdwg.mxu0
    %3154 = vmatprep.subr.mxu0 0.0
    %v3155 = vand.u32 %v143, 4294901760
    %v3156 = vsub.f32 %v143, %v3155
    %3157 = vmatpush1.msra.mxu0 %v3156
    %3158 = vmatprep.subr.mxu0 0.0
    %v3159 = vand.u32 %v144, 4294901760
    %v3160 = vsub.f32 %v144, %v3159
    %3161 = vmatpush1.msra.mxu0 %v3160
    %3162 = vmatprep.subr.mxu0 0.0
    %v3163 = vand.u32 %v145, 4294901760
    %v3164 = vsub.f32 %v145, %v3163
    %3165 = vmatpush1.msra.mxu0 %v3164
    %3166 = vmatprep.subr.mxu0 0.0
    %v3167 = vand.u32 %v146, 4294901760
    %v3168 = vsub.f32 %v146, %v3167
    %3169 = vmatpush1.msra.mxu0 %v3168
    %3170 = vmatprep.subr.mxu0 0.0
    %v3171 = vand.u32 %v147, 4294901760
    %v3172 = vsub.f32 %v147, %v3171
    %3173 = vmatpush1.msra.mxu0 %v3172
    %3174 = vmatprep.subr.mxu0 0.0
    %v3175 = vand.u32 %v148, 4294901760
    %v3176 = vsub.f32 %v148, %v3175
    %3177 = vmatpush1.msra.mxu0 %v3176
    %3178 = vmatprep.subr.mxu0 0.0
    %v3179 = vand.u32 %v149, 4294901760
    %v3180 = vsub.f32 %v149, %v3179
    %3181 = vmatpush1.msra.mxu0 %v3180
    %3182 = vmatprep.subr.mxu0 0.0
    %v3183 = vand.u32 %v150, 4294901760
    %v3184 = vsub.f32 %v150, %v3183
    %3185 = vmatpush1.msra.mxu0 %v3184
    %3186 = vmatprep.subr.mxu0 0.0
    %v3187 = vand.u32 %v151, 4294901760
    %v3188 = vsub.f32 %v151, %v3187
    %3189 = vmatpush1.msra.mxu0 %v3188
    %3190 = vmatprep.subr.mxu0 0.0
    %v3191 = vand.u32 %v152, 4294901760
    %v3192 = vsub.f32 %v152, %v3191
    %3193 = vmatpush1.msra.mxu0 %v3192
    %3194 = vmatprep.subr.mxu0 0.0
    %v3195 = vand.u32 %v153, 4294901760
    %v3196 = vsub.f32 %v153, %v3195
    %3197 = vmatpush1.msra.mxu0 %v3196
    %3198 = vmatprep.subr.mxu0 0.0
    %v3199 = vand.u32 %v154, 4294901760
    %v3200 = vsub.f32 %v154, %v3199
    %3201 = vmatpush1.msra.mxu0 %v3200
    %3202 = vmatprep.subr.mxu0 0.0
    %v3203 = vand.u32 %v155, 4294901760
    %v3204 = vsub.f32 %v155, %v3203
    %3205 = vmatpush1.msra.mxu0 %v3204
    %3206 = vmatprep.subr.mxu0 0.0
    %v3207 = vand.u32 %v156, 4294901760
    %v3208 = vsub.f32 %v156, %v3207
    %3209 = vmatpush1.msra.mxu0 %v3208
    %3210 = vmatprep.subr.mxu0 0.0
    %v3211 = vand.u32 %v157, 4294901760
    %v3212 = vsub.f32 %v157, %v3211
    %3213 = vmatpush1.msra.mxu0 %v3212
    %3214 = vmatprep.subr.mxu0 0.0
    %v3215 = vand.u32 %v158, 4294901760
    %v3216 = vsub.f32 %v158, %v3215
    %3217 = vmatpush1.msra.mxu0 %v3216
    %3218 = vmatprep.subr.mxu0 0.0
    %v3219 = vand.u32 %v159, 4294901760
    %v3220 = vsub.f32 %v159, %v3219
    %3221 = vmatpush1.msra.mxu0 %v3220
    %3222 = vmatprep.subr.mxu0 0.0
    %v3223 = vand.u32 %v160, 4294901760
    %v3224 = vsub.f32 %v160, %v3223
    %3225 = vmatpush1.msra.mxu0 %v3224
    %3226 = vmatprep.subr.mxu0 0.0
    %v3227 = vand.u32 %v161, 4294901760
    %v3228 = vsub.f32 %v161, %v3227
    %3229 = vmatpush1.msra.mxu0 %v3228
    %3230 = vmatprep.subr.mxu0 0.0
    %v3231 = vand.u32 %v162, 4294901760
    %v3232 = vsub.f32 %v162, %v3231
    %3233 = vmatpush1.msra.mxu0 %v3232
    %3234 = vmatprep.subr.mxu0 0.0
    %v3235 = vand.u32 %v163, 4294901760
    %v3236 = vsub.f32 %v163, %v3235
    %3237 = vmatpush1.msra.mxu0 %v3236
    %3238 = vmatprep.subr.mxu0 0.0
    %v3239 = vand.u32 %v164, 4294901760
    %v3240 = vsub.f32 %v164, %v3239
    %3241 = vmatpush1.msra.mxu0 %v3240
    %3242 = vmatprep.subr.mxu0 0.0
    %v3243 = vand.u32 %v165, 4294901760
    %v3244 = vsub.f32 %v165, %v3243
    %3245 = vmatpush1.msra.mxu0 %v3244
    %3246 = vmatprep.subr.mxu0 0.0
    %v3247 = vand.u32 %v166, 4294901760
    %v3248 = vsub.f32 %v166, %v3247
    %3249 = vmatpush1.msra.mxu0 %v3248
    %3250 = vmatprep.subr.mxu0 0.0
    %v3251 = vand.u32 %v167, 4294901760
    %v3252 = vsub.f32 %v167, %v3251
    %3253 = vmatpush1.msra.mxu0 %v3252
    %3254 = vmatprep.subr.mxu0 0.0
    %v3255 = vand.u32 %v168, 4294901760
    %v3256 = vsub.f32 %v168, %v3255
    %3257 = vmatpush1.msra.mxu0 %v3256
    %3258 = vmatprep.subr.mxu0 0.0
    %v3259 = vand.u32 %v169, 4294901760
    %v3260 = vsub.f32 %v169, %v3259
    %3261 = vmatpush1.msra.mxu0 %v3260
    %3262 = vmatprep.subr.mxu0 0.0
    %v3263 = vand.u32 %v170, 4294901760
    %v3264 = vsub.f32 %v170, %v3263
    %3265 = vmatpush1.msra.mxu0 %v3264
    %3266 = vmatprep.subr.mxu0 0.0
    %v3267 = vand.u32 %v171, 4294901760
    %v3268 = vsub.f32 %v171, %v3267
    %3269 = vmatpush1.msra.mxu0 %v3268
    %3270 = vmatprep.subr.mxu0 0.0
    %v3271 = vand.u32 %v172, 4294901760
    %v3272 = vsub.f32 %v172, %v3271
    %3273 = vmatpush1.msra.mxu0 %v3272
    %3274 = vmatprep.subr.mxu0 0.0
    %v3275 = vand.u32 %v173, 4294901760
    %v3276 = vsub.f32 %v173, %v3275
    %3277 = vmatpush1.msra.mxu0 %v3276
    %3278 = vmatprep.subr.mxu0 0.0
    %v3279 = vand.u32 %v174, 4294901760
    %v3280 = vsub.f32 %v174, %v3279
    %3281 = vmatpush1.msra.mxu0 %v3280
    %v3282 = vand.u32 %v217, 4294901760
    %v3283 = vsub.f32 %v217, %v3282
    %3284 = vmatprep.mubr.f32.mxu0 %v3283
    %v3285 = vand.u32 %v45, 4294901760
    %v3286 = vsub.f32 %v45, %v3285
    %3287 = vmatmul.mubr.f32.gmra.mrb[0].mxu0 %v3286
    %v3288 = vpop.f32.mrb[0].mxu0
    %v3289 = vadd.f32 %v3151, %v3288
    %v3290 = vpop.f32.mrb[0].mxu0
    %3291 = vdwg.mxu0
    %3292 = vmatprep.subr.mxu0 0.0
    %v3293 = vand.u32 %v143, 4294901760
    %3294 = vmatpush1.msra.mxu0 %v3293
    %3295 = vmatprep.subr.mxu0 0.0
    %v3296 = vand.u32 %v144, 4294901760
    %3297 = vmatpush1.msra.mxu0 %v3296
    %3298 = vmatprep.subr.mxu0 0.0
    %v3299 = vand.u32 %v145, 4294901760
    %3300 = vmatpush1.msra.mxu0 %v3299
    %3301 = vmatprep.subr.mxu0 0.0
    %v3302 = vand.u32 %v146, 4294901760
    %3303 = vmatpush1.msra.mxu0 %v3302
    %3304 = vmatprep.subr.mxu0 0.0
    %v3305 = vand.u32 %v147, 4294901760
    %3306 = vmatpush1.msra.mxu0 %v3305
    %3307 = vmatprep.subr.mxu0 0.0
    %v3308 = vand.u32 %v148, 4294901760
    %3309 = vmatpush1.msra.mxu0 %v3308
    %3310 = vmatprep.subr.mxu0 0.0
    %v3311 = vand.u32 %v149, 4294901760
    %3312 = vmatpush1.msra.mxu0 %v3311
    %3313 = vmatprep.subr.mxu0 0.0
    %v3314 = vand.u32 %v150, 4294901760
    %3315 = vmatpush1.msra.mxu0 %v3314
    %3316 = vmatprep.subr.mxu0 0.0
    %v3317 = vand.u32 %v151, 4294901760
    %3318 = vmatpush1.msra.mxu0 %v3317
    %3319 = vmatprep.subr.mxu0 0.0
    %v3320 = vand.u32 %v152, 4294901760
    %3321 = vmatpush1.msra.mxu0 %v3320
    %3322 = vmatprep.subr.mxu0 0.0
    %v3323 = vand.u32 %v153, 4294901760
    %3324 = vmatpush1.msra.mxu0 %v3323
    %3325 = vmatprep.subr.mxu0 0.0
    %v3326 = vand.u32 %v154, 4294901760
    %3327 = vmatpush1.msra.mxu0 %v3326
    %3328 = vmatprep.subr.mxu0 0.0
    %v3329 = vand.u32 %v155, 4294901760
    %3330 = vmatpush1.msra.mxu0 %v3329
    %3331 = vmatprep.subr.mxu0 0.0
    %v3332 = vand.u32 %v156, 4294901760
    %3333 = vmatpush1.msra.mxu0 %v3332
    %3334 = vmatprep.subr.mxu0 0.0
    %v3335 = vand.u32 %v157, 4294901760
    %3336 = vmatpush1.msra.mxu0 %v3335
    %3337 = vmatprep.subr.mxu0 0.0
    %v3338 = vand.u32 %v158, 4294901760
    %3339 = vmatpush1.msra.mxu0 %v3338
    %3340 = vmatprep.subr.mxu0 0.0
    %v3341 = vand.u32 %v159, 4294901760
    %3342 = vmatpush1.msra.mxu0 %v3341
    %3343 = vmatprep.subr.mxu0 0.0
    %v3344 = vand.u32 %v160, 4294901760
    %3345 = vmatpush1.msra.mxu0 %v3344
    %3346 = vmatprep.subr.mxu0 0.0
    %v3347 = vand.u32 %v161, 4294901760
    %3348 = vmatpush1.msra.mxu0 %v3347
    %3349 = vmatprep.subr.mxu0 0.0
    %v3350 = vand.u32 %v162, 4294901760
    %3351 = vmatpush1.msra.mxu0 %v3350
    %3352 = vmatprep.subr.mxu0 0.0
    %v3353 = vand.u32 %v163, 4294901760
    %3354 = vmatpush1.msra.mxu0 %v3353
    %3355 = vmatprep.subr.mxu0 0.0
    %v3356 = vand.u32 %v164, 4294901760
    %3357 = vmatpush1.msra.mxu0 %v3356
    %3358 = vmatprep.subr.mxu0 0.0
    %v3359 = vand.u32 %v165, 4294901760
    %3360 = vmatpush1.msra.mxu0 %v3359
    %3361 = vmatprep.subr.mxu0 0.0
    %v3362 = vand.u32 %v166, 4294901760
    %3363 = vmatpush1.msra.mxu0 %v3362
    %3364 = vmatprep.subr.mxu0 0.0
    %v3365 = vand.u32 %v167, 4294901760
    %3366 = vmatpush1.msra.mxu0 %v3365
    %3367 = vmatprep.subr.mxu0 0.0
    %v3368 = vand.u32 %v168, 4294901760
    %3369 = vmatpush1.msra.mxu0 %v3368
    %3370 = vmatprep.subr.mxu0 0.0
    %v3371 = vand.u32 %v169, 4294901760
    %3372 = vmatpush1.msra.mxu0 %v3371
    %3373 = vmatprep.subr.mxu0 0.0
    %v3374 = vand.u32 %v170, 4294901760
    %3375 = vmatpush1.msra.mxu0 %v3374
    %3376 = vmatprep.subr.mxu0 0.0
    %v3377 = vand.u32 %v171, 4294901760
    %3378 = vmatpush1.msra.mxu0 %v3377
    %3379 = vmatprep.subr.mxu0 0.0
    %v3380 = vand.u32 %v172, 4294901760
    %3381 = vmatpush1.msra.mxu0 %v3380
    %3382 = vmatprep.subr.mxu0 0.0
    %v3383 = vand.u32 %v173, 4294901760
    %3384 = vmatpush1.msra.mxu0 %v3383
    %3385 = vmatprep.subr.mxu0 0.0
    %v3386 = vand.u32 %v174, 4294901760
    %3387 = vmatpush1.msra.mxu0 %v3386
    %v3388 = vand.u32 %v217, 4294901760
    %v3389 = vsub.f32 %v217, %v3388
    %v3390 = vand.u32 %v3389, 4294901760
    %3391 = vmatprep.mubr.f32.mxu0 %v3390
    %v3392 = vand.u32 %v45, 4294901760
    %v3393 = vsub.f32 %v45, %v3392
    %v3394 = vand.u32 %v3393, 4294901760
    %3395 = vmatmul.mubr.f32.gmra.mrb[0].mxu0 %v3394
    %v3396 = vpop.f32.mrb[0].mxu0
    %v3397 = vadd.f32 %v3289, %v3396
    %v3398 = vpop.f32.mrb[0].mxu0
    %3399 = vdwg.mxu0
    %3400 = vmatprep.subr.mxu0 0.0
    %v3401 = vand.u32 %v143, 4294901760
    %v3402 = vsub.f32 %v143, %v3401
    %v3403 = vand.u32 %v3402, 4294901760
    %3404 = vmatpush1.msra.mxu0 %v3403
    %3405 = vmatprep.subr.mxu0 0.0
    %v3406 = vand.u32 %v144, 4294901760
    %v3407 = vsub.f32 %v144, %v3406
    %v3408 = vand.u32 %v3407, 4294901760
    %3409 = vmatpush1.msra.mxu0 %v3408
    %3410 = vmatprep.subr.mxu0 0.0
    %v3411 = vand.u32 %v145, 4294901760
    %v3412 = vsub.f32 %v145, %v3411
    %v3413 = vand.u32 %v3412, 4294901760
    %3414 = vmatpush1.msra.mxu0 %v3413
    %3415 = vmatprep.subr.mxu0 0.0
    %v3416 = vand.u32 %v146, 4294901760
    %v3417 = vsub.f32 %v146, %v3416
    %v3418 = vand.u32 %v3417, 4294901760
    %3419 = vmatpush1.msra.mxu0 %v3418
    %3420 = vmatprep.subr.mxu0 0.0
    %v3421 = vand.u32 %v147, 4294901760
    %v3422 = vsub.f32 %v147, %v3421
    %v3423 = vand.u32 %v3422, 4294901760
    %3424 = vmatpush1.msra.mxu0 %v3423
    %3425 = vmatprep.subr.mxu0 0.0
    %v3426 = vand.u32 %v148, 4294901760
    %v3427 = vsub.f32 %v148, %v3426
    %v3428 = vand.u32 %v3427, 4294901760
    %3429 = vmatpush1.msra.mxu0 %v3428
    %3430 = vmatprep.subr.mxu0 0.0
    %v3431 = vand.u32 %v149, 4294901760
    %v3432 = vsub.f32 %v149, %v3431
    %v3433 = vand.u32 %v3432, 4294901760
    %3434 = vmatpush1.msra.mxu0 %v3433
    %3435 = vmatprep.subr.mxu0 0.0
    %v3436 = vand.u32 %v150, 4294901760
    %v3437 = vsub.f32 %v150, %v3436
    %v3438 = vand.u32 %v3437, 4294901760
    %3439 = vmatpush1.msra.mxu0 %v3438
    %3440 = vmatprep.subr.mxu0 0.0
    %v3441 = vand.u32 %v151, 4294901760
    %v3442 = vsub.f32 %v151, %v3441
    %v3443 = vand.u32 %v3442, 4294901760
    %3444 = vmatpush1.msra.mxu0 %v3443
    %3445 = vmatprep.subr.mxu0 0.0
    %v3446 = vand.u32 %v152, 4294901760
    %v3447 = vsub.f32 %v152, %v3446
    %v3448 = vand.u32 %v3447, 4294901760
    %3449 = vmatpush1.msra.mxu0 %v3448
    %3450 = vmatprep.subr.mxu0 0.0
    %v3451 = vand.u32 %v153, 4294901760
    %v3452 = vsub.f32 %v153, %v3451
    %v3453 = vand.u32 %v3452, 4294901760
    %3454 = vmatpush1.msra.mxu0 %v3453
    %3455 = vmatprep.subr.mxu0 0.0
    %v3456 = vand.u32 %v154, 4294901760
    %v3457 = vsub.f32 %v154, %v3456
    %v3458 = vand.u32 %v3457, 4294901760
    %3459 = vmatpush1.msra.mxu0 %v3458
    %3460 = vmatprep.subr.mxu0 0.0
    %v3461 = vand.u32 %v155, 4294901760
    %v3462 = vsub.f32 %v155, %v3461
    %v3463 = vand.u32 %v3462, 4294901760
    %3464 = vmatpush1.msra.mxu0 %v3463
    %3465 = vmatprep.subr.mxu0 0.0
    %v3466 = vand.u32 %v156, 4294901760
    %v3467 = vsub.f32 %v156, %v3466
    %v3468 = vand.u32 %v3467, 4294901760
    %3469 = vmatpush1.msra.mxu0 %v3468
    %3470 = vmatprep.subr.mxu0 0.0
    %v3471 = vand.u32 %v157, 4294901760
    %v3472 = vsub.f32 %v157, %v3471
    %v3473 = vand.u32 %v3472, 4294901760
    %3474 = vmatpush1.msra.mxu0 %v3473
    %3475 = vmatprep.subr.mxu0 0.0
    %v3476 = vand.u32 %v158, 4294901760
    %v3477 = vsub.f32 %v158, %v3476
    %v3478 = vand.u32 %v3477, 4294901760
    %3479 = vmatpush1.msra.mxu0 %v3478
    %3480 = vmatprep.subr.mxu0 0.0
    %v3481 = vand.u32 %v159, 4294901760
    %v3482 = vsub.f32 %v159, %v3481
    %v3483 = vand.u32 %v3482, 4294901760
    %3484 = vmatpush1.msra.mxu0 %v3483
    %3485 = vmatprep.subr.mxu0 0.0
    %v3486 = vand.u32 %v160, 4294901760
    %v3487 = vsub.f32 %v160, %v3486
    %v3488 = vand.u32 %v3487, 4294901760
    %3489 = vmatpush1.msra.mxu0 %v3488
    %3490 = vmatprep.subr.mxu0 0.0
    %v3491 = vand.u32 %v161, 4294901760
    %v3492 = vsub.f32 %v161, %v3491
    %v3493 = vand.u32 %v3492, 4294901760
    %3494 = vmatpush1.msra.mxu0 %v3493
    %3495 = vmatprep.subr.mxu0 0.0
    %v3496 = vand.u32 %v162, 4294901760
    %v3497 = vsub.f32 %v162, %v3496
    %v3498 = vand.u32 %v3497, 4294901760
    %3499 = vmatpush1.msra.mxu0 %v3498
    %3500 = vmatprep.subr.mxu0 0.0
    %v3501 = vand.u32 %v163, 4294901760
    %v3502 = vsub.f32 %v163, %v3501
    %v3503 = vand.u32 %v3502, 4294901760
    %3504 = vmatpush1.msra.mxu0 %v3503
    %3505 = vmatprep.subr.mxu0 0.0
    %v3506 = vand.u32 %v164, 4294901760
    %v3507 = vsub.f32 %v164, %v3506
    %v3508 = vand.u32 %v3507, 4294901760
    %3509 = vmatpush1.msra.mxu0 %v3508
    %3510 = vmatprep.subr.mxu0 0.0
    %v3511 = vand.u32 %v165, 4294901760
    %v3512 = vsub.f32 %v165, %v3511
    %v3513 = vand.u32 %v3512, 4294901760
    %3514 = vmatpush1.msra.mxu0 %v3513
    %3515 = vmatprep.subr.mxu0 0.0
    %v3516 = vand.u32 %v166, 4294901760
    %v3517 = vsub.f32 %v166, %v3516
    %v3518 = vand.u32 %v3517, 4294901760
    %3519 = vmatpush1.msra.mxu0 %v3518
    %3520 = vmatprep.subr.mxu0 0.0
    %v3521 = vand.u32 %v167, 4294901760
    %v3522 = vsub.f32 %v167, %v3521
    %v3523 = vand.u32 %v3522, 4294901760
    %3524 = vmatpush1.msra.mxu0 %v3523
    %3525 = vmatprep.subr.mxu0 0.0
    %v3526 = vand.u32 %v168, 4294901760
    %v3527 = vsub.f32 %v168, %v3526
    %v3528 = vand.u32 %v3527, 4294901760
    %3529 = vmatpush1.msra.mxu0 %v3528
    %3530 = vmatprep.subr.mxu0 0.0
    %v3531 = vand.u32 %v169, 4294901760
    %v3532 = vsub.f32 %v169, %v3531
    %v3533 = vand.u32 %v3532, 4294901760
    %3534 = vmatpush1.msra.mxu0 %v3533
    %3535 = vmatprep.subr.mxu0 0.0
    %v3536 = vand.u32 %v170, 4294901760
    %v3537 = vsub.f32 %v170, %v3536
    %v3538 = vand.u32 %v3537, 4294901760
    %3539 = vmatpush1.msra.mxu0 %v3538
    %3540 = vmatprep.subr.mxu0 0.0
    %v3541 = vand.u32 %v171, 4294901760
    %v3542 = vsub.f32 %v171, %v3541
    %v3543 = vand.u32 %v3542, 4294901760
    %3544 = vmatpush1.msra.mxu0 %v3543
    %3545 = vmatprep.subr.mxu0 0.0
    %v3546 = vand.u32 %v172, 4294901760
    %v3547 = vsub.f32 %v172, %v3546
    %v3548 = vand.u32 %v3547, 4294901760
    %3549 = vmatpush1.msra.mxu0 %v3548
    %3550 = vmatprep.subr.mxu0 0.0
    %v3551 = vand.u32 %v173, 4294901760
    %v3552 = vsub.f32 %v173, %v3551
    %v3553 = vand.u32 %v3552, 4294901760
    %3554 = vmatpush1.msra.mxu0 %v3553
    %3555 = vmatprep.subr.mxu0 0.0
    %v3556 = vand.u32 %v174, 4294901760
    %v3557 = vsub.f32 %v174, %v3556
    %v3558 = vand.u32 %v3557, 4294901760
    %3559 = vmatpush1.msra.mxu0 %v3558
    %v3560 = vand.u32 %v217, 4294901760
    %3561 = vmatprep.mubr.f32.mxu0 %v3560
    %v3562 = vand.u32 %v45, 4294901760
    %3563 = vmatmul.mubr.f32.gmra.mrb[0].mxu0 %v3562
    %v3564 = vpop.f32.mrb[0].mxu0
    %v3565 = vadd.f32 %v3397, %v3564
    %v3566 = vpop.f32.mrb[0].mxu0
    %3567 = vdwg.mxu0
    %3568 = vmatprep.subr.mxu0 0.0
    %v3569 = vand.u32 %v143, 4294901760
    %3570 = vmatpush1.msra.mxu0 %v3569
    %3571 = vmatprep.subr.mxu0 0.0
    %v3572 = vand.u32 %v144, 4294901760
    %3573 = vmatpush1.msra.mxu0 %v3572
    %3574 = vmatprep.subr.mxu0 0.0
    %v3575 = vand.u32 %v145, 4294901760
    %3576 = vmatpush1.msra.mxu0 %v3575
    %3577 = vmatprep.subr.mxu0 0.0
    %v3578 = vand.u32 %v146, 4294901760
    %3579 = vmatpush1.msra.mxu0 %v3578
    %3580 = vmatprep.subr.mxu0 0.0
    %v3581 = vand.u32 %v147, 4294901760
    %3582 = vmatpush1.msra.mxu0 %v3581
    %3583 = vmatprep.subr.mxu0 0.0
    %v3584 = vand.u32 %v148, 4294901760
    %3585 = vmatpush1.msra.mxu0 %v3584
    %3586 = vmatprep.subr.mxu0 0.0
    %v3587 = vand.u32 %v149, 4294901760
    %3588 = vmatpush1.msra.mxu0 %v3587
    %3589 = vmatprep.subr.mxu0 0.0
    %v3590 = vand.u32 %v150, 4294901760
    %3591 = vmatpush1.msra.mxu0 %v3590
    %3592 = vmatprep.subr.mxu0 0.0
    %v3593 = vand.u32 %v151, 4294901760
    %3594 = vmatpush1.msra.mxu0 %v3593
    %3595 = vmatprep.subr.mxu0 0.0
    %v3596 = vand.u32 %v152, 4294901760
    %3597 = vmatpush1.msra.mxu0 %v3596
    %3598 = vmatprep.subr.mxu0 0.0
    %v3599 = vand.u32 %v153, 4294901760
    %3600 = vmatpush1.msra.mxu0 %v3599
    %3601 = vmatprep.subr.mxu0 0.0
    %v3602 = vand.u32 %v154, 4294901760
    %3603 = vmatpush1.msra.mxu0 %v3602
    %3604 = vmatprep.subr.mxu0 0.0
    %v3605 = vand.u32 %v155, 4294901760
    %3606 = vmatpush1.msra.mxu0 %v3605
    %3607 = vmatprep.subr.mxu0 0.0
    %v3608 = vand.u32 %v156, 4294901760
    %3609 = vmatpush1.msra.mxu0 %v3608
    %3610 = vmatprep.subr.mxu0 0.0
    %v3611 = vand.u32 %v157, 4294901760
    %3612 = vmatpush1.msra.mxu0 %v3611
    %3613 = vmatprep.subr.mxu0 0.0
    %v3614 = vand.u32 %v158, 4294901760
    %3615 = vmatpush1.msra.mxu0 %v3614
    %3616 = vmatprep.subr.mxu0 0.0
    %v3617 = vand.u32 %v159, 4294901760
    %3618 = vmatpush1.msra.mxu0 %v3617
    %3619 = vmatprep.subr.mxu0 0.0
    %v3620 = vand.u32 %v160, 4294901760
    %3621 = vmatpush1.msra.mxu0 %v3620
    %3622 = vmatprep.subr.mxu0 0.0
    %v3623 = vand.u32 %v161, 4294901760
    %3624 = vmatpush1.msra.mxu0 %v3623
    %3625 = vmatprep.subr.mxu0 0.0
    %v3626 = vand.u32 %v162, 4294901760
    %3627 = vmatpush1.msra.mxu0 %v3626
    %3628 = vmatprep.subr.mxu0 0.0
    %v3629 = vand.u32 %v163, 4294901760
    %3630 = vmatpush1.msra.mxu0 %v3629
    %3631 = vmatprep.subr.mxu0 0.0
    %v3632 = vand.u32 %v164, 4294901760
    %3633 = vmatpush1.msra.mxu0 %v3632
    %3634 = vmatprep.subr.mxu0 0.0
    %v3635 = vand.u32 %v165, 4294901760
    %3636 = vmatpush1.msra.mxu0 %v3635
    %3637 = vmatprep.subr.mxu0 0.0
    %v3638 = vand.u32 %v166, 4294901760
    %3639 = vmatpush1.msra.mxu0 %v3638
    %3640 = vmatprep.subr.mxu0 0.0
    %v3641 = vand.u32 %v167, 4294901760
    %3642 = vmatpush1.msra.mxu0 %v3641
    %3643 = vmatprep.subr.mxu0 0.0
    %v3644 = vand.u32 %v168, 4294901760
    %3645 = vmatpush1.msra.mxu0 %v3644
    %3646 = vmatprep.subr.mxu0 0.0
    %v3647 = vand.u32 %v169, 4294901760
    %3648 = vmatpush1.msra.mxu0 %v3647
    %3649 = vmatprep.subr.mxu0 0.0
    %v3650 = vand.u32 %v170, 4294901760
    %3651 = vmatpush1.msra.mxu0 %v3650
    %3652 = vmatprep.subr.mxu0 0.0
    %v3653 = vand.u32 %v171, 4294901760
    %3654 = vmatpush1.msra.mxu0 %v3653
    %3655 = vmatprep.subr.mxu0 0.0
    %v3656 = vand.u32 %v172, 4294901760
    %3657 = vmatpush1.msra.mxu0 %v3656
    %3658 = vmatprep.subr.mxu0 0.0
    %v3659 = vand.u32 %v173, 4294901760
    %3660 = vmatpush1.msra.mxu0 %v3659
    %3661 = vmatprep.subr.mxu0 0.0
    %v3662 = vand.u32 %v174, 4294901760
    %3663 = vmatpush1.msra.mxu0 %v3662
    %v3664 = vand.u32 %v217, 4294901760
    %3665 = vmatprep.mubr.f32.mxu0 %v3664
    %v3666 = vand.u32 %v45, 4294901760
    %3667 = vmatmul.mubr.f32.gmra.mrb[0].mxu0 %v3666
    %v3668 = vpop.f32.mrb[0].mxu0
    %v3669 = vadd.f32 %v3565, %v3668
    %v3670 = vpop.f32.mrb[0].mxu0
    %3671 = vdwg.mxu0
    %3672 = vmatprep.subr.mxu0 0.0
    %v3673 = vand.u32 %v175, 4294901760
    %3674 = vmatpush1.msra.mxu0 %v3673
    %3675 = vmatprep.subr.mxu0 0.0
    %v3676 = vand.u32 %v176, 4294901760
    %3677 = vmatpush1.msra.mxu0 %v3676
    %3678 = vmatprep.subr.mxu0 0.0
    %v3679 = vand.u32 %v177, 4294901760
    %3680 = vmatpush1.msra.mxu0 %v3679
    %3681 = vmatprep.subr.mxu0 0.0
    %v3682 = vand.u32 %v178, 4294901760
    %3683 = vmatpush1.msra.mxu0 %v3682
    %3684 = vmatprep.subr.mxu0 0.0
    %v3685 = vand.u32 %v179, 4294901760
    %3686 = vmatpush1.msra.mxu0 %v3685
    %3687 = vmatprep.subr.mxu0 0.0
    %v3688 = vand.u32 %v180, 4294901760
    %3689 = vmatpush1.msra.mxu0 %v3688
    %3690 = vmatprep.subr.mxu0 0.0
    %v3691 = vand.u32 %v181, 4294901760
    %3692 = vmatpush1.msra.mxu0 %v3691
    %3693 = vmatprep.subr.mxu0 0.0
    %v3694 = vand.u32 %v182, 4294901760
    %3695 = vmatpush1.msra.mxu0 %v3694
    %3696 = vmatprep.subr.mxu0 0.0
    %v3697 = vand.u32 %v183, 4294901760
    %3698 = vmatpush1.msra.mxu0 %v3697
    %3699 = vmatprep.subr.mxu0 0.0
    %v3700 = vand.u32 %v184, 4294901760
    %3701 = vmatpush1.msra.mxu0 %v3700
    %3702 = vmatprep.subr.mxu0 0.0
    %v3703 = vand.u32 %v185, 4294901760
    %3704 = vmatpush1.msra.mxu0 %v3703
    %3705 = vmatprep.subr.mxu0 0.0
    %v3706 = vand.u32 %v186, 4294901760
    %3707 = vmatpush1.msra.mxu0 %v3706
    %3708 = vmatprep.subr.mxu0 0.0
    %v3709 = vand.u32 %v187, 4294901760
    %3710 = vmatpush1.msra.mxu0 %v3709
    %3711 = vmatprep.subr.mxu0 0.0
    %v3712 = vand.u32 %v188, 4294901760
    %3713 = vmatpush1.msra.mxu0 %v3712
    %3714 = vmatprep.subr.mxu0 0.0
    %v3715 = vand.u32 %v189, 4294901760
    %3716 = vmatpush1.msra.mxu0 %v3715
    %3717 = vmatprep.subr.mxu0 0.0
    %v3718 = vand.u32 %v190, 4294901760
    %3719 = vmatpush1.msra.mxu0 %v3718
    %3720 = vmatprep.subr.mxu0 0.0
    %v3721 = vand.u32 %v191, 4294901760
    %3722 = vmatpush1.msra.mxu0 %v3721
    %3723 = vmatprep.subr.mxu0 0.0
    %v3724 = vand.u32 %v192, 4294901760
    %3725 = vmatpush1.msra.mxu0 %v3724
    %3726 = vmatprep.subr.mxu0 0.0
    %v3727 = vand.u32 %v193, 4294901760
    %3728 = vmatpush1.msra.mxu0 %v3727
    %3729 = vmatprep.subr.mxu0 0.0
    %v3730 = vand.u32 %v194, 4294901760
    %3731 = vmatpush1.msra.mxu0 %v3730
    %3732 = vmatprep.subr.mxu0 0.0
    %v3733 = vand.u32 %v195, 4294901760
    %3734 = vmatpush1.msra.mxu0 %v3733
    %3735 = vmatprep.subr.mxu0 0.0
    %v3736 = vand.u32 %v196, 4294901760
    %3737 = vmatpush1.msra.mxu0 %v3736
    %3738 = vmatprep.subr.mxu0 0.0
    %v3739 = vand.u32 %v197, 4294901760
    %3740 = vmatpush1.msra.mxu0 %v3739
    %3741 = vmatprep.subr.mxu0 0.0
    %v3742 = vand.u32 %v198, 4294901760
    %3743 = vmatpush1.msra.mxu0 %v3742
    %3744 = vmatprep.subr.mxu0 0.0
    %v3745 = vand.u32 %v199, 4294901760
    %3746 = vmatpush1.msra.mxu0 %v3745
    %3747 = vmatprep.subr.mxu0 0.0
    %v3748 = vand.u32 %v200, 4294901760
    %3749 = vmatpush1.msra.mxu0 %v3748
    %3750 = vmatprep.subr.mxu0 0.0
    %v3751 = vand.u32 %v201, 4294901760
    %3752 = vmatpush1.msra.mxu0 %v3751
    %3753 = vmatprep.subr.mxu0 0.0
    %v3754 = vand.u32 %v202, 4294901760
    %3755 = vmatpush1.msra.mxu0 %v3754
    %3756 = vmatprep.subr.mxu0 0.0
    %v3757 = vand.u32 %v203, 4294901760
    %3758 = vmatpush1.msra.mxu0 %v3757
    %3759 = vmatprep.subr.mxu0 0.0
    %v3760 = vand.u32 %v204, 4294901760
    %3761 = vmatpush1.msra.mxu0 %v3760
    %3762 = vmatprep.subr.mxu0 0.0
    %v3763 = vand.u32 %v205, 4294901760
    %3764 = vmatpush1.msra.mxu0 %v3763
    %3765 = vmatprep.subr.mxu0 0.0
    %v3766 = vand.u32 %v206, 4294901760
    %3767 = vmatpush1.msra.mxu0 %v3766
    %v3768 = vand.u32 %v218, 4294901760
    %v3769 = vsub.f32 %v218, %v3768
    %v3770 = vand.u32 %v3769, 4294901760
    %v3771 = vsub.f32 %v3769, %v3770
    %v3772 = vand.u32 %v3771, 4294901760
    %3773 = vmatprep.mubr.f32.mxu0 %v3772
    %v3774 = vand.u32 %v46, 4294901760
    %v3775 = vsub.f32 %v46, %v3774
    %v3776 = vand.u32 %v3775, 4294901760
    %v3777 = vsub.f32 %v3775, %v3776
    %v3778 = vand.u32 %v3777, 4294901760
    %3779 = vmatmul.mubr.f32.gmra.mrb[0].mxu0 %v3778
    %v3780 = vpop.f32.mrb[0].mxu0
    %v3781 = vadd.f32 %v3669, %v3780
    %v3782 = vpop.f32.mrb[0].mxu0
    %3783 = vdwg.mxu0
    %3784 = vmatprep.subr.mxu0 0.0
    %v3785 = vand.u32 %v175, 4294901760
    %v3786 = vsub.f32 %v175, %v3785
    %v3787 = vand.u32 %v3786, 4294901760
    %v3788 = vsub.f32 %v3786, %v3787
    %v3789 = vand.u32 %v3788, 4294901760
    %3790 = vmatpush1.msra.mxu0 %v3789
    %3791 = vmatprep.subr.mxu0 0.0
    %v3792 = vand.u32 %v176, 4294901760
    %v3793 = vsub.f32 %v176, %v3792
    %v3794 = vand.u32 %v3793, 4294901760
    %v3795 = vsub.f32 %v3793, %v3794
    %v3796 = vand.u32 %v3795, 4294901760
    %3797 = vmatpush1.msra.mxu0 %v3796
    %3798 = vmatprep.subr.mxu0 0.0
    %v3799 = vand.u32 %v177, 4294901760
    %v3800 = vsub.f32 %v177, %v3799
    %v3801 = vand.u32 %v3800, 4294901760
    %v3802 = vsub.f32 %v3800, %v3801
    %v3803 = vand.u32 %v3802, 4294901760
    %3804 = vmatpush1.msra.mxu0 %v3803
    %3805 = vmatprep.subr.mxu0 0.0
    %v3806 = vand.u32 %v178, 4294901760
    %v3807 = vsub.f32 %v178, %v3806
    %v3808 = vand.u32 %v3807, 4294901760
    %v3809 = vsub.f32 %v3807, %v3808
    %v3810 = vand.u32 %v3809, 4294901760
    %3811 = vmatpush1.msra.mxu0 %v3810
    %3812 = vmatprep.subr.mxu0 0.0
    %v3813 = vand.u32 %v179, 4294901760
    %v3814 = vsub.f32 %v179, %v3813
    %v3815 = vand.u32 %v3814, 4294901760
    %v3816 = vsub.f32 %v3814, %v3815
    %v3817 = vand.u32 %v3816, 4294901760
    %3818 = vmatpush1.msra.mxu0 %v3817
    %3819 = vmatprep.subr.mxu0 0.0
    %v3820 = vand.u32 %v180, 4294901760
    %v3821 = vsub.f32 %v180, %v3820
    %v3822 = vand.u32 %v3821, 4294901760
    %v3823 = vsub.f32 %v3821, %v3822
    %v3824 = vand.u32 %v3823, 4294901760
    %3825 = vmatpush1.msra.mxu0 %v3824
    %3826 = vmatprep.subr.mxu0 0.0
    %v3827 = vand.u32 %v181, 4294901760
    %v3828 = vsub.f32 %v181, %v3827
    %v3829 = vand.u32 %v3828, 4294901760
    %v3830 = vsub.f32 %v3828, %v3829
    %v3831 = vand.u32 %v3830, 4294901760
    %3832 = vmatpush1.msra.mxu0 %v3831
    %3833 = vmatprep.subr.mxu0 0.0
    %v3834 = vand.u32 %v182, 4294901760
    %v3835 = vsub.f32 %v182, %v3834
    %v3836 = vand.u32 %v3835, 4294901760
    %v3837 = vsub.f32 %v3835, %v3836
    %v3838 = vand.u32 %v3837, 4294901760
    %3839 = vmatpush1.msra.mxu0 %v3838
    %3840 = vmatprep.subr.mxu0 0.0
    %v3841 = vand.u32 %v183, 4294901760
    %v3842 = vsub.f32 %v183, %v3841
    %v3843 = vand.u32 %v3842, 4294901760
    %v3844 = vsub.f32 %v3842, %v3843
    %v3845 = vand.u32 %v3844, 4294901760
    %3846 = vmatpush1.msra.mxu0 %v3845
    %3847 = vmatprep.subr.mxu0 0.0
    %v3848 = vand.u32 %v184, 4294901760
    %v3849 = vsub.f32 %v184, %v3848
    %v3850 = vand.u32 %v3849, 4294901760
    %v3851 = vsub.f32 %v3849, %v3850
    %v3852 = vand.u32 %v3851, 4294901760
    %3853 = vmatpush1.msra.mxu0 %v3852
    %3854 = vmatprep.subr.mxu0 0.0
    %v3855 = vand.u32 %v185, 4294901760
    %v3856 = vsub.f32 %v185, %v3855
    %v3857 = vand.u32 %v3856, 4294901760
    %v3858 = vsub.f32 %v3856, %v3857
    %v3859 = vand.u32 %v3858, 4294901760
    %3860 = vmatpush1.msra.mxu0 %v3859
    %3861 = vmatprep.subr.mxu0 0.0
    %v3862 = vand.u32 %v186, 4294901760
    %v3863 = vsub.f32 %v186, %v3862
    %v3864 = vand.u32 %v3863, 4294901760
    %v3865 = vsub.f32 %v3863, %v3864
    %v3866 = vand.u32 %v3865, 4294901760
    %3867 = vmatpush1.msra.mxu0 %v3866
    %3868 = vmatprep.subr.mxu0 0.0
    %v3869 = vand.u32 %v187, 4294901760
    %v3870 = vsub.f32 %v187, %v3869
    %v3871 = vand.u32 %v3870, 4294901760
    %v3872 = vsub.f32 %v3870, %v3871
    %v3873 = vand.u32 %v3872, 4294901760
    %3874 = vmatpush1.msra.mxu0 %v3873
    %3875 = vmatprep.subr.mxu0 0.0
    %v3876 = vand.u32 %v188, 4294901760
    %v3877 = vsub.f32 %v188, %v3876
    %v3878 = vand.u32 %v3877, 4294901760
    %v3879 = vsub.f32 %v3877, %v3878
    %v3880 = vand.u32 %v3879, 4294901760
    %3881 = vmatpush1.msra.mxu0 %v3880
    %3882 = vmatprep.subr.mxu0 0.0
    %v3883 = vand.u32 %v189, 4294901760
    %v3884 = vsub.f32 %v189, %v3883
    %v3885 = vand.u32 %v3884, 4294901760
    %v3886 = vsub.f32 %v3884, %v3885
    %v3887 = vand.u32 %v3886, 4294901760
    %3888 = vmatpush1.msra.mxu0 %v3887
    %3889 = vmatprep.subr.mxu0 0.0
    %v3890 = vand.u32 %v190, 4294901760
    %v3891 = vsub.f32 %v190, %v3890
    %v3892 = vand.u32 %v3891, 4294901760
    %v3893 = vsub.f32 %v3891, %v3892
    %v3894 = vand.u32 %v3893, 4294901760
    %3895 = vmatpush1.msra.mxu0 %v3894
    %3896 = vmatprep.subr.mxu0 0.0
    %v3897 = vand.u32 %v191, 4294901760
    %v3898 = vsub.f32 %v191, %v3897
    %v3899 = vand.u32 %v3898, 4294901760
    %v3900 = vsub.f32 %v3898, %v3899
    %v3901 = vand.u32 %v3900, 4294901760
    %3902 = vmatpush1.msra.mxu0 %v3901
    %3903 = vmatprep.subr.mxu0 0.0
    %v3904 = vand.u32 %v192, 4294901760
    %v3905 = vsub.f32 %v192, %v3904
    %v3906 = vand.u32 %v3905, 4294901760
    %v3907 = vsub.f32 %v3905, %v3906
    %v3908 = vand.u32 %v3907, 4294901760
    %3909 = vmatpush1.msra.mxu0 %v3908
    %3910 = vmatprep.subr.mxu0 0.0
    %v3911 = vand.u32 %v193, 4294901760
    %v3912 = vsub.f32 %v193, %v3911
    %v3913 = vand.u32 %v3912, 4294901760
    %v3914 = vsub.f32 %v3912, %v3913
    %v3915 = vand.u32 %v3914, 4294901760
    %3916 = vmatpush1.msra.mxu0 %v3915
    %3917 = vmatprep.subr.mxu0 0.0
    %v3918 = vand.u32 %v194, 4294901760
    %v3919 = vsub.f32 %v194, %v3918
    %v3920 = vand.u32 %v3919, 4294901760
    %v3921 = vsub.f32 %v3919, %v3920
    %v3922 = vand.u32 %v3921, 4294901760
    %3923 = vmatpush1.msra.mxu0 %v3922
    %3924 = vmatprep.subr.mxu0 0.0
    %v3925 = vand.u32 %v195, 4294901760
    %v3926 = vsub.f32 %v195, %v3925
    %v3927 = vand.u32 %v3926, 4294901760
    %v3928 = vsub.f32 %v3926, %v3927
    %v3929 = vand.u32 %v3928, 4294901760
    %3930 = vmatpush1.msra.mxu0 %v3929
    %3931 = vmatprep.subr.mxu0 0.0
    %v3932 = vand.u32 %v196, 4294901760
    %v3933 = vsub.f32 %v196, %v3932
    %v3934 = vand.u32 %v3933, 4294901760
    %v3935 = vsub.f32 %v3933, %v3934
    %v3936 = vand.u32 %v3935, 4294901760
    %3937 = vmatpush1.msra.mxu0 %v3936
    %3938 = vmatprep.subr.mxu0 0.0
    %v3939 = vand.u32 %v197, 4294901760
    %v3940 = vsub.f32 %v197, %v3939
    %v3941 = vand.u32 %v3940, 4294901760
    %v3942 = vsub.f32 %v3940, %v3941
    %v3943 = vand.u32 %v3942, 4294901760
    %3944 = vmatpush1.msra.mxu0 %v3943
    %3945 = vmatprep.subr.mxu0 0.0
    %v3946 = vand.u32 %v198, 4294901760
    %v3947 = vsub.f32 %v198, %v3946
    %v3948 = vand.u32 %v3947, 4294901760
    %v3949 = vsub.f32 %v3947, %v3948
    %v3950 = vand.u32 %v3949, 4294901760
    %3951 = vmatpush1.msra.mxu0 %v3950
    %3952 = vmatprep.subr.mxu0 0.0
    %v3953 = vand.u32 %v199, 4294901760
    %v3954 = vsub.f32 %v199, %v3953
    %v3955 = vand.u32 %v3954, 4294901760
    %v3956 = vsub.f32 %v3954, %v3955
    %v3957 = vand.u32 %v3956, 4294901760
    %3958 = vmatpush1.msra.mxu0 %v3957
    %3959 = vmatprep.subr.mxu0 0.0
    %v3960 = vand.u32 %v200, 4294901760
    %v3961 = vsub.f32 %v200, %v3960
    %v3962 = vand.u32 %v3961, 4294901760
    %v3963 = vsub.f32 %v3961, %v3962
    %v3964 = vand.u32 %v3963, 4294901760
    %3965 = vmatpush1.msra.mxu0 %v3964
    %3966 = vmatprep.subr.mxu0 0.0
    %v3967 = vand.u32 %v201, 4294901760
    %v3968 = vsub.f32 %v201, %v3967
    %v3969 = vand.u32 %v3968, 4294901760
    %v3970 = vsub.f32 %v3968, %v3969
    %v3971 = vand.u32 %v3970, 4294901760
    %3972 = vmatpush1.msra.mxu0 %v3971
    %3973 = vmatprep.subr.mxu0 0.0
    %v3974 = vand.u32 %v202, 4294901760
    %v3975 = vsub.f32 %v202, %v3974
    %v3976 = vand.u32 %v3975, 4294901760
    %v3977 = vsub.f32 %v3975, %v3976
    %v3978 = vand.u32 %v3977, 4294901760
    %3979 = vmatpush1.msra.mxu0 %v3978
    %3980 = vmatprep.subr.mxu0 0.0
    %v3981 = vand.u32 %v203, 4294901760
    %v3982 = vsub.f32 %v203, %v3981
    %v3983 = vand.u32 %v3982, 4294901760
    %v3984 = vsub.f32 %v3982, %v3983
    %v3985 = vand.u32 %v3984, 4294901760
    %3986 = vmatpush1.msra.mxu0 %v3985
    %3987 = vmatprep.subr.mxu0 0.0
    %v3988 = vand.u32 %v204, 4294901760
    %v3989 = vsub.f32 %v204, %v3988
    %v3990 = vand.u32 %v3989, 4294901760
    %v3991 = vsub.f32 %v3989, %v3990
    %v3992 = vand.u32 %v3991, 4294901760
    %3993 = vmatpush1.msra.mxu0 %v3992
    %3994 = vmatprep.subr.mxu0 0.0
    %v3995 = vand.u32 %v205, 4294901760
    %v3996 = vsub.f32 %v205, %v3995
    %v3997 = vand.u32 %v3996, 4294901760
    %v3998 = vsub.f32 %v3996, %v3997
    %v3999 = vand.u32 %v3998, 4294901760
    %4000 = vmatpush1.msra.mxu0 %v3999
    %4001 = vmatprep.subr.mxu0 0.0
    %v4002 = vand.u32 %v206, 4294901760
    %v4003 = vsub.f32 %v206, %v4002
    %v4004 = vand.u32 %v4003, 4294901760
    %v4005 = vsub.f32 %v4003, %v4004
    %v4006 = vand.u32 %v4005, 4294901760
    %4007 = vmatpush1.msra.mxu0 %v4006
    %v4008 = vand.u32 %v218, 4294901760
    %4009 = vmatprep.mubr.f32.mxu0 %v4008
    %v4010 = vand.u32 %v46, 4294901760
    %4011 = vmatmul.mubr.f32.gmra.mrb[0].mxu0 %v4010
    %v4012 = vpop.f32.mrb[0].mxu0
    %v4013 = vadd.f32 %v3781, %v4012
    %v4014 = vpop.f32.mrb[0].mxu0
    %4015 = vdwg.mxu0
    %4016 = vmatprep.subr.mxu0 0.0
    %v4017 = vand.u32 %v175, 4294901760
    %v4018 = vsub.f32 %v175, %v4017
    %4019 = vmatpush1.msra.mxu0 %v4018
    %4020 = vmatprep.subr.mxu0 0.0
    %v4021 = vand.u32 %v176, 4294901760
    %v4022 = vsub.f32 %v176, %v4021
    %4023 = vmatpush1.msra.mxu0 %v4022
    %4024 = vmatprep.subr.mxu0 0.0
    %v4025 = vand.u32 %v177, 4294901760
    %v4026 = vsub.f32 %v177, %v4025
    %4027 = vmatpush1.msra.mxu0 %v4026
    %4028 = vmatprep.subr.mxu0 0.0
    %v4029 = vand.u32 %v178, 4294901760
    %v4030 = vsub.f32 %v178, %v4029
    %4031 = vmatpush1.msra.mxu0 %v4030
    %4032 = vmatprep.subr.mxu0 0.0
    %v4033 = vand.u32 %v179, 4294901760
    %v4034 = vsub.f32 %v179, %v4033
    %4035 = vmatpush1.msra.mxu0 %v4034
    %4036 = vmatprep.subr.mxu0 0.0
    %v4037 = vand.u32 %v180, 4294901760
    %v4038 = vsub.f32 %v180, %v4037
    %4039 = vmatpush1.msra.mxu0 %v4038
    %4040 = vmatprep.subr.mxu0 0.0
    %v4041 = vand.u32 %v181, 4294901760
    %v4042 = vsub.f32 %v181, %v4041
    %4043 = vmatpush1.msra.mxu0 %v4042
    %4044 = vmatprep.subr.mxu0 0.0
    %v4045 = vand.u32 %v182, 4294901760
    %v4046 = vsub.f32 %v182, %v4045
    %4047 = vmatpush1.msra.mxu0 %v4046
    %4048 = vmatprep.subr.mxu0 0.0
    %v4049 = vand.u32 %v183, 4294901760
    %v4050 = vsub.f32 %v183, %v4049
    %4051 = vmatpush1.msra.mxu0 %v4050
    %4052 = vmatprep.subr.mxu0 0.0
    %v4053 = vand.u32 %v184, 4294901760
    %v4054 = vsub.f32 %v184, %v4053
    %4055 = vmatpush1.msra.mxu0 %v4054
    %4056 = vmatprep.subr.mxu0 0.0
    %v4057 = vand.u32 %v185, 4294901760
    %v4058 = vsub.f32 %v185, %v4057
    %4059 = vmatpush1.msra.mxu0 %v4058
    %4060 = vmatprep.subr.mxu0 0.0
    %v4061 = vand.u32 %v186, 4294901760
    %v4062 = vsub.f32 %v186, %v4061
    %4063 = vmatpush1.msra.mxu0 %v4062
    %4064 = vmatprep.subr.mxu0 0.0
    %v4065 = vand.u32 %v187, 4294901760
    %v4066 = vsub.f32 %v187, %v4065
    %4067 = vmatpush1.msra.mxu0 %v4066
    %4068 = vmatprep.subr.mxu0 0.0
    %v4069 = vand.u32 %v188, 4294901760
    %v4070 = vsub.f32 %v188, %v4069
    %4071 = vmatpush1.msra.mxu0 %v4070
    %4072 = vmatprep.subr.mxu0 0.0
    %v4073 = vand.u32 %v189, 4294901760
    %v4074 = vsub.f32 %v189, %v4073
    %4075 = vmatpush1.msra.mxu0 %v4074
    %4076 = vmatprep.subr.mxu0 0.0
    %v4077 = vand.u32 %v190, 4294901760
    %v4078 = vsub.f32 %v190, %v4077
    %4079 = vmatpush1.msra.mxu0 %v4078
    %4080 = vmatprep.subr.mxu0 0.0
    %v4081 = vand.u32 %v191, 4294901760
    %v4082 = vsub.f32 %v191, %v4081
    %4083 = vmatpush1.msra.mxu0 %v4082
    %4084 = vmatprep.subr.mxu0 0.0
    %v4085 = vand.u32 %v192, 4294901760
    %v4086 = vsub.f32 %v192, %v4085
    %4087 = vmatpush1.msra.mxu0 %v4086
    %4088 = vmatprep.subr.mxu0 0.0
    %v4089 = vand.u32 %v193, 4294901760
    %v4090 = vsub.f32 %v193, %v4089
    %4091 = vmatpush1.msra.mxu0 %v4090
    %4092 = vmatprep.subr.mxu0 0.0
    %v4093 = vand.u32 %v194, 4294901760
    %v4094 = vsub.f32 %v194, %v4093
    %4095 = vmatpush1.msra.mxu0 %v4094
    %4096 = vmatprep.subr.mxu0 0.0
    %v4097 = vand.u32 %v195, 4294901760
    %v4098 = vsub.f32 %v195, %v4097
    %4099 = vmatpush1.msra.mxu0 %v4098
    %4100 = vmatprep.subr.mxu0 0.0
    %v4101 = vand.u32 %v196, 4294901760
    %v4102 = vsub.f32 %v196, %v4101
    %4103 = vmatpush1.msra.mxu0 %v4102
    %4104 = vmatprep.subr.mxu0 0.0
    %v4105 = vand.u32 %v197, 4294901760
    %v4106 = vsub.f32 %v197, %v4105
    %4107 = vmatpush1.msra.mxu0 %v4106
    %4108 = vmatprep.subr.mxu0 0.0
    %v4109 = vand.u32 %v198, 4294901760
    %v4110 = vsub.f32 %v198, %v4109
    %4111 = vmatpush1.msra.mxu0 %v4110
    %4112 = vmatprep.subr.mxu0 0.0
    %v4113 = vand.u32 %v199, 4294901760
    %v4114 = vsub.f32 %v199, %v4113
    %4115 = vmatpush1.msra.mxu0 %v4114
    %4116 = vmatprep.subr.mxu0 0.0
    %v4117 = vand.u32 %v200, 4294901760
    %v4118 = vsub.f32 %v200, %v4117
    %4119 = vmatpush1.msra.mxu0 %v4118
    %4120 = vmatprep.subr.mxu0 0.0
    %v4121 = vand.u32 %v201, 4294901760
    %v4122 = vsub.f32 %v201, %v4121
    %4123 = vmatpush1.msra.mxu0 %v4122
    %4124 = vmatprep.subr.mxu0 0.0
    %v4125 = vand.u32 %v202, 4294901760
    %v4126 = vsub.f32 %v202, %v4125
    %4127 = vmatpush1.msra.mxu0 %v4126
    %4128 = vmatprep.subr.mxu0 0.0
    %v4129 = vand.u32 %v203, 4294901760
    %v4130 = vsub.f32 %v203, %v4129
    %4131 = vmatpush1.msra.mxu0 %v4130
    %4132 = vmatprep.subr.mxu0 0.0
    %v4133 = vand.u32 %v204, 4294901760
    %v4134 = vsub.f32 %v204, %v4133
    %4135 = vmatpush1.msra.mxu0 %v4134
    %4136 = vmatprep.subr.mxu0 0.0
    %v4137 = vand.u32 %v205, 4294901760
    %v4138 = vsub.f32 %v205, %v4137
    %4139 = vmatpush1.msra.mxu0 %v4138
    %4140 = vmatprep.subr.mxu0 0.0
    %v4141 = vand.u32 %v206, 4294901760
    %v4142 = vsub.f32 %v206, %v4141
    %4143 = vmatpush1.msra.mxu0 %v4142
    %v4144 = vand.u32 %v218, 4294901760
    %v4145 = vsub.f32 %v218, %v4144
    %4146 = vmatprep.mubr.f32.mxu0 %v4145
    %v4147 = vand.u32 %v46, 4294901760
    %v4148 = vsub.f32 %v46, %v4147
    %4149 = vmatmul.mubr.f32.gmra.mrb[0].mxu0 %v4148
    %v4150 = vpop.f32.mrb[0].mxu0
    %v4151 = vadd.f32 %v4013, %v4150
    %v4152 = vpop.f32.mrb[0].mxu0
    %4153 = vdwg.mxu0
    %4154 = vmatprep.subr.mxu0 0.0
    %v4155 = vand.u32 %v175, 4294901760
    %4156 = vmatpush1.msra.mxu0 %v4155
    %4157 = vmatprep.subr.mxu0 0.0
    %v4158 = vand.u32 %v176, 4294901760
    %4159 = vmatpush1.msra.mxu0 %v4158
    %4160 = vmatprep.subr.mxu0 0.0
    %v4161 = vand.u32 %v177, 4294901760
    %4162 = vmatpush1.msra.mxu0 %v4161
    %4163 = vmatprep.subr.mxu0 0.0
    %v4164 = vand.u32 %v178, 4294901760
    %4165 = vmatpush1.msra.mxu0 %v4164
    %4166 = vmatprep.subr.mxu0 0.0
    %v4167 = vand.u32 %v179, 4294901760
    %4168 = vmatpush1.msra.mxu0 %v4167
    %4169 = vmatprep.subr.mxu0 0.0
    %v4170 = vand.u32 %v180, 4294901760
    %4171 = vmatpush1.msra.mxu0 %v4170
    %4172 = vmatprep.subr.mxu0 0.0
    %v4173 = vand.u32 %v181, 4294901760
    %4174 = vmatpush1.msra.mxu0 %v4173
    %4175 = vmatprep.subr.mxu0 0.0
    %v4176 = vand.u32 %v182, 4294901760
    %4177 = vmatpush1.msra.mxu0 %v4176
    %4178 = vmatprep.subr.mxu0 0.0
    %v4179 = vand.u32 %v183, 4294901760
    %4180 = vmatpush1.msra.mxu0 %v4179
    %4181 = vmatprep.subr.mxu0 0.0
    %v4182 = vand.u32 %v184, 4294901760
    %4183 = vmatpush1.msra.mxu0 %v4182
    %4184 = vmatprep.subr.mxu0 0.0
    %v4185 = vand.u32 %v185, 4294901760
    %4186 = vmatpush1.msra.mxu0 %v4185
    %4187 = vmatprep.subr.mxu0 0.0
    %v4188 = vand.u32 %v186, 4294901760
    %4189 = vmatpush1.msra.mxu0 %v4188
    %4190 = vmatprep.subr.mxu0 0.0
    %v4191 = vand.u32 %v187, 4294901760
    %4192 = vmatpush1.msra.mxu0 %v4191
    %4193 = vmatprep.subr.mxu0 0.0
    %v4194 = vand.u32 %v188, 4294901760
    %4195 = vmatpush1.msra.mxu0 %v4194
    %4196 = vmatprep.subr.mxu0 0.0
    %v4197 = vand.u32 %v189, 4294901760
    %4198 = vmatpush1.msra.mxu0 %v4197
    %4199 = vmatprep.subr.mxu0 0.0
    %v4200 = vand.u32 %v190, 4294901760
    %4201 = vmatpush1.msra.mxu0 %v4200
    %4202 = vmatprep.subr.mxu0 0.0
    %v4203 = vand.u32 %v191, 4294901760
    %4204 = vmatpush1.msra.mxu0 %v4203
    %4205 = vmatprep.subr.mxu0 0.0
    %v4206 = vand.u32 %v192, 4294901760
    %4207 = vmatpush1.msra.mxu0 %v4206
    %4208 = vmatprep.subr.mxu0 0.0
    %v4209 = vand.u32 %v193, 4294901760
    %4210 = vmatpush1.msra.mxu0 %v4209
    %4211 = vmatprep.subr.mxu0 0.0
    %v4212 = vand.u32 %v194, 4294901760
    %4213 = vmatpush1.msra.mxu0 %v4212
    %4214 = vmatprep.subr.mxu0 0.0
    %v4215 = vand.u32 %v195, 4294901760
    %4216 = vmatpush1.msra.mxu0 %v4215
    %4217 = vmatprep.subr.mxu0 0.0
    %v4218 = vand.u32 %v196, 4294901760
    %4219 = vmatpush1.msra.mxu0 %v4218
    %4220 = vmatprep.subr.mxu0 0.0
    %v4221 = vand.u32 %v197, 4294901760
    %4222 = vmatpush1.msra.mxu0 %v4221
    %4223 = vmatprep.subr.mxu0 0.0
    %v4224 = vand.u32 %v198, 4294901760
    %4225 = vmatpush1.msra.mxu0 %v4224
    %4226 = vmatprep.subr.mxu0 0.0
    %v4227 = vand.u32 %v199, 4294901760
    %4228 = vmatpush1.msra.mxu0 %v4227
    %4229 = vmatprep.subr.mxu0 0.0
    %v4230 = vand.u32 %v200, 4294901760
    %4231 = vmatpush1.msra.mxu0 %v4230
    %4232 = vmatprep.subr.mxu0 0.0
    %v4233 = vand.u32 %v201, 4294901760
    %4234 = vmatpush1.msra.mxu0 %v4233
    %4235 = vmatprep.subr.mxu0 0.0
    %v4236 = vand.u32 %v202, 4294901760
    %4237 = vmatpush1.msra.mxu0 %v4236
    %4238 = vmatprep.subr.mxu0 0.0
    %v4239 = vand.u32 %v203, 4294901760
    %4240 = vmatpush1.msra.mxu0 %v4239
    %4241 = vmatprep.subr.mxu0 0.0
    %v4242 = vand.u32 %v204, 4294901760
    %4243 = vmatpush1.msra.mxu0 %v4242
    %4244 = vmatprep.subr.mxu0 0.0
    %v4245 = vand.u32 %v205, 4294901760
    %4246 = vmatpush1.msra.mxu0 %v4245
    %4247 = vmatprep.subr.mxu0 0.0
    %v4248 = vand.u32 %v206, 4294901760
    %4249 = vmatpush1.msra.mxu0 %v4248
    %v4250 = vand.u32 %v218, 4294901760
    %v4251 = vsub.f32 %v218, %v4250
    %v4252 = vand.u32 %v4251, 4294901760
    %4253 = vmatprep.mubr.f32.mxu0 %v4252
    %v4254 = vand.u32 %v46, 4294901760
    %v4255 = vsub.f32 %v46, %v4254
    %v4256 = vand.u32 %v4255, 4294901760
    %4257 = vmatmul.mubr.f32.gmra.mrb[0].mxu0 %v4256
    %v4258 = vpop.f32.mrb[0].mxu0
    %v4259 = vadd.f32 %v4151, %v4258
    %v4260 = vpop.f32.mrb[0].mxu0
    %4261 = vdwg.mxu0
    %4262 = vmatprep.subr.mxu0 0.0
    %v4263 = vand.u32 %v175, 4294901760
    %v4264 = vsub.f32 %v175, %v4263
    %v4265 = vand.u32 %v4264, 4294901760
    %4266 = vmatpush1.msra.mxu0 %v4265
    %4267 = vmatprep.subr.mxu0 0.0
    %v4268 = vand.u32 %v176, 4294901760
    %v4269 = vsub.f32 %v176, %v4268
    %v4270 = vand.u32 %v4269, 4294901760
    %4271 = vmatpush1.msra.mxu0 %v4270
    %4272 = vmatprep.subr.mxu0 0.0
    %v4273 = vand.u32 %v177, 4294901760
    %v4274 = vsub.f32 %v177, %v4273
    %v4275 = vand.u32 %v4274, 4294901760
    %4276 = vmatpush1.msra.mxu0 %v4275
    %4277 = vmatprep.subr.mxu0 0.0
    %v4278 = vand.u32 %v178, 4294901760
    %v4279 = vsub.f32 %v178, %v4278
    %v4280 = vand.u32 %v4279, 4294901760
    %4281 = vmatpush1.msra.mxu0 %v4280
    %4282 = vmatprep.subr.mxu0 0.0
    %v4283 = vand.u32 %v179, 4294901760
    %v4284 = vsub.f32 %v179, %v4283
    %v4285 = vand.u32 %v4284, 4294901760
    %4286 = vmatpush1.msra.mxu0 %v4285
    %4287 = vmatprep.subr.mxu0 0.0
    %v4288 = vand.u32 %v180, 4294901760
    %v4289 = vsub.f32 %v180, %v4288
    %v4290 = vand.u32 %v4289, 4294901760
    %4291 = vmatpush1.msra.mxu0 %v4290
    %4292 = vmatprep.subr.mxu0 0.0
    %v4293 = vand.u32 %v181, 4294901760
    %v4294 = vsub.f32 %v181, %v4293
    %v4295 = vand.u32 %v4294, 4294901760
    %4296 = vmatpush1.msra.mxu0 %v4295
    %4297 = vmatprep.subr.mxu0 0.0
    %v4298 = vand.u32 %v182, 4294901760
    %v4299 = vsub.f32 %v182, %v4298
    %v4300 = vand.u32 %v4299, 4294901760
    %4301 = vmatpush1.msra.mxu0 %v4300
    %4302 = vmatprep.subr.mxu0 0.0
    %v4303 = vand.u32 %v183, 4294901760
    %v4304 = vsub.f32 %v183, %v4303
    %v4305 = vand.u32 %v4304, 4294901760
    %4306 = vmatpush1.msra.mxu0 %v4305
    %4307 = vmatprep.subr.mxu0 0.0
    %v4308 = vand.u32 %v184, 4294901760
    %v4309 = vsub.f32 %v184, %v4308
    %v4310 = vand.u32 %v4309, 4294901760
    %4311 = vmatpush1.msra.mxu0 %v4310
    %4312 = vmatprep.subr.mxu0 0.0
    %v4313 = vand.u32 %v185, 4294901760
    %v4314 = vsub.f32 %v185, %v4313
    %v4315 = vand.u32 %v4314, 4294901760
    %4316 = vmatpush1.msra.mxu0 %v4315
    %4317 = vmatprep.subr.mxu0 0.0
    %v4318 = vand.u32 %v186, 4294901760
    %v4319 = vsub.f32 %v186, %v4318
    %v4320 = vand.u32 %v4319, 4294901760
    %4321 = vmatpush1.msra.mxu0 %v4320
    %4322 = vmatprep.subr.mxu0 0.0
    %v4323 = vand.u32 %v187, 4294901760
    %v4324 = vsub.f32 %v187, %v4323
    %v4325 = vand.u32 %v4324, 4294901760
    %4326 = vmatpush1.msra.mxu0 %v4325
    %4327 = vmatprep.subr.mxu0 0.0
    %v4328 = vand.u32 %v188, 4294901760
    %v4329 = vsub.f32 %v188, %v4328
    %v4330 = vand.u32 %v4329, 4294901760
    %4331 = vmatpush1.msra.mxu0 %v4330
    %4332 = vmatprep.subr.mxu0 0.0
    %v4333 = vand.u32 %v189, 4294901760
    %v4334 = vsub.f32 %v189, %v4333
    %v4335 = vand.u32 %v4334, 4294901760
    %4336 = vmatpush1.msra.mxu0 %v4335
    %4337 = vmatprep.subr.mxu0 0.0
    %v4338 = vand.u32 %v190, 4294901760
    %v4339 = vsub.f32 %v190, %v4338
    %v4340 = vand.u32 %v4339, 4294901760
    %4341 = vmatpush1.msra.mxu0 %v4340
    %4342 = vmatprep.subr.mxu0 0.0
    %v4343 = vand.u32 %v191, 4294901760
    %v4344 = vsub.f32 %v191, %v4343
    %v4345 = vand.u32 %v4344, 4294901760
    %4346 = vmatpush1.msra.mxu0 %v4345
    %4347 = vmatprep.subr.mxu0 0.0
    %v4348 = vand.u32 %v192, 4294901760
    %v4349 = vsub.f32 %v192, %v4348
    %v4350 = vand.u32 %v4349, 4294901760
    %4351 = vmatpush1.msra.mxu0 %v4350
    %4352 = vmatprep.subr.mxu0 0.0
    %v4353 = vand.u32 %v193, 4294901760
    %v4354 = vsub.f32 %v193, %v4353
    %v4355 = vand.u32 %v4354, 4294901760
    %4356 = vmatpush1.msra.mxu0 %v4355
    %4357 = vmatprep.subr.mxu0 0.0
    %v4358 = vand.u32 %v194, 4294901760
    %v4359 = vsub.f32 %v194, %v4358
    %v4360 = vand.u32 %v4359, 4294901760
    %4361 = vmatpush1.msra.mxu0 %v4360
    %4362 = vmatprep.subr.mxu0 0.0
    %v4363 = vand.u32 %v195, 4294901760
    %v4364 = vsub.f32 %v195, %v4363
    %v4365 = vand.u32 %v4364, 4294901760
    %4366 = vmatpush1.msra.mxu0 %v4365
    %4367 = vmatprep.subr.mxu0 0.0
    %v4368 = vand.u32 %v196, 4294901760
    %v4369 = vsub.f32 %v196, %v4368
    %v4370 = vand.u32 %v4369, 4294901760
    %4371 = vmatpush1.msra.mxu0 %v4370
    %4372 = vmatprep.subr.mxu0 0.0
    %v4373 = vand.u32 %v197, 4294901760
    %v4374 = vsub.f32 %v197, %v4373
    %v4375 = vand.u32 %v4374, 4294901760
    %4376 = vmatpush1.msra.mxu0 %v4375
    %4377 = vmatprep.subr.mxu0 0.0
    %v4378 = vand.u32 %v198, 4294901760
    %v4379 = vsub.f32 %v198, %v4378
    %v4380 = vand.u32 %v4379, 4294901760
    %4381 = vmatpush1.msra.mxu0 %v4380
    %4382 = vmatprep.subr.mxu0 0.0
    %v4383 = vand.u32 %v199, 4294901760
    %v4384 = vsub.f32 %v199, %v4383
    %v4385 = vand.u32 %v4384, 4294901760
    %4386 = vmatpush1.msra.mxu0 %v4385
    %4387 = vmatprep.subr.mxu0 0.0
    %v4388 = vand.u32 %v200, 4294901760
    %v4389 = vsub.f32 %v200, %v4388
    %v4390 = vand.u32 %v4389, 4294901760
    %4391 = vmatpush1.msra.mxu0 %v4390
    %4392 = vmatprep.subr.mxu0 0.0
    %v4393 = vand.u32 %v201, 4294901760
    %v4394 = vsub.f32 %v201, %v4393
    %v4395 = vand.u32 %v4394, 4294901760
    %4396 = vmatpush1.msra.mxu0 %v4395
    %4397 = vmatprep.subr.mxu0 0.0
    %v4398 = vand.u32 %v202, 4294901760
    %v4399 = vsub.f32 %v202, %v4398
    %v4400 = vand.u32 %v4399, 4294901760
    %4401 = vmatpush1.msra.mxu0 %v4400
    %4402 = vmatprep.subr.mxu0 0.0
    %v4403 = vand.u32 %v203, 4294901760
    %v4404 = vsub.f32 %v203, %v4403
    %v4405 = vand.u32 %v4404, 4294901760
    %4406 = vmatpush1.msra.mxu0 %v4405
    %4407 = vmatprep.subr.mxu0 0.0
    %v4408 = vand.u32 %v204, 4294901760
    %v4409 = vsub.f32 %v204, %v4408
    %v4410 = vand.u32 %v4409, 4294901760
    %4411 = vmatpush1.msra.mxu0 %v4410
    %4412 = vmatprep.subr.mxu0 0.0
    %v4413 = vand.u32 %v205, 4294901760
    %v4414 = vsub.f32 %v205, %v4413
    %v4415 = vand.u32 %v4414, 4294901760
    %4416 = vmatpush1.msra.mxu0 %v4415
    %4417 = vmatprep.subr.mxu0 0.0
    %v4418 = vand.u32 %v206, 4294901760
    %v4419 = vsub.f32 %v206, %v4418
    %v4420 = vand.u32 %v4419, 4294901760
    %4421 = vmatpush1.msra.mxu0 %v4420
    %v4422 = vand.u32 %v218, 4294901760
    %4423 = vmatprep.mubr.f32.mxu0 %v4422
    %v4424 = vand.u32 %v46, 4294901760
    %4425 = vmatmul.mubr.f32.gmra.mrb[0].mxu0 %v4424
    %v4426 = vpop.f32.mrb[0].mxu0
    %v4427 = vadd.f32 %v4259, %v4426
    %v4428 = vpop.f32.mrb[0].mxu0
    %4429 = vdwg.mxu0
    %4430 = vmatprep.subr.mxu0 0.0
    %v4431 = vand.u32 %v175, 4294901760
    %4432 = vmatpush1.msra.mxu0 %v4431
    %4433 = vmatprep.subr.mxu0 0.0
    %v4434 = vand.u32 %v176, 4294901760
    %4435 = vmatpush1.msra.mxu0 %v4434
    %4436 = vmatprep.subr.mxu0 0.0
    %v4437 = vand.u32 %v177, 4294901760
    %4438 = vmatpush1.msra.mxu0 %v4437
    %4439 = vmatprep.subr.mxu0 0.0
    %v4440 = vand.u32 %v178, 4294901760
    %4441 = vmatpush1.msra.mxu0 %v4440
    %4442 = vmatprep.subr.mxu0 0.0
    %v4443 = vand.u32 %v179, 4294901760
    %4444 = vmatpush1.msra.mxu0 %v4443
    %4445 = vmatprep.subr.mxu0 0.0
    %v4446 = vand.u32 %v180, 4294901760
    %4447 = vmatpush1.msra.mxu0 %v4446
    %4448 = vmatprep.subr.mxu0 0.0
    %v4449 = vand.u32 %v181, 4294901760
    %4450 = vmatpush1.msra.mxu0 %v4449
    %4451 = vmatprep.subr.mxu0 0.0
    %v4452 = vand.u32 %v182, 4294901760
    %4453 = vmatpush1.msra.mxu0 %v4452
    %4454 = vmatprep.subr.mxu0 0.0
    %v4455 = vand.u32 %v183, 4294901760
    %4456 = vmatpush1.msra.mxu0 %v4455
    %4457 = vmatprep.subr.mxu0 0.0
    %v4458 = vand.u32 %v184, 4294901760
    %4459 = vmatpush1.msra.mxu0 %v4458
    %4460 = vmatprep.subr.mxu0 0.0
    %v4461 = vand.u32 %v185, 4294901760
    %4462 = vmatpush1.msra.mxu0 %v4461
    %4463 = vmatprep.subr.mxu0 0.0
    %v4464 = vand.u32 %v186, 4294901760
    %4465 = vmatpush1.msra.mxu0 %v4464
    %4466 = vmatprep.subr.mxu0 0.0
    %v4467 = vand.u32 %v187, 4294901760
    %4468 = vmatpush1.msra.mxu0 %v4467
    %4469 = vmatprep.subr.mxu0 0.0
    %v4470 = vand.u32 %v188, 4294901760
    %4471 = vmatpush1.msra.mxu0 %v4470
    %4472 = vmatprep.subr.mxu0 0.0
    %v4473 = vand.u32 %v189, 4294901760
    %4474 = vmatpush1.msra.mxu0 %v4473
    %4475 = vmatprep.subr.mxu0 0.0
    %v4476 = vand.u32 %v190, 4294901760
    %4477 = vmatpush1.msra.mxu0 %v4476
    %4478 = vmatprep.subr.mxu0 0.0
    %v4479 = vand.u32 %v191, 4294901760
    %4480 = vmatpush1.msra.mxu0 %v4479
    %4481 = vmatprep.subr.mxu0 0.0
    %v4482 = vand.u32 %v192, 4294901760
    %4483 = vmatpush1.msra.mxu0 %v4482
    %4484 = vmatprep.subr.mxu0 0.0
    %v4485 = vand.u32 %v193, 4294901760
    %4486 = vmatpush1.msra.mxu0 %v4485
    %4487 = vmatprep.subr.mxu0 0.0
    %v4488 = vand.u32 %v194, 4294901760
    %4489 = vmatpush1.msra.mxu0 %v4488
    %4490 = vmatprep.subr.mxu0 0.0
    %v4491 = vand.u32 %v195, 4294901760
    %4492 = vmatpush1.msra.mxu0 %v4491
    %4493 = vmatprep.subr.mxu0 0.0
    %v4494 = vand.u32 %v196, 4294901760
    %4495 = vmatpush1.msra.mxu0 %v4494
    %4496 = vmatprep.subr.mxu0 0.0
    %v4497 = vand.u32 %v197, 4294901760
    %4498 = vmatpush1.msra.mxu0 %v4497
    %4499 = vmatprep.subr.mxu0 0.0
    %v4500 = vand.u32 %v198, 4294901760
    %4501 = vmatpush1.msra.mxu0 %v4500
    %4502 = vmatprep.subr.mxu0 0.0
    %v4503 = vand.u32 %v199, 4294901760
    %4504 = vmatpush1.msra.mxu0 %v4503
    %4505 = vmatprep.subr.mxu0 0.0
    %v4506 = vand.u32 %v200, 4294901760
    %4507 = vmatpush1.msra.mxu0 %v4506
    %4508 = vmatprep.subr.mxu0 0.0
    %v4509 = vand.u32 %v201, 4294901760
    %4510 = vmatpush1.msra.mxu0 %v4509
    %4511 = vmatprep.subr.mxu0 0.0
    %v4512 = vand.u32 %v202, 4294901760
    %4513 = vmatpush1.msra.mxu0 %v4512
    %4514 = vmatprep.subr.mxu0 0.0
    %v4515 = vand.u32 %v203, 4294901760
    %4516 = vmatpush1.msra.mxu0 %v4515
    %4517 = vmatprep.subr.mxu0 0.0
    %v4518 = vand.u32 %v204, 4294901760
    %4519 = vmatpush1.msra.mxu0 %v4518
    %4520 = vmatprep.subr.mxu0 0.0
    %v4521 = vand.u32 %v205, 4294901760
    %4522 = vmatpush1.msra.mxu0 %v4521
    %4523 = vmatprep.subr.mxu0 0.0
    %v4524 = vand.u32 %v206, 4294901760
    %4525 = vmatpush1.msra.mxu0 %v4524
    %v4526 = vand.u32 %v218, 4294901760
    %4527 = vmatprep.mubr.f32.mxu0 %v4526
    %v4528 = vand.u32 %v46, 4294901760
    %4529 = vmatmul.mubr.f32.gmra.mrb[0].mxu0 %v4528
    %v4530 = vpop.f32.mrb[0].mxu0
    %v4531 = vadd.f32 %v4427, %v4530
    %v4532 = vpop.f32.mrb[0].mxu0
    %4533 = vdwg.mxu0
    %4534 = vst [vmem:[#allocation8] sm:$0x7] %v4531
    // Predicated region
    $region22: #{tpu_custom_call.1} parent=1 // pred_check
      _
    $region23: #{tpu_custom_call.1} parent=1 // pred_check_branch
      %4536 = sbr.rel (0) target = $region25
    $region24: #{tpu_custom_call.1} parent=1 // pred_region
      %s4538 = ssub.s32 64, 64
      %4539 = vsyncadd [#allocation5], %s4538
      %s4541 = sshll.u32 [#allocation8], 4
      %s4542 = int_to_ptr.vmem [resolvable:$true] %s4541
      %4544 = dma.vmem_to_hbm [thread:$0]  %s4542, 64, %s3, [#allocation5]
    $region25: #{tpu_custom_call.1} parent=1 // pred_fallthru
      _
    // Predicated region
    $region26: #{tpu_custom_call.1} parent=1 // pred_check
      _
    $region27: #{tpu_custom_call.1} parent=1 // pred_check_branch
      %4546 = sbr.rel (0) target = $region29
    $region28: #{tpu_custom_call.1} parent=1 // pred_region
      %4547 = dma.done [#allocation5], 64
    $region29: #{tpu_custom_call.1} parent=1 // pred_fallthru
      _
    %4548 = vsyncpa [#allocation4], 1
    %4549 = vsyncpa [#allocation7], 1
    %4550 = vsyncpa [#allocation5], 1

</llo_original>
